<compile_context>
chip_gen: v6e
topology: v6e:2x2x1
jax: 0.10.0
libtpu: 0.0.40
codegen_flags: <defaults>
</compile_context>

<pallas_src>
import jax
import jax.numpy as jnp
import numpy as np
from jax import lax
from jax.experimental import pallas as pl
from jax.experimental.pallas import tpu as pltpu

EPS = 1e-5
LANES = 128


def _round_up(x, m):
    return (x + m - 1) // m * m


# ------------------------------ kernel body ------------------------------
def _shift_h(a, dy):
    """a: (1, Hp, Wp, C). Returns t with t[:, i] = a[:, i+dy], zero outside."""
    if dy == 0:
        return a
    z = jnp.zeros((a.shape[0], 1, a.shape[2], a.shape[3]), a.dtype)
    if dy > 0:
        return jnp.concatenate([a[:, 1:], z], axis=1)
    return jnp.concatenate([z, a[:, :-1]], axis=1)


def _shift_w(a, dx):
    """a: (1, Hp, Wp, C). Returns t with t[:, :, j] = a[:, :, j+dx], zero outside."""
    if dx == 0:
        return a
    z = jnp.zeros((a.shape[0], a.shape[1], 1, a.shape[3]), a.dtype)
    if dx > 0:
        return jnp.concatenate([a[:, :, 1:], z], axis=2)
    return jnp.concatenate([z, a[:, :, :-1]], axis=2)


def _conv3x3_bn_relu(inp, w_ref, s_ref, b_ref):
    """3x3 SAME conv as 9 accumulated tap matmuls, then folded-BN affine + ReLU.

    inp:   (1, Hp, Wp, C)   activations, already in the MXU compute dtype
    w_ref: (9, C, Cop)      per-tap weights; tap index = kh*3 + kw
    s_ref, b_ref: (1, Cop)  folded BN scale / shift (conv bias included)
    returns (Hp*Wp, Cop)    f32
    """
    _, hp, wp, c = inp.shape
    m = hp * wp
    cop = w_ref.shape[2]
    acc = jnp.zeros((m, cop), jnp.float32)
    tap_idx = 0
    for dy in (-1, 0, 1):                  # kernel row  kh = dy + 1
        row = _shift_h(inp, dy)
        for dx in (-1, 0, 1):              # kernel col  kw = dx + 1
            tap = _shift_w(row, dx).reshape(m, c)
            acc = acc + jnp.dot(tap, w_ref[tap_idx],
                                preferred_element_type=jnp.float32)
            tap_idx += 1
    return jnp.maximum(acc * s_ref[...] + b_ref[...], 0.0)


def _down_kernel(x_ref, w1_ref, s1_ref, b1_ref, w2_ref, s2_ref, b2_ref, o_ref):
    # x_ref : (1, Hp, 2, Wp, 2, Cin)  NHWC with the 2x2 pool factors exposed as
    #         a leading-dim pair and a sublane pair; Cin stays the lane dim.
    # o_ref : (Hp*Wp, Cout_p)         lane-dense (Cout_p multiple of 128).
    _, hp, _, wp, _, _ = x_ref.shape
    cmid = w2_ref.shape[1]

    x = x_ref[...]

    # ---- 2x2 max pool, stride 2 (two factor-dim maxes, no lane-slice max) ----
    pooled = jnp.maximum(
        jnp.maximum(x[:, :, 0, :, 0, :], x[:, :, 0, :, 1, :]),
        jnp.maximum(x[:, :, 1, :, 0, :], x[:, :, 1, :, 1, :]))   # (1,Hp,Wp,Cin)

    # ---- conv1 (3x3 SAME) + folded BN + ReLU ----
    h = _conv3x3_bn_relu(pooled, w1_ref, s1_ref, b1_ref)         # (M, Cmid_p)
    # conv2 contracts over the real Cmid channels only (no zero-padded K rows).
    h = h.reshape(1, hp, wp, -1)[..., :cmid].astype(w2_ref.dtype)

    # ---- conv2 (3x3 SAME) + folded BN + ReLU ----
    y = _conv3x3_bn_relu(h, w2_ref, s2_ref, b2_ref)              # (M, Cout_p)

    o_ref[...] = y.astype(o_ref.dtype)


# -------------------------------- wrapper --------------------------------
def down_forward(x_nchw, w1, s1, b1, w2, s2, b2, *, compute_dtype=jnp.float32):
    """x_nchw: (N, Cin, H, W) f32 -> (N, Cout, H//2, W//2) f32.

    w1: (3,3,Cin,Cmid) HWIO, w2: (3,3,Cmid,Cout) HWIO.
    s*/b*: folded BatchNorm (eval mode) scale/shift with conv bias included.
    compute_dtype: MXU input dtype (use jnp.bfloat16 on v6e/v7x); accumulation
    and the BN affine stay f32.
    """
    N, Cin, H, W = x_nchw.shape
    assert H % 2 == 0 and W % 2 == 0, "maxpool2d(2) kernel assumes even H, W"
    Cmid, Cout = w1.shape[3], w2.shape[3]
    assert w2.shape[2] == Cmid
    Hp, Wp = H // 2, W // 2
    Cmid_p = _round_up(Cmid, LANES)   # lane-dense conv1 output width
    Cout_p = _round_up(Cout, LANES)   # lane-dense conv2/output width
    M = Hp * Wp                       # rows per grid step (one batch element)

    # NCHW -> NHWC, exposing the 2x2 pooling factors; Cin stays the lane dim.
    x = jnp.transpose(x_nchw, (0, 2, 3, 1)).reshape(N, Hp, 2, Wp, 2, Cin)
    x = x.astype(compute_dtype)

    # Per-tap weights: (kh, kw, ci, co) -> tap = kh*3 + kw, channels padded to
    # a lane multiple only on the OUTPUT dim (K dim stays exact).
    w1r = jnp.pad(w1.reshape(9, Cin, Cmid),
                  ((0, 0), (0, 0), (0, Cmid_p - Cmid))).astype(compute_dtype)
    w2r = jnp.pad(w2.reshape(9, Cmid, Cout),
                  ((0, 0), (0, 0), (0, Cout_p - Cout))).astype(compute_dtype)

    def pad_affine(s, b, cp):
        s = jnp.pad(s.reshape(1, -1).astype(jnp.float32),
                    ((0, 0), (0, cp - s.size)), constant_values=1.0)
        b = jnp.pad(b.reshape(1, -1).astype(jnp.float32),
                    ((0, 0), (0, cp - b.size)))
        return s, b

    s1p, b1p = pad_affine(s1, b1, Cmid_p)
    s2p, b2p = pad_affine(s2, b2, Cout_p)

    # VMEM budget for one grid step (double-buffered blocks + live values);
    # raise the scoped limit accordingly (>=32 MiB lifts v5e's 16 MiB default).
    elt = jnp.dtype(compute_dtype).itemsize
    est = (2 * (Hp * 2 * Wp * 2 * Cin * elt)                    # input block
           + 2 * (M * Cout_p * 4)                               # output block
           + 2 * 9 * (Cin * Cmid_p + Cmid * Cout_p) * elt       # weight blocks
           + M * (Cin * elt + 2 * Cmid_p * 4 + Cmid * elt + Cout_p * 4))
    vmem_limit = int(min(max(2 * est, 32 * (1 << 20)), 64 * (1 << 20)))

    out = pl.pallas_call(
        _down_kernel,
        out_shape=jax.ShapeDtypeStruct((N * M, Cout_p), jnp.float32),
        grid_spec=pltpu.PrefetchScalarGridSpec(
            num_scalar_prefetch=0,
            grid=(N,),                       # one batch element per step
            in_specs=[
                pl.BlockSpec((1, Hp, 2, Wp, 2, Cin),
                             lambda n: (n, 0, 0, 0, 0, 0)),
                pl.BlockSpec((9, Cin, Cmid_p), lambda n: (0, 0, 0)),
                pl.BlockSpec((1, Cmid_p), lambda n: (0, 0)),
                pl.BlockSpec((1, Cmid_p), lambda n: (0, 0)),
                pl.BlockSpec((9, Cmid, Cout_p), lambda n: (0, 0, 0)),
                pl.BlockSpec((1, Cout_p), lambda n: (0, 0)),
                pl.BlockSpec((1, Cout_p), lambda n: (0, 0)),
            ],
            out_specs=pl.BlockSpec((M, Cout_p), lambda n: (n, 0)),
        ),
        compiler_params=pltpu.CompilerParams(
            dimension_semantics=("parallel",),   # batch axis: megacore / 2xTC
            vmem_limit_bytes=vmem_limit),
    )(x, w1r, s1p, b1p, w2r, s2p, b2p)

    # Module interface is NCHW f32; slice off padded channels and transpose.
    out = out.reshape(N, Hp, Wp, Cout_p)[..., :Cout]
    return jnp.transpose(out, (0, 3, 1, 2))


# --------------------------- pure-JAX reference ---------------------------
def _ref_forward(x_nchw, raw):
    x = jnp.transpose(x_nchw, (0, 2, 3, 1))  # NHWC
    N, H, W, C = x.shape
    p = x.reshape(N, H // 2, 2, W // 2, 2, C).max(axis=(2, 4))

    def conv_bn_relu(z, w, b, gamma, beta, mean, var):
        y = lax.conv_general_dilated(
            z, w, window_strides=(1, 1), padding="SAME",
            dimension_numbers=("NHWC", "HWIO", "NHWC")) + b
        y = (y - mean) / jnp.sqrt(var + EPS) * gamma + beta
        return jnp.maximum(y, 0.0)

    h = conv_bn_relu(p, raw["w1"], raw["bias1"], raw["g1"], raw["be1"],
                     raw["m1"], raw["v1"])
    y = conv_bn_relu(h, raw["w2"], raw["bias2"], raw["g2"], raw["be2"],
                     raw["m2"], raw["v2"])
    return jnp.transpose(y, (0, 3, 1, 2))


if __name__ == "__main__":
    # Small shapes consistent with Down(in_channels=4, out_channels=8).
    N, Cin, Cout, H, W = 2, 4, 8, 16, 16

    key = jax.random.PRNGKey(0)
    ks = jax.random.split(key, 13)
    raw = {
        "w1": jax.random.normal(ks[0], (3, 3, Cin, Cout), jnp.float32) * 0.2,
        "bias1": jax.random.normal(ks[1], (Cout,), jnp.float32) * 0.1,
        "g1": jax.random.uniform(ks[2], (Cout,), jnp.float32, 0.5, 1.5),
        "be1": jax.random.normal(ks[3], (Cout,), jnp.float32) * 0.1,
        "m1": jax.random.normal(ks[4], (Cout,), jnp.float32) * 0.1,
        "v1": jax.random.uniform(ks[5], (Cout,), jnp.float32, 0.5, 1.5),
        "w2": jax.random.normal(ks[6], (3, 3, Cout, Cout), jnp.float32) * 0.2,
        "bias2": jax.random.normal(ks[7], (Cout,), jnp.float32) * 0.1,
        "g2": jax.random.uniform(ks[8], (Cout,), jnp.float32, 0.5, 1.5),
        "be2": jax.random.normal(ks[9], (Cout,), jnp.float32) * 0.1,
        "m2": jax.random.normal(ks[10], (Cout,), jnp.float32) * 0.1,
        "v2": jax.random.uniform(ks[11], (Cout,), jnp.float32, 0.5, 1.5),
    }

    # Fold BN (eval mode, running stats) + conv bias into scale/shift.
    def fold(bias, gamma, beta, mean, var):
        scale = gamma / jnp.sqrt(var + EPS)
        shift = beta - mean * scale + bias * scale
        return scale, shift

    s1, b1 = fold(raw["bias1"], raw["g1"], raw["be1"], raw["m1"], raw["v1"])
    s2, b2 = fold(raw["bias2"], raw["g2"], raw["be2"], raw["m2"], raw["v2"])

    x = jax.random.normal(ks[12], (N, Cin, H, W), jnp.float32)

    ref = jax.block_until_ready(_ref_forward(x, raw))

    # f32 MXU path: strict check against the f32 reference.
    out = jax.block_until_ready(
        down_forward(x, raw["w1"], s1, b1, raw["w2"], s2, b2))
    np.testing.assert_allclose(np.asarray(out), np.asarray(ref),
                               rtol=1e-4, atol=1e-4)
    assert out.shape == (N, Cout, H // 2, W // 2)

    # bf16 MXU path (v6e/v7x fast path): loose sanity check (f32 accumulation,
    # bf16 inputs/weights -> ~1e-2 level deviation expected).
    out_bf16 = jax.block_until_ready(
        down_forward(x, raw["w1"], s1, b1, raw["w2"], s2, b2,
                     compute_dtype=jnp.bfloat16))
    np.testing.assert_allclose(np.asarray(out_bf16), np.asarray(ref),
                               rtol=1e-1, atol=1e-1)

    print("KERNEL_OK")
</pallas_src>

<mosaic_0001>
module attributes {stable_mosaic.version = 11 : i64} {
  func.func @_down_kernel(%arg0: i32, %arg1: memref<1x8x2x8x2x4xf32, #tpu.memory_space<vmem>>, %arg2: memref<9x4x128xf32, #tpu.memory_space<vmem>>, %arg3: memref<1x128xf32, #tpu.memory_space<vmem>>, %arg4: memref<1x128xf32, #tpu.memory_space<vmem>>, %arg5: memref<9x8x128xf32, #tpu.memory_space<vmem>>, %arg6: memref<1x128xf32, #tpu.memory_space<vmem>>, %arg7: memref<1x128xf32, #tpu.memory_space<vmem>>, %arg8: memref<64x128xf32, #tpu.memory_space<vmem>>) attributes {dimension_semantics = [#tpu.dimension_semantics<parallel>], iteration_bounds = array<i64: 2>, scalar_prefetch = 0 : i64, scratch_operands = 0 : i64, tpu.core_type = #tpu.core_type<tc>, window_params = [{transform_indices = @transform_0, window_bounds = array<i64: 1, 8, 2, 8, 2, 4>}, {pipeline_mode = #tpu.pipeline_mode<synchronous>, transform_indices = @transform_1, window_bounds = array<i64: 9, 4, 128>}, {pipeline_mode = #tpu.pipeline_mode<synchronous>, transform_indices = @transform_2, window_bounds = array<i64: 1, 128>}, {pipeline_mode = #tpu.pipeline_mode<synchronous>, transform_indices = @transform_3, window_bounds = array<i64: 1, 128>}, {pipeline_mode = #tpu.pipeline_mode<synchronous>, transform_indices = @transform_4, window_bounds = array<i64: 9, 8, 128>}, {pipeline_mode = #tpu.pipeline_mode<synchronous>, transform_indices = @transform_5, window_bounds = array<i64: 1, 128>}, {pipeline_mode = #tpu.pipeline_mode<synchronous>, transform_indices = @transform_6, window_bounds = array<i64: 1, 128>}, {transform_indices = @transform_7, window_bounds = array<i64: 64, 128>}]} {
    %c0 = arith.constant 0 : index
    %c0_0 = arith.constant 0 : index
    %c0_1 = arith.constant 0 : index
    %c0_2 = arith.constant 0 : index
    %c0_3 = arith.constant 0 : index
    %c0_4 = arith.constant 0 : index
    %0 = vector.load %arg1[%c0, %c0_0, %c0_1, %c0_2, %c0_3, %c0_4] : memref<1x8x2x8x2x4xf32, #tpu.memory_space<vmem>>, vector<1x8x2x8x2x4xf32>
    %1 = vector.extract_strided_slice %0 {offsets = [0, 0, 0, 0, 0, 0], sizes = [1, 8, 1, 8, 1, 4], strides = [1, 1, 1, 1, 1, 1]} : vector<1x8x2x8x2x4xf32> to vector<1x8x1x8x1x4xf32>
    %2 = vector.shape_cast %1 : vector<1x8x1x8x1x4xf32> to vector<1x8x8x4xf32>
    %3 = vector.extract_strided_slice %0 {offsets = [0, 0, 0, 0, 1, 0], sizes = [1, 8, 1, 8, 1, 4], strides = [1, 1, 1, 1, 1, 1]} : vector<1x8x2x8x2x4xf32> to vector<1x8x1x8x1x4xf32>
    %4 = vector.shape_cast %3 : vector<1x8x1x8x1x4xf32> to vector<1x8x8x4xf32>
    %5 = arith.maximumf %2, %4 : vector<1x8x8x4xf32>
    %6 = vector.extract_strided_slice %0 {offsets = [0, 0, 1, 0, 0, 0], sizes = [1, 8, 1, 8, 1, 4], strides = [1, 1, 1, 1, 1, 1]} : vector<1x8x2x8x2x4xf32> to vector<1x8x1x8x1x4xf32>
    %7 = vector.shape_cast %6 : vector<1x8x1x8x1x4xf32> to vector<1x8x8x4xf32>
    %8 = vector.extract_strided_slice %0 {offsets = [0, 0, 1, 0, 1, 0], sizes = [1, 8, 1, 8, 1, 4], strides = [1, 1, 1, 1, 1, 1]} : vector<1x8x2x8x2x4xf32> to vector<1x8x1x8x1x4xf32>
    %9 = vector.shape_cast %8 : vector<1x8x1x8x1x4xf32> to vector<1x8x8x4xf32>
    %10 = arith.maximumf %7, %9 : vector<1x8x8x4xf32>
    %11 = arith.maximumf %5, %10 : vector<1x8x8x4xf32>
    %cst = arith.constant 0.000000e+00 : f32
    %12 = vector.broadcast %cst : f32 to vector<64x128xf32>
    %cst_5 = arith.constant 0.000000e+00 : f32
    %13 = vector.broadcast %cst_5 : f32 to vector<1x1x8x4xf32>
    %14 = vector.extract_strided_slice %11 {offsets = [0, 0, 0, 0], sizes = [1, 7, 8, 4], strides = [1, 1, 1, 1]} : vector<1x8x8x4xf32> to vector<1x7x8x4xf32>
    %15 = tpu.concatenate %13, %14 in 1 : vector<1x1x8x4xf32>, vector<1x7x8x4xf32> -> vector<1x8x8x4xf32>
    %cst_6 = arith.constant 0.000000e+00 : f32
    %16 = vector.broadcast %cst_6 : f32 to vector<1x8x1x4xf32>
    %17 = vector.extract_strided_slice %15 {offsets = [0, 0, 0, 0], sizes = [1, 8, 7, 4], strides = [1, 1, 1, 1]} : vector<1x8x8x4xf32> to vector<1x8x7x4xf32>
    %18 = tpu.concatenate %16, %17 in 2 : vector<1x8x1x4xf32>, vector<1x8x7x4xf32> -> vector<1x8x8x4xf32>
    %19 = vector.shape_cast %18 : vector<1x8x8x4xf32> to vector<64x4xf32>
    %c0_7 = arith.constant 0 : index
    %c0_8 = arith.constant 0 : index
    %c0_9 = arith.constant 0 : index
    %20 = vector.load %arg2[%c0_7, %c0_8, %c0_9] : memref<9x4x128xf32, #tpu.memory_space<vmem>>, vector<1x4x128xf32>
    %21 = vector.shape_cast %20 : vector<1x4x128xf32> to vector<4x128xf32>
    %cst_10 = arith.constant dense<0.000000e+00> : vector<64x128xf32>
    %22 = tpu.matmul %19, %21, %cst_10 {dimension_numbers = #tpu.dot_dimension_numbers<[1], [0], [0], [1], [0, 0, 1, 1], [], []>} : vector<64x4xf32>, vector<4x128xf32>, vector<64x128xf32> -> vector<64x128xf32>
    %23 = arith.addf %12, %22 : vector<64x128xf32>
    %24 = vector.shape_cast %15 : vector<1x8x8x4xf32> to vector<64x4xf32>
    %c1 = arith.constant 1 : index
    %c0_11 = arith.constant 0 : index
    %c0_12 = arith.constant 0 : index
    %25 = vector.load %arg2[%c1, %c0_11, %c0_12] : memref<9x4x128xf32, #tpu.memory_space<vmem>>, vector<1x4x128xf32>
    %26 = vector.shape_cast %25 : vector<1x4x128xf32> to vector<4x128xf32>
    %cst_13 = arith.constant dense<0.000000e+00> : vector<64x128xf32>
    %27 = tpu.matmul %24, %26, %cst_13 {dimension_numbers = #tpu.dot_dimension_numbers<[1], [0], [0], [1], [0, 0, 1, 1], [], []>} : vector<64x4xf32>, vector<4x128xf32>, vector<64x128xf32> -> vector<64x128xf32>
    %28 = arith.addf %23, %27 : vector<64x128xf32>
    %cst_14 = arith.constant 0.000000e+00 : f32
    %29 = vector.broadcast %cst_14 : f32 to vector<1x8x1x4xf32>
    %30 = vector.extract_strided_slice %15 {offsets = [0, 0, 1, 0], sizes = [1, 8, 7, 4], strides = [1, 1, 1, 1]} : vector<1x8x8x4xf32> to vector<1x8x7x4xf32>
    %31 = tpu.concatenate %30, %29 in 2 : vector<1x8x7x4xf32>, vector<1x8x1x4xf32> -> vector<1x8x8x4xf32>
    %32 = vector.shape_cast %31 : vector<1x8x8x4xf32> to vector<64x4xf32>
    %c2 = arith.constant 2 : index
    %c0_15 = arith.constant 0 : index
    %c0_16 = arith.constant 0 : index
    %33 = vector.load %arg2[%c2, %c0_15, %c0_16] : memref<9x4x128xf32, #tpu.memory_space<vmem>>, vector<1x4x128xf32>
    %34 = vector.shape_cast %33 : vector<1x4x128xf32> to vector<4x128xf32>
    %cst_17 = arith.constant dense<0.000000e+00> : vector<64x128xf32>
    %35 = tpu.matmul %32, %34, %cst_17 {dimension_numbers = #tpu.dot_dimension_numbers<[1], [0], [0], [1], [0, 0, 1, 1], [], []>} : vector<64x4xf32>, vector<4x128xf32>, vector<64x128xf32> -> vector<64x128xf32>
    %36 = arith.addf %28, %35 : vector<64x128xf32>
    %cst_18 = arith.constant 0.000000e+00 : f32
    %37 = vector.broadcast %cst_18 : f32 to vector<1x8x1x4xf32>
    %38 = vector.extract_strided_slice %11 {offsets = [0, 0, 0, 0], sizes = [1, 8, 7, 4], strides = [1, 1, 1, 1]} : vector<1x8x8x4xf32> to vector<1x8x7x4xf32>
    %39 = tpu.concatenate %37, %38 in 2 : vector<1x8x1x4xf32>, vector<1x8x7x4xf32> -> vector<1x8x8x4xf32>
    %40 = vector.shape_cast %39 : vector<1x8x8x4xf32> to vector<64x4xf32>
    %c3 = arith.constant 3 : index
    %c0_19 = arith.constant 0 : index
    %c0_20 = arith.constant 0 : index
    %41 = vector.load %arg2[%c3, %c0_19, %c0_20] : memref<9x4x128xf32, #tpu.memory_space<vmem>>, vector<1x4x128xf32>
    %42 = vector.shape_cast %41 : vector<1x4x128xf32> to vector<4x128xf32>
    %cst_21 = arith.constant dense<0.000000e+00> : vector<64x128xf32>
    %43 = tpu.matmul %40, %42, %cst_21 {dimension_numbers = #tpu.dot_dimension_numbers<[1], [0], [0], [1], [0, 0, 1, 1], [], []>} : vector<64x4xf32>, vector<4x128xf32>, vector<64x128xf32> -> vector<64x128xf32>
    %44 = arith.addf %36, %43 : vector<64x128xf32>
    %45 = vector.shape_cast %11 : vector<1x8x8x4xf32> to vector<64x4xf32>
    %c4 = arith.constant 4 : index
    %c0_22 = arith.constant 0 : index
    %c0_23 = arith.constant 0 : index
    %46 = vector.load %arg2[%c4, %c0_22, %c0_23] : memref<9x4x128xf32, #tpu.memory_space<vmem>>, vector<1x4x128xf32>
    %47 = vector.shape_cast %46 : vector<1x4x128xf32> to vector<4x128xf32>
    %cst_24 = arith.constant dense<0.000000e+00> : vector<64x128xf32>
    %48 = tpu.matmul %45, %47, %cst_24 {dimension_numbers = #tpu.dot_dimension_numbers<[1], [0], [0], [1], [0, 0, 1, 1], [], []>} : vector<64x4xf32>, vector<4x128xf32>, vector<64x128xf32> -> vector<64x128xf32>
    %49 = arith.addf %44, %48 : vector<64x128xf32>
    %cst_25 = arith.constant 0.000000e+00 : f32
    %50 = vector.broadcast %cst_25 : f32 to vector<1x8x1x4xf32>
    %51 = vector.extract_strided_slice %11 {offsets = [0, 0, 1, 0], sizes = [1, 8, 7, 4], strides = [1, 1, 1, 1]} : vector<1x8x8x4xf32> to vector<1x8x7x4xf32>
    %52 = tpu.concatenate %51, %50 in 2 : vector<1x8x7x4xf32>, vector<1x8x1x4xf32> -> vector<1x8x8x4xf32>
    %53 = vector.shape_cast %52 : vector<1x8x8x4xf32> to vector<64x4xf32>
    %c5 = arith.constant 5 : index
    %c0_26 = arith.constant 0 : index
    %c0_27 = arith.constant 0 : index
    %54 = vector.load %arg2[%c5, %c0_26, %c0_27] : memref<9x4x128xf32, #tpu.memory_space<vmem>>, vector<1x4x128xf32>
    %55 = vector.shape_cast %54 : vector<1x4x128xf32> to vector<4x128xf32>
    %cst_28 = arith.constant dense<0.000000e+00> : vector<64x128xf32>
    %56 = tpu.matmul %53, %55, %cst_28 {dimension_numbers = #tpu.dot_dimension_numbers<[1], [0], [0], [1], [0, 0, 1, 1], [], []>} : vector<64x4xf32>, vector<4x128xf32>, vector<64x128xf32> -> vector<64x128xf32>
    %57 = arith.addf %49, %56 : vector<64x128xf32>
    %cst_29 = arith.constant 0.000000e+00 : f32
    %58 = vector.broadcast %cst_29 : f32 to vector<1x1x8x4xf32>
    %59 = vector.extract_strided_slice %11 {offsets = [0, 1, 0, 0], sizes = [1, 7, 8, 4], strides = [1, 1, 1, 1]} : vector<1x8x8x4xf32> to vector<1x7x8x4xf32>
    %60 = tpu.concatenate %59, %58 in 1 : vector<1x7x8x4xf32>, vector<1x1x8x4xf32> -> vector<1x8x8x4xf32>
    %cst_30 = arith.constant 0.000000e+00 : f32
    %61 = vector.broadcast %cst_30 : f32 to vector<1x8x1x4xf32>
    %62 = vector.extract_strided_slice %60 {offsets = [0, 0, 0, 0], sizes = [1, 8, 7, 4], strides = [1, 1, 1, 1]} : vector<1x8x8x4xf32> to vector<1x8x7x4xf32>
    %63 = tpu.concatenate %61, %62 in 2 : vector<1x8x1x4xf32>, vector<1x8x7x4xf32> -> vector<1x8x8x4xf32>
    %64 = vector.shape_cast %63 : vector<1x8x8x4xf32> to vector<64x4xf32>
    %c6 = arith.constant 6 : index
    %c0_31 = arith.constant 0 : index
    %c0_32 = arith.constant 0 : index
    %65 = vector.load %arg2[%c6, %c0_31, %c0_32] : memref<9x4x128xf32, #tpu.memory_space<vmem>>, vector<1x4x128xf32>
    %66 = vector.shape_cast %65 : vector<1x4x128xf32> to vector<4x128xf32>
    %cst_33 = arith.constant dense<0.000000e+00> : vector<64x128xf32>
    %67 = tpu.matmul %64, %66, %cst_33 {dimension_numbers = #tpu.dot_dimension_numbers<[1], [0], [0], [1], [0, 0, 1, 1], [], []>} : vector<64x4xf32>, vector<4x128xf32>, vector<64x128xf32> -> vector<64x128xf32>
    %68 = arith.addf %57, %67 : vector<64x128xf32>
    %69 = vector.shape_cast %60 : vector<1x8x8x4xf32> to vector<64x4xf32>
    %c7 = arith.constant 7 : index
    %c0_34 = arith.constant 0 : index
    %c0_35 = arith.constant 0 : index
    %70 = vector.load %arg2[%c7, %c0_34, %c0_35] : memref<9x4x128xf32, #tpu.memory_space<vmem>>, vector<1x4x128xf32>
    %71 = vector.shape_cast %70 : vector<1x4x128xf32> to vector<4x128xf32>
    %cst_36 = arith.constant dense<0.000000e+00> : vector<64x128xf32>
    %72 = tpu.matmul %69, %71, %cst_36 {dimension_numbers = #tpu.dot_dimension_numbers<[1], [0], [0], [1], [0, 0, 1, 1], [], []>} : vector<64x4xf32>, vector<4x128xf32>, vector<64x128xf32> -> vector<64x128xf32>
    %73 = arith.addf %68, %72 : vector<64x128xf32>
    %cst_37 = arith.constant 0.000000e+00 : f32
    %74 = vector.broadcast %cst_37 : f32 to vector<1x8x1x4xf32>
    %75 = vector.extract_strided_slice %60 {offsets = [0, 0, 1, 0], sizes = [1, 8, 7, 4], strides = [1, 1, 1, 1]} : vector<1x8x8x4xf32> to vector<1x8x7x4xf32>
    %76 = tpu.concatenate %75, %74 in 2 : vector<1x8x7x4xf32>, vector<1x8x1x4xf32> -> vector<1x8x8x4xf32>
    %77 = vector.shape_cast %76 : vector<1x8x8x4xf32> to vector<64x4xf32>
    %c8 = arith.constant 8 : index
    %c0_38 = arith.constant 0 : index
    %c0_39 = arith.constant 0 : index
    %78 = vector.load %arg2[%c8, %c0_38, %c0_39] : memref<9x4x128xf32, #tpu.memory_space<vmem>>, vector<1x4x128xf32>
    %79 = vector.shape_cast %78 : vector<1x4x128xf32> to vector<4x128xf32>
    %cst_40 = arith.constant dense<0.000000e+00> : vector<64x128xf32>
    %80 = tpu.matmul %77, %79, %cst_40 {dimension_numbers = #tpu.dot_dimension_numbers<[1], [0], [0], [1], [0, 0, 1, 1], [], []>} : vector<64x4xf32>, vector<4x128xf32>, vector<64x128xf32> -> vector<64x128xf32>
    %81 = arith.addf %73, %80 : vector<64x128xf32>
    %c0_41 = arith.constant 0 : index
    %c0_42 = arith.constant 0 : index
    %82 = vector.load %arg3[%c0_41, %c0_42] : memref<1x128xf32, #tpu.memory_space<vmem>>, vector<1x128xf32>
    %83 = vector.broadcast %82 : vector<1x128xf32> to vector<64x128xf32>
    %84 = arith.mulf %81, %83 : vector<64x128xf32>
    %c0_43 = arith.constant 0 : index
    %c0_44 = arith.constant 0 : index
    %85 = vector.load %arg4[%c0_43, %c0_44] : memref<1x128xf32, #tpu.memory_space<vmem>>, vector<1x128xf32>
    %86 = vector.broadcast %85 : vector<1x128xf32> to vector<64x128xf32>
    %87 = arith.addf %84, %86 : vector<64x128xf32>
    %cst_45 = arith.constant 0.000000e+00 : f32
    %88 = vector.broadcast %cst_45 : f32 to vector<64x128xf32>
    %89 = arith.maximumf %87, %88 : vector<64x128xf32>
    %90 = vector.shape_cast %89 : vector<64x128xf32> to vector<1x8x8x128xf32>
    %91 = vector.extract_strided_slice %90 {offsets = [0, 0, 0, 0], sizes = [1, 8, 8, 8], strides = [1, 1, 1, 1]} : vector<1x8x8x128xf32> to vector<1x8x8x8xf32>
    %cst_46 = arith.constant 0.000000e+00 : f32
    %92 = vector.broadcast %cst_46 : f32 to vector<64x128xf32>
    %cst_47 = arith.constant 0.000000e+00 : f32
    %93 = vector.broadcast %cst_47 : f32 to vector<1x1x8x8xf32>
    %94 = vector.extract_strided_slice %91 {offsets = [0, 0, 0, 0], sizes = [1, 7, 8, 8], strides = [1, 1, 1, 1]} : vector<1x8x8x8xf32> to vector<1x7x8x8xf32>
    %95 = tpu.concatenate %93, %94 in 1 : vector<1x1x8x8xf32>, vector<1x7x8x8xf32> -> vector<1x8x8x8xf32>
    %cst_48 = arith.constant 0.000000e+00 : f32
    %96 = vector.broadcast %cst_48 : f32 to vector<1x8x1x8xf32>
    %97 = vector.extract_strided_slice %95 {offsets = [0, 0, 0, 0], sizes = [1, 8, 7, 8], strides = [1, 1, 1, 1]} : vector<1x8x8x8xf32> to vector<1x8x7x8xf32>
    %98 = tpu.concatenate %96, %97 in 2 : vector<1x8x1x8xf32>, vector<1x8x7x8xf32> -> vector<1x8x8x8xf32>
    %99 = vector.shape_cast %98 : vector<1x8x8x8xf32> to vector<64x8xf32>
    %c0_49 = arith.constant 0 : index
    %c0_50 = arith.constant 0 : index
    %c0_51 = arith.constant 0 : index
    %100 = vector.load %arg5[%c0_49, %c0_50, %c0_51] : memref<9x8x128xf32, #tpu.memory_space<vmem>>, vector<1x8x128xf32>
    %101 = vector.shape_cast %100 : vector<1x8x128xf32> to vector<8x128xf32>
    %cst_52 = arith.constant dense<0.000000e+00> : vector<64x128xf32>
    %102 = tpu.matmul %99, %101, %cst_52 {dimension_numbers = #tpu.dot_dimension_numbers<[1], [0], [0], [1], [0, 0, 1, 1], [], []>} : vector<64x8xf32>, vector<8x128xf32>, vector<64x128xf32> -> vector<64x128xf32>
    %103 = arith.addf %92, %102 : vector<64x128xf32>
    %104 = vector.shape_cast %95 : vector<1x8x8x8xf32> to vector<64x8xf32>
    %c1_53 = arith.constant 1 : index
    %c0_54 = arith.constant 0 : index
    %c0_55 = arith.constant 0 : index
    %105 = vector.load %arg5[%c1_53, %c0_54, %c0_55] : memref<9x8x128xf32, #tpu.memory_space<vmem>>, vector<1x8x128xf32>
    %106 = vector.shape_cast %105 : vector<1x8x128xf32> to vector<8x128xf32>
    %cst_56 = arith.constant dense<0.000000e+00> : vector<64x128xf32>
    %107 = tpu.matmul %104, %106, %cst_56 {dimension_numbers = #tpu.dot_dimension_numbers<[1], [0], [0], [1], [0, 0, 1, 1], [], []>} : vector<64x8xf32>, vector<8x128xf32>, vector<64x128xf32> -> vector<64x128xf32>
    %108 = arith.addf %103, %107 : vector<64x128xf32>
    %cst_57 = arith.constant 0.000000e+00 : f32
    %109 = vector.broadcast %cst_57 : f32 to vector<1x8x1x8xf32>
    %110 = vector.extract_strided_slice %95 {offsets = [0, 0, 1, 0], sizes = [1, 8, 7, 8], strides = [1, 1, 1, 1]} : vector<1x8x8x8xf32> to vector<1x8x7x8xf32>
    %111 = tpu.concatenate %110, %109 in 2 : vector<1x8x7x8xf32>, vector<1x8x1x8xf32> -> vector<1x8x8x8xf32>
    %112 = vector.shape_cast %111 : vector<1x8x8x8xf32> to vector<64x8xf32>
    %c2_58 = arith.constant 2 : index
    %c0_59 = arith.constant 0 : index
    %c0_60 = arith.constant 0 : index
    %113 = vector.load %arg5[%c2_58, %c0_59, %c0_60] : memref<9x8x128xf32, #tpu.memory_space<vmem>>, vector<1x8x128xf32>
    %114 = vector.shape_cast %113 : vector<1x8x128xf32> to vector<8x128xf32>
    %cst_61 = arith.constant dense<0.000000e+00> : vector<64x128xf32>
    %115 = tpu.matmul %112, %114, %cst_61 {dimension_numbers = #tpu.dot_dimension_numbers<[1], [0], [0], [1], [0, 0, 1, 1], [], []>} : vector<64x8xf32>, vector<8x128xf32>, vector<64x128xf32> -> vector<64x128xf32>
    %116 = arith.addf %108, %115 : vector<64x128xf32>
    %cst_62 = arith.constant 0.000000e+00 : f32
    %117 = vector.broadcast %cst_62 : f32 to vector<1x8x1x8xf32>
    %118 = vector.extract_strided_slice %91 {offsets = [0, 0, 0, 0], sizes = [1, 8, 7, 8], strides = [1, 1, 1, 1]} : vector<1x8x8x8xf32> to vector<1x8x7x8xf32>
    %119 = tpu.concatenate %117, %118 in 2 : vector<1x8x1x8xf32>, vector<1x8x7x8xf32> -> vector<1x8x8x8xf32>
    %120 = vector.shape_cast %119 : vector<1x8x8x8xf32> to vector<64x8xf32>
    %c3_63 = arith.constant 3 : index
    %c0_64 = arith.constant 0 : index
    %c0_65 = arith.constant 0 : index
    %121 = vector.load %arg5[%c3_63, %c0_64, %c0_65] : memref<9x8x128xf32, #tpu.memory_space<vmem>>, vector<1x8x128xf32>
    %122 = vector.shape_cast %121 : vector<1x8x128xf32> to vector<8x128xf32>
    %cst_66 = arith.constant dense<0.000000e+00> : vector<64x128xf32>
    %123 = tpu.matmul %120, %122, %cst_66 {dimension_numbers = #tpu.dot_dimension_numbers<[1], [0], [0], [1], [0, 0, 1, 1], [], []>} : vector<64x8xf32>, vector<8x128xf32>, vector<64x128xf32> -> vector<64x128xf32>
    %124 = arith.addf %116, %123 : vector<64x128xf32>
    %125 = vector.shape_cast %91 : vector<1x8x8x8xf32> to vector<64x8xf32>
    %c4_67 = arith.constant 4 : index
    %c0_68 = arith.constant 0 : index
    %c0_69 = arith.constant 0 : index
    %126 = vector.load %arg5[%c4_67, %c0_68, %c0_69] : memref<9x8x128xf32, #tpu.memory_space<vmem>>, vector<1x8x128xf32>
    %127 = vector.shape_cast %126 : vector<1x8x128xf32> to vector<8x128xf32>
    %cst_70 = arith.constant dense<0.000000e+00> : vector<64x128xf32>
    %128 = tpu.matmul %125, %127, %cst_70 {dimension_numbers = #tpu.dot_dimension_numbers<[1], [0], [0], [1], [0, 0, 1, 1], [], []>} : vector<64x8xf32>, vector<8x128xf32>, vector<64x128xf32> -> vector<64x128xf32>
    %129 = arith.addf %124, %128 : vector<64x128xf32>
    %cst_71 = arith.constant 0.000000e+00 : f32
    %130 = vector.broadcast %cst_71 : f32 to vector<1x8x1x8xf32>
    %131 = vector.extract_strided_slice %91 {offsets = [0, 0, 1, 0], sizes = [1, 8, 7, 8], strides = [1, 1, 1, 1]} : vector<1x8x8x8xf32> to vector<1x8x7x8xf32>
    %132 = tpu.concatenate %131, %130 in 2 : vector<1x8x7x8xf32>, vector<1x8x1x8xf32> -> vector<1x8x8x8xf32>
    %133 = vector.shape_cast %132 : vector<1x8x8x8xf32> to vector<64x8xf32>
    %c5_72 = arith.constant 5 : index
    %c0_73 = arith.constant 0 : index
    %c0_74 = arith.constant 0 : index
    %134 = vector.load %arg5[%c5_72, %c0_73, %c0_74] : memref<9x8x128xf32, #tpu.memory_space<vmem>>, vector<1x8x128xf32>
    %135 = vector.shape_cast %134 : vector<1x8x128xf32> to vector<8x128xf32>
    %cst_75 = arith.constant dense<0.000000e+00> : vector<64x128xf32>
    %136 = tpu.matmul %133, %135, %cst_75 {dimension_numbers = #tpu.dot_dimension_numbers<[1], [0], [0], [1], [0, 0, 1, 1], [], []>} : vector<64x8xf32>, vector<8x128xf32>, vector<64x128xf32> -> vector<64x128xf32>
    %137 = arith.addf %129, %136 : vector<64x128xf32>
    %cst_76 = arith.constant 0.000000e+00 : f32
    %138 = vector.broadcast %cst_76 : f32 to vector<1x1x8x8xf32>
    %139 = vector.extract_strided_slice %91 {offsets = [0, 1, 0, 0], sizes = [1, 7, 8, 8], strides = [1, 1, 1, 1]} : vector<1x8x8x8xf32> to vector<1x7x8x8xf32>
    %140 = tpu.concatenate %139, %138 in 1 : vector<1x7x8x8xf32>, vector<1x1x8x8xf32> -> vector<1x8x8x8xf32>
    %cst_77 = arith.constant 0.000000e+00 : f32
    %141 = vector.broadcast %cst_77 : f32 to vector<1x8x1x8xf32>
    %142 = vector.extract_strided_slice %140 {offsets = [0, 0, 0, 0], sizes = [1, 8, 7, 8], strides = [1, 1, 1, 1]} : vector<1x8x8x8xf32> to vector<1x8x7x8xf32>
    %143 = tpu.concatenate %141, %142 in 2 : vector<1x8x1x8xf32>, vector<1x8x7x8xf32> -> vector<1x8x8x8xf32>
    %144 = vector.shape_cast %143 : vector<1x8x8x8xf32> to vector<64x8xf32>
    %c6_78 = arith.constant 6 : index
    %c0_79 = arith.constant 0 : index
    %c0_80 = arith.constant 0 : index
    %145 = vector.load %arg5[%c6_78, %c0_79, %c0_80] : memref<9x8x128xf32, #tpu.memory_space<vmem>>, vector<1x8x128xf32>
    %146 = vector.shape_cast %145 : vector<1x8x128xf32> to vector<8x128xf32>
    %cst_81 = arith.constant dense<0.000000e+00> : vector<64x128xf32>
    %147 = tpu.matmul %144, %146, %cst_81 {dimension_numbers = #tpu.dot_dimension_numbers<[1], [0], [0], [1], [0, 0, 1, 1], [], []>} : vector<64x8xf32>, vector<8x128xf32>, vector<64x128xf32> -> vector<64x128xf32>
    %148 = arith.addf %137, %147 : vector<64x128xf32>
    %149 = vector.shape_cast %140 : vector<1x8x8x8xf32> to vector<64x8xf32>
    %c7_82 = arith.constant 7 : index
    %c0_83 = arith.constant 0 : index
    %c0_84 = arith.constant 0 : index
    %150 = vector.load %arg5[%c7_82, %c0_83, %c0_84] : memref<9x8x128xf32, #tpu.memory_space<vmem>>, vector<1x8x128xf32>
    %151 = vector.shape_cast %150 : vector<1x8x128xf32> to vector<8x128xf32>
    %cst_85 = arith.constant dense<0.000000e+00> : vector<64x128xf32>
    %152 = tpu.matmul %149, %151, %cst_85 {dimension_numbers = #tpu.dot_dimension_numbers<[1], [0], [0], [1], [0, 0, 1, 1], [], []>} : vector<64x8xf32>, vector<8x128xf32>, vector<64x128xf32> -> vector<64x128xf32>
    %153 = arith.addf %148, %152 : vector<64x128xf32>
    %cst_86 = arith.constant 0.000000e+00 : f32
    %154 = vector.broadcast %cst_86 : f32 to vector<1x8x1x8xf32>
    %155 = vector.extract_strided_slice %140 {offsets = [0, 0, 1, 0], sizes = [1, 8, 7, 8], strides = [1, 1, 1, 1]} : vector<1x8x8x8xf32> to vector<1x8x7x8xf32>
    %156 = tpu.concatenate %155, %154 in 2 : vector<1x8x7x8xf32>, vector<1x8x1x8xf32> -> vector<1x8x8x8xf32>
    %157 = vector.shape_cast %156 : vector<1x8x8x8xf32> to vector<64x8xf32>
    %c8_87 = arith.constant 8 : index
    %c0_88 = arith.constant 0 : index
    %c0_89 = arith.constant 0 : index
    %158 = vector.load %arg5[%c8_87, %c0_88, %c0_89] : memref<9x8x128xf32, #tpu.memory_space<vmem>>, vector<1x8x128xf32>
    %159 = vector.shape_cast %158 : vector<1x8x128xf32> to vector<8x128xf32>
    %cst_90 = arith.constant dense<0.000000e+00> : vector<64x128xf32>
    %160 = tpu.matmul %157, %159, %cst_90 {dimension_numbers = #tpu.dot_dimension_numbers<[1], [0], [0], [1], [0, 0, 1, 1], [], []>} : vector<64x8xf32>, vector<8x128xf32>, vector<64x128xf32> -> vector<64x128xf32>
    %161 = arith.addf %153, %160 : vector<64x128xf32>
    %c0_91 = arith.constant 0 : index
    %c0_92 = arith.constant 0 : index
    %162 = vector.load %arg6[%c0_91, %c0_92] : memref<1x128xf32, #tpu.memory_space<vmem>>, vector<1x128xf32>
    %163 = vector.broadcast %162 : vector<1x128xf32> to vector<64x128xf32>
    %164 = arith.mulf %161, %163 : vector<64x128xf32>
    %c0_93 = arith.constant 0 : index
    %c0_94 = arith.constant 0 : index
    %165 = vector.load %arg7[%c0_93, %c0_94] : memref<1x128xf32, #tpu.memory_space<vmem>>, vector<1x128xf32>
    %166 = vector.broadcast %165 : vector<1x128xf32> to vector<64x128xf32>
    %167 = arith.addf %164, %166 : vector<64x128xf32>
    %cst_95 = arith.constant 0.000000e+00 : f32
    %168 = vector.broadcast %cst_95 : f32 to vector<64x128xf32>
    %169 = arith.maximumf %167, %168 : vector<64x128xf32>
    %c0_96 = arith.constant 0 : index
    %c0_97 = arith.constant 0 : index
    %170 = vector.load %arg8[%c0_96, %c0_97] : memref<64x128xf32, #tpu.memory_space<vmem>>, vector<64x128xf32>
    tpu.vector_store %arg8[%c0_96, %c0_97], %169 {strides = array<i32>} : memref<64x128xf32, #tpu.memory_space<vmem>>, vector<64x128xf32>,
    return
  }
  func.func @transform_0(%arg0: i32) -> (i32, i32, i32, i32, i32, i32) {
    %c0_i32 = arith.constant 0 : i32
    %c0_i32_0 = arith.constant 0 : i32
    %c0_i32_1 = arith.constant 0 : i32
    %c0_i32_2 = arith.constant 0 : i32
    %c0_i32_3 = arith.constant 0 : i32
    %c0_i32_4 = arith.constant 0 : i32
    return %arg0, %c0_i32, %c0_i32_0, %c0_i32_1, %c0_i32_2, %c0_i32_3 : i32, i32, i32, i32, i32, i32
  }
  func.func @transform_1(%arg0: i32) -> (i32, i32, i32) {
    %c0_i32 = arith.constant 0 : i32
    %c0_i32_0 = arith.constant 0 : i32
    %c0_i32_1 = arith.constant 0 : i32
    %c0_i32_2 = arith.constant 0 : i32
    return %c0_i32, %c0_i32_0, %c0_i32_1 : i32, i32, i32
  }
  func.func @transform_2(%arg0: i32) -> (i32, i32) {
    %c0_i32 = arith.constant 0 : i32
    %c0_i32_0 = arith.constant 0 : i32
    %c0_i32_1 = arith.constant 0 : i32
    return %c0_i32, %c0_i32_0 : i32, i32
  }
  func.func @transform_3(%arg0: i32) -> (i32, i32) {
    %c0_i32 = arith.constant 0 : i32
    %c0_i32_0 = arith.constant 0 : i32
    %c0_i32_1 = arith.constant 0 : i32
    return %c0_i32, %c0_i32_0 : i32, i32
  }
  func.func @transform_4(%arg0: i32) -> (i32, i32, i32) {
    %c0_i32 = arith.constant 0 : i32
    %c0_i32_0 = arith.constant 0 : i32
    %c0_i32_1 = arith.constant 0 : i32
    %c0_i32_2 = arith.constant 0 : i32
    return %c0_i32, %c0_i32_0, %c0_i32_1 : i32, i32, i32
  }
  func.func @transform_5(%arg0: i32) -> (i32, i32) {
    %c0_i32 = arith.constant 0 : i32
    %c0_i32_0 = arith.constant 0 : i32
    %c0_i32_1 = arith.constant 0 : i32
    return %c0_i32, %c0_i32_0 : i32, i32
  }
  func.func @transform_6(%arg0: i32) -> (i32, i32) {
    %c0_i32 = arith.constant 0 : i32
    %c0_i32_0 = arith.constant 0 : i32
    %c0_i32_1 = arith.constant 0 : i32
    return %c0_i32, %c0_i32_0 : i32, i32
  }
  func.func @transform_7(%arg0: i32) -> (i32, i32) {
    %c0_i32 = arith.constant 0 : i32
    %c0_i32_0 = arith.constant 0 : i32
    return %arg0, %c0_i32 : i32, i32
  }
}

</mosaic_0001>

<llo_original>
// kernel: tpu_custom_call.1
$region0: #{tpu_custom_call.1}
  #allocation0 [shape = 'u32[]', space=smem, size = 0x4, offset = 0x4, fixed_abs, tag = 'smem constant byte address 0x4 - core index']
  #allocation1 [shape = 'u32[144,128]{1,0:T(1,128)}', space=vmem, size = 0x12000, scoped, tag = 'internal scratch']
  %s0 = inlined_call_operand.vmem [shape: f32[2,8,2,8,2,4], index: 0, kind: input, shape index: {}]
  %s1 = inlined_call_operand.vmem [shape: f32[9,4,128], index: 1, kind: input, shape index: {}]
  %s2 = inlined_call_operand.vmem [shape: f32[1,128], index: 2, kind: input, shape index: {}]
  %s3 = inlined_call_operand.vmem [shape: f32[1,128], index: 3, kind: input, shape index: {}]
  %s4 = inlined_call_operand.vmem [shape: f32[9,8,128], index: 4, kind: input, shape index: {}]
  %s5 = inlined_call_operand.vmem [shape: f32[1,128], index: 5, kind: input, shape index: {}]
  %s6 = inlined_call_operand.vmem [shape: f32[1,128], index: 6, kind: input, shape index: {}]
  %s7 = inlined_call_operand.hbm [shape: f32[128,128], index: 7, kind: output, shape index: {}]
  %s8 = sld [smem:[#allocation0]]
  $region61: #{tpu_custom_call.1} parent=0
    _
  %s10 = ssub.s32 1, %s8
  %s11 = scalar_select 0, %s10, %s8
  $region1: #{tpu_custom_call.1} parent=0
    #allocation2 [shape = 'u8[65536]{0}', space=vmem, size = 0x10000, scoped, tag = 'output window, operand 0']
    #allocation3 [shape = 's32[2]{0}', space=sflag, size = 0x8, scoped, tag = 'scoped memory for tpu_custom_call.1']
    %12 = vsyncpa [#allocation3], 0
    %s13 = scalar_lea.sflag [#allocation3], 1
    %14 = vsyncpa %s13, 0
    loop: start=0, step=1, limit=4
    $region2: #{tpu_custom_call.1} parent=1 // loop_pre_header
      _
    $region3: #{tpu_custom_call.1} parent=1 // loop_header
      %s16 = sphi 0, %s20
      %p17 = scmp.ge.s32.totalorder %s16, 4
      %s26 = sphi 0, %s28
      %s29 = sphi 0, %s26
      %s30 = sphi 0, %s29
      %s46 = sphi 0, %s30
      %s50 = sphi 0, %s50
      %s52 = sphi 0, %s50
      %s53 = sphi 0, %s52
      %s67 = sphi 0, %s53
      %s71 = sphi 0, %s71
      %s73 = sphi 0, %s71
      %s74 = sphi 0, %s73
      %s88 = sphi 0, %s74
      %s92 = sphi 0, %s92
      %s94 = sphi 0, %s92
      %s95 = sphi 0, %s94
      %s109 = sphi 0, %s95
      %s113 = sphi 0, %s113
      %s115 = sphi 0, %s113
      %s116 = sphi 0, %s115
      %s130 = sphi 0, %s116
      %s134 = sphi 0, %s134
      %s136 = sphi 0, %s134
      %s137 = sphi 0, %s136
      %s151 = sphi 0, %s137
      %s155 = sphi 0, %s155
      %s157 = sphi 0, %s155
      %s158 = sphi 0, %s157
      %s172 = sphi 0, %s158
      %s178 = sphi 0, %s180
      %s181 = sphi 0, %s178
      %s182 = sphi 0, %s181
      %s198 = sphi 0, %s182
    $region4: #{tpu_custom_call.1} parent=1 // loop_header_branch
      %19 = sbr.rel (%p17) target = $region8
    $region5: #{tpu_custom_call.1} parent=1 // loop_body
      %s21 = ssub.s32 %s16, 1
      %s22 = ssub.s32 %s16, 2
      %s23 = sadd.s32 %s16, 1
      %s24 = ssub.s32 %s16, %s23
      %p25 = scmp.eq.s32.totalorder %s24, 0
      %s27 = sadd.s32 %s26, 1
      %s28 = scalar_select %p25, %s26, %s27
      %p31 = pneg %p25
      %p32 = scmp.eq.s32.totalorder %s16, 1
      %p33 = por %p31, %p32
      %p34 = scmp.ne.s32.totalorder %s26, %s29
      %p35 = scmp.eq.s32.totalorder %s16, 0
      %p36 = por %p34, %p35
      %p37 = scmp.ne.s32.totalorder %s26, %s29
      %p38 = scmp.eq.s32.totalorder %s21, 1
      %p39 = por %p37, %p38
      %p40 = scmp.ne.s32.totalorder %s29, %s30
      %p41 = scmp.eq.s32.totalorder %s21, 0
      %p42 = por %p40, %p41
      %p43 = scmp.ne.s32.totalorder %s29, %s30
      %p44 = scmp.eq.s32.totalorder %s22, 1
      %p45 = por %p43, %p44
      %p47 = scmp.ne.s32.totalorder %s30, %s46
      %p48 = scmp.eq.s32.totalorder %s22, 0
      %p49 = por %p47, %p48
      %s51 = sadd.s32 %s50, 1
      %p54 = scmp.eq.s32.totalorder %s16, 1
      %p55 = scmp.ne.s32.totalorder %s50, %s52
      %p56 = scmp.eq.s32.totalorder %s16, 0
      %p57 = por %p55, %p56
      %p58 = scmp.ne.s32.totalorder %s50, %s52
      %p59 = scmp.eq.s32.totalorder %s21, 1
      %p60 = por %p58, %p59
      %p61 = scmp.ne.s32.totalorder %s52, %s53
      %p62 = scmp.eq.s32.totalorder %s21, 0
      %p63 = por %p61, %p62
      %p64 = scmp.ne.s32.totalorder %s52, %s53
      %p65 = scmp.eq.s32.totalorder %s22, 1
      %p66 = por %p64, %p65
      %p68 = scmp.ne.s32.totalorder %s53, %s67
      %p69 = scmp.eq.s32.totalorder %s22, 0
      %p70 = por %p68, %p69
      %s72 = sadd.s32 %s71, 1
      %p75 = scmp.eq.s32.totalorder %s16, 1
      %p76 = scmp.ne.s32.totalorder %s71, %s73
      %p77 = scmp.eq.s32.totalorder %s16, 0
      %p78 = por %p76, %p77
      %p79 = scmp.ne.s32.totalorder %s71, %s73
      %p80 = scmp.eq.s32.totalorder %s21, 1
      %p81 = por %p79, %p80
      %p82 = scmp.ne.s32.totalorder %s73, %s74
      %p83 = scmp.eq.s32.totalorder %s21, 0
      %p84 = por %p82, %p83
      %p85 = scmp.ne.s32.totalorder %s73, %s74
      %p86 = scmp.eq.s32.totalorder %s22, 1
      %p87 = por %p85, %p86
      %p89 = scmp.ne.s32.totalorder %s74, %s88
      %p90 = scmp.eq.s32.totalorder %s22, 0
      %p91 = por %p89, %p90
      %s93 = sadd.s32 %s92, 1
      %p96 = scmp.eq.s32.totalorder %s16, 1
      %p97 = scmp.ne.s32.totalorder %s92, %s94
      %p98 = scmp.eq.s32.totalorder %s16, 0
      %p99 = por %p97, %p98
      %p100 = scmp.ne.s32.totalorder %s92, %s94
      %p101 = scmp.eq.s32.totalorder %s21, 1
      %p102 = por %p100, %p101
      %p103 = scmp.ne.s32.totalorder %s94, %s95
      %p104 = scmp.eq.s32.totalorder %s21, 0
      %p105 = por %p103, %p104
      %p106 = scmp.ne.s32.totalorder %s94, %s95
      %p107 = scmp.eq.s32.totalorder %s22, 1
      %p108 = por %p106, %p107
      %p110 = scmp.ne.s32.totalorder %s95, %s109
      %p111 = scmp.eq.s32.totalorder %s22, 0
      %p112 = por %p110, %p111
      %s114 = sadd.s32 %s113, 1
      %p117 = scmp.eq.s32.totalorder %s16, 1
      %p118 = scmp.ne.s32.totalorder %s113, %s115
      %p119 = scmp.eq.s32.totalorder %s16, 0
      %p120 = por %p118, %p119
      %p121 = scmp.ne.s32.totalorder %s113, %s115
      %p122 = scmp.eq.s32.totalorder %s21, 1
      %p123 = por %p121, %p122
      %p124 = scmp.ne.s32.totalorder %s115, %s116
      %p125 = scmp.eq.s32.totalorder %s21, 0
      %p126 = por %p124, %p125
      %p127 = scmp.ne.s32.totalorder %s115, %s116
      %p128 = scmp.eq.s32.totalorder %s22, 1
      %p129 = por %p127, %p128
      %p131 = scmp.ne.s32.totalorder %s116, %s130
      %p132 = scmp.eq.s32.totalorder %s22, 0
      %p133 = por %p131, %p132
      %s135 = sadd.s32 %s134, 1
      %p138 = scmp.eq.s32.totalorder %s16, 1
      %p139 = scmp.ne.s32.totalorder %s134, %s136
      %p140 = scmp.eq.s32.totalorder %s16, 0
      %p141 = por %p139, %p140
      %p142 = scmp.ne.s32.totalorder %s134, %s136
      %p143 = scmp.eq.s32.totalorder %s21, 1
      %p144 = por %p142, %p143
      %p145 = scmp.ne.s32.totalorder %s136, %s137
      %p146 = scmp.eq.s32.totalorder %s21, 0
      %p147 = por %p145, %p146
      %p148 = scmp.ne.s32.totalorder %s136, %s137
      %p149 = scmp.eq.s32.totalorder %s22, 1
      %p150 = por %p148, %p149
      %p152 = scmp.ne.s32.totalorder %s137, %s151
      %p153 = scmp.eq.s32.totalorder %s22, 0
      %p154 = por %p152, %p153
      %s156 = sadd.s32 %s155, 1
      %p159 = scmp.eq.s32.totalorder %s16, 1
      %p160 = scmp.ne.s32.totalorder %s155, %s157
      %p161 = scmp.eq.s32.totalorder %s16, 0
      %p162 = por %p160, %p161
      %p163 = scmp.ne.s32.totalorder %s155, %s157
      %p164 = scmp.eq.s32.totalorder %s21, 1
      %p165 = por %p163, %p164
      %p166 = scmp.ne.s32.totalorder %s157, %s158
      %p167 = scmp.eq.s32.totalorder %s21, 0
      %p168 = por %p166, %p167
      %p169 = scmp.ne.s32.totalorder %s157, %s158
      %p170 = scmp.eq.s32.totalorder %s22, 1
      %p171 = por %p169, %p170
      %p173 = scmp.ne.s32.totalorder %s158, %s172
      %p174 = scmp.eq.s32.totalorder %s22, 0
      %p175 = por %p173, %p174
      %s176 = ssub.s32 %s16, %s23
      %p177 = scmp.eq.s32.totalorder %s176, 0
      %s179 = sadd.s32 %s178, 1
      %s180 = scalar_select %p177, %s178, %s179
      %p183 = pneg %p177
      %p184 = scmp.eq.s32.totalorder %s16, 1
      %p185 = por %p183, %p184
      %p186 = scmp.ne.s32.totalorder %s178, %s181
      %p187 = scmp.eq.s32.totalorder %s16, 0
      %p188 = por %p186, %p187
      %p189 = scmp.ne.s32.totalorder %s178, %s181
      %p190 = scmp.eq.s32.totalorder %s21, 1
      %p191 = por %p189, %p190
      %p192 = scmp.ne.s32.totalorder %s181, %s182
      %p193 = scmp.eq.s32.totalorder %s21, 0
      %p194 = por %p192, %p193
      %p195 = scmp.ne.s32.totalorder %s181, %s182
      %p196 = scmp.eq.s32.totalorder %s22, 1
      %p197 = por %p195, %p196
      %p199 = scmp.ne.s32.totalorder %s182, %s198
      %p200 = scmp.eq.s32.totalorder %s22, 0
      %p201 = por %p199, %p200
      %p202 = scmp.le.s32.totalorder 1, %s16
      %p203 = scmp.lt.s32.totalorder %s16, 3
      %p204 = pnand %p202, %p203
      %p205 = pneg %p204
      // Predicated region
      $region9: #{tpu_custom_call.1} parent=5 // pred_check
        _
      $region10: #{tpu_custom_call.1} parent=5 // pred_check_branch
        %207 = sbr.rel (%p204) target = $region12
      $region11: #{tpu_custom_call.1} parent=5 // pred_region
        %s208 = ssub.s32 %s16, 1
        // Predicated region
        $region13: #{tpu_custom_call.1} parent=11 // pred_check
          %p209 = pneg %p63
        $region14: #{tpu_custom_call.1} parent=11 // pred_check_branch
          %211 = sbr.rel (%p209) target = $region16
        $region15: #{tpu_custom_call.1} parent=11 // pred_region
          _
        $region16: #{tpu_custom_call.1} parent=11 // pred_fallthru
          _
        // Predicated region
        $region17: #{tpu_custom_call.1} parent=11 // pred_check
          %p212 = pneg %p84
        $region18: #{tpu_custom_call.1} parent=11 // pred_check_branch
          %214 = sbr.rel (%p212) target = $region20
        $region19: #{tpu_custom_call.1} parent=11 // pred_region
          _
        $region20: #{tpu_custom_call.1} parent=11 // pred_fallthru
          _
        // Predicated region
        $region21: #{tpu_custom_call.1} parent=11 // pred_check
          %p215 = pneg %p105
        $region22: #{tpu_custom_call.1} parent=11 // pred_check_branch
          %217 = sbr.rel (%p215) target = $region24
        $region23: #{tpu_custom_call.1} parent=11 // pred_region
          _
        $region24: #{tpu_custom_call.1} parent=11 // pred_fallthru
          _
        // Predicated region
        $region25: #{tpu_custom_call.1} parent=11 // pred_check
          %p218 = pneg %p126
        $region26: #{tpu_custom_call.1} parent=11 // pred_check_branch
          %220 = sbr.rel (%p218) target = $region28
        $region27: #{tpu_custom_call.1} parent=11 // pred_region
          _
        $region28: #{tpu_custom_call.1} parent=11 // pred_fallthru
          _
        // Predicated region
        $region29: #{tpu_custom_call.1} parent=11 // pred_check
          %p221 = pneg %p147
        $region30: #{tpu_custom_call.1} parent=11 // pred_check_branch
          %223 = sbr.rel (%p221) target = $region32
        $region31: #{tpu_custom_call.1} parent=11 // pred_region
          _
        $region32: #{tpu_custom_call.1} parent=11 // pred_fallthru
          _
        // Predicated region
        $region33: #{tpu_custom_call.1} parent=11 // pred_check
          %p224 = pneg %p168
        $region34: #{tpu_custom_call.1} parent=11 // pred_check_branch
          %226 = sbr.rel (%p224) target = $region36
        $region35: #{tpu_custom_call.1} parent=11 // pred_region
          _
        $region36: #{tpu_custom_call.1} parent=11 // pred_fallthru
          _
      $region12: #{tpu_custom_call.1} parent=5 // pred_fallthru
        _
      %p227 = scmp.lt.s32.totalorder %s16, 2
      // Predicated region
      $region37: #{tpu_custom_call.1} parent=5 // pred_check
        %p228 = pneg %p227
      $region38: #{tpu_custom_call.1} parent=5 // pred_check_branch
        %230 = sbr.rel (%p228) target = $region40
      $region39: #{tpu_custom_call.1} parent=5 // pred_region
        // Predicated region
        $region41: #{tpu_custom_call.1} parent=39 // pred_check
          %p231 = pneg %p36
        $region42: #{tpu_custom_call.1} parent=39 // pred_check_branch
          %233 = sbr.rel (%p231) target = $region44
        $region43: #{tpu_custom_call.1} parent=39 // pred_region
          %p234 = scmp.lt.s32.totalorder %s16, 1
          %s235 = scalar_select %p234, %s16, 1
          %s236 = smul.addr %s235, 128
          %s237 = smul.addr %s236, 2
          %s238 = scalar_lea.vmem %s0, %s237
        $region44: #{tpu_custom_call.1} parent=39 // pred_fallthru
          _
      $region40: #{tpu_custom_call.1} parent=5 // pred_fallthru
        _
      %p239 = scmp.le.s32.totalorder 1, %s16
      %p240 = scmp.lt.s32.totalorder %s16, 3
      %p241 = pnand %p239, %p240
      %p242 = pneg %p241
      // Predicated region
      $region45: #{tpu_custom_call.1} parent=5 // pred_check
        _
      $region46: #{tpu_custom_call.1} parent=5 // pred_check_branch
        %244 = sbr.rel (%p241) target = $region48
      $region47: #{tpu_custom_call.1} parent=5 // pred_region
        %s245 = ssub.s32 %s16, 1
        %p246 = scmp.lt.s32.totalorder %s21, 1
        %s247 = scalar_select %p246, %s21, 1
        %s248 = smul.addr %s247, 128
        %s249 = smul.addr %s248, 2
        %s250 = scalar_lea.vmem %s0, %s249
        %p251 = pneg %p42
        %p252 = pneg %p39
        %p253 = pneg %p63
        %p254 = pneg %p60
        %p255 = pneg %p84
        %p256 = pneg %p81
        %p257 = pneg %p105
        %p258 = pneg %p102
        %p259 = pneg %p126
        %p260 = pneg %p123
        %p261 = pneg %p147
        %p262 = pneg %p144
        %p263 = pneg %p168
        %p264 = pneg %p165
        %p265 = pneg %p194
        %p266 = pneg %p191
        %s267 = sand.u32 %s181, 1
        %s268 = scalar_lea.sflag [#allocation3], %s267
        %s269 = sand.u32 %s181, 1
        %s270 = smul.addr %s269, 64
        %s271 = scalar_lea.vmem [#allocation2], %s270
        %p272 = scmp.lt.s32.totalorder %s21, 1
        %s273 = scalar_select %p272, %s21, 1
        %s274 = smul.addr %s273, 128
        %s275 = smul.addr %s274, 2
        %s276 = scalar_lea.vmem %s0, %s275
        %s277 = smul.u32 8, %s21
        %v278 = vld [vmem:[%s276] sm:$0x3]
        %v279 = vld [vmem:[%s276 + $0x2] sm:$0x3]
        %v280 = vld [vmem:[%s276 + $0x4] sm:$0x3]
        %v281 = vld [vmem:[%s276 + $0x6] sm:$0x3]
        %v282 = vld [vmem:[%s276 + $0x8] sm:$0x3]
        %v283 = vld [vmem:[%s276 + $0xa] sm:$0x3]
        %v284 = vld [vmem:[%s276 + $0xc] sm:$0x3]
        %v285 = vld [vmem:[%s276 + $0xe] sm:$0x3]
        %v286 = vld [vmem:[%s276 + $0x10] sm:$0x3]
        %v287 = vld [vmem:[%s276 + $0x12] sm:$0x3]
        %v288 = vld [vmem:[%s276 + $0x14] sm:$0x3]
        %v289 = vld [vmem:[%s276 + $0x16] sm:$0x3]
        %v290 = vld [vmem:[%s276 + $0x18] sm:$0x3]
        %v291 = vld [vmem:[%s276 + $0x1a] sm:$0x3]
        %v292 = vld [vmem:[%s276 + $0x1c] sm:$0x3]
        %v293 = vld [vmem:[%s276 + $0x1e] sm:$0x3]
        %v294 = vld [vmem:[%s276 + $0x20] sm:$0x3]
        %v295 = vld [vmem:[%s276 + $0x22] sm:$0x3]
        %v296 = vld [vmem:[%s276 + $0x24] sm:$0x3]
        %v297 = vld [vmem:[%s276 + $0x26] sm:$0x3]
        %v298 = vld [vmem:[%s276 + $0x28] sm:$0x3]
        %v299 = vld [vmem:[%s276 + $0x2a] sm:$0x3]
        %v300 = vld [vmem:[%s276 + $0x2c] sm:$0x3]
        %v301 = vld [vmem:[%s276 + $0x2e] sm:$0x3]
        %v302 = vld [vmem:[%s276 + $0x30] sm:$0x3]
        %v303 = vld [vmem:[%s276 + $0x32] sm:$0x3]
        %v304 = vld [vmem:[%s276 + $0x34] sm:$0x3]
        %v305 = vld [vmem:[%s276 + $0x36] sm:$0x3]
        %v306 = vld [vmem:[%s276 + $0x38] sm:$0x3]
        %v307 = vld [vmem:[%s276 + $0x3a] sm:$0x3]
        %v308 = vld [vmem:[%s276 + $0x3c] sm:$0x3]
        %v309 = vld [vmem:[%s276 + $0x3e] sm:$0x3]
        %v310 = vld [vmem:[%s276 + $0x40] sm:$0x3]
        %v311 = vld [vmem:[%s276 + $0x42] sm:$0x3]
        %v312 = vld [vmem:[%s276 + $0x44] sm:$0x3]
        %v313 = vld [vmem:[%s276 + $0x46] sm:$0x3]
        %v314 = vld [vmem:[%s276 + $0x48] sm:$0x3]
        %v315 = vld [vmem:[%s276 + $0x4a] sm:$0x3]
        %v316 = vld [vmem:[%s276 + $0x4c] sm:$0x3]
        %v317 = vld [vmem:[%s276 + $0x4e] sm:$0x3]
        %v318 = vld [vmem:[%s276 + $0x50] sm:$0x3]
        %v319 = vld [vmem:[%s276 + $0x52] sm:$0x3]
        %v320 = vld [vmem:[%s276 + $0x54] sm:$0x3]
        %v321 = vld [vmem:[%s276 + $0x56] sm:$0x3]
        %v322 = vld [vmem:[%s276 + $0x58] sm:$0x3]
        %v323 = vld [vmem:[%s276 + $0x5a] sm:$0x3]
        %v324 = vld [vmem:[%s276 + $0x5c] sm:$0x3]
        %v325 = vld [vmem:[%s276 + $0x5e] sm:$0x3]
        %v326 = vld [vmem:[%s276 + $0x60] sm:$0x3]
        %v327 = vld [vmem:[%s276 + $0x62] sm:$0x3]
        %v328 = vld [vmem:[%s276 + $0x64] sm:$0x3]
        %v329 = vld [vmem:[%s276 + $0x66] sm:$0x3]
        %v330 = vld [vmem:[%s276 + $0x68] sm:$0x3]
        %v331 = vld [vmem:[%s276 + $0x6a] sm:$0x3]
        %v332 = vld [vmem:[%s276 + $0x6c] sm:$0x3]
        %v333 = vld [vmem:[%s276 + $0x6e] sm:$0x3]
        %v334 = vld [vmem:[%s276 + $0x70] sm:$0x3]
        %v335 = vld [vmem:[%s276 + $0x72] sm:$0x3]
        %v336 = vld [vmem:[%s276 + $0x74] sm:$0x3]
        %v337 = vld [vmem:[%s276 + $0x76] sm:$0x3]
        %v338 = vld [vmem:[%s276 + $0x78] sm:$0x3]
        %v339 = vld [vmem:[%s276 + $0x7a] sm:$0x3]
        %v340 = vld [vmem:[%s276 + $0x7c] sm:$0x3]
        %v341 = vld [vmem:[%s276 + $0x7e] sm:$0x3]
        %v342 = vld [vmem:[%s276 + $0x80] sm:$0x3]
        %v343 = vld [vmem:[%s276 + $0x82] sm:$0x3]
        %v344 = vld [vmem:[%s276 + $0x84] sm:$0x3]
        %v345 = vld [vmem:[%s276 + $0x86] sm:$0x3]
        %v346 = vld [vmem:[%s276 + $0x88] sm:$0x3]
        %v347 = vld [vmem:[%s276 + $0x8a] sm:$0x3]
        %v348 = vld [vmem:[%s276 + $0x8c] sm:$0x3]
        %v349 = vld [vmem:[%s276 + $0x8e] sm:$0x3]
        %v350 = vld [vmem:[%s276 + $0x90] sm:$0x3]
        %v351 = vld [vmem:[%s276 + $0x92] sm:$0x3]
        %v352 = vld [vmem:[%s276 + $0x94] sm:$0x3]
        %v353 = vld [vmem:[%s276 + $0x96] sm:$0x3]
        %v354 = vld [vmem:[%s276 + $0x98] sm:$0x3]
        %v355 = vld [vmem:[%s276 + $0x9a] sm:$0x3]
        %v356 = vld [vmem:[%s276 + $0x9c] sm:$0x3]
        %v357 = vld [vmem:[%s276 + $0x9e] sm:$0x3]
        %v358 = vld [vmem:[%s276 + $0xa0] sm:$0x3]
        %v359 = vld [vmem:[%s276 + $0xa2] sm:$0x3]
        %v360 = vld [vmem:[%s276 + $0xa4] sm:$0x3]
        %v361 = vld [vmem:[%s276 + $0xa6] sm:$0x3]
        %v362 = vld [vmem:[%s276 + $0xa8] sm:$0x3]
        %v363 = vld [vmem:[%s276 + $0xaa] sm:$0x3]
        %v364 = vld [vmem:[%s276 + $0xac] sm:$0x3]
        %v365 = vld [vmem:[%s276 + $0xae] sm:$0x3]
        %v366 = vld [vmem:[%s276 + $0xb0] sm:$0x3]
        %v367 = vld [vmem:[%s276 + $0xb2] sm:$0x3]
        %v368 = vld [vmem:[%s276 + $0xb4] sm:$0x3]
        %v369 = vld [vmem:[%s276 + $0xb6] sm:$0x3]
        %v370 = vld [vmem:[%s276 + $0xb8] sm:$0x3]
        %v371 = vld [vmem:[%s276 + $0xba] sm:$0x3]
        %v372 = vld [vmem:[%s276 + $0xbc] sm:$0x3]
        %v373 = vld [vmem:[%s276 + $0xbe] sm:$0x3]
        %v374 = vld [vmem:[%s276 + $0xc0] sm:$0x3]
        %v375 = vld [vmem:[%s276 + $0xc2] sm:$0x3]
        %v376 = vld [vmem:[%s276 + $0xc4] sm:$0x3]
        %v377 = vld [vmem:[%s276 + $0xc6] sm:$0x3]
        %v378 = vld [vmem:[%s276 + $0xc8] sm:$0x3]
        %v379 = vld [vmem:[%s276 + $0xca] sm:$0x3]
        %v380 = vld [vmem:[%s276 + $0xcc] sm:$0x3]
        %v381 = vld [vmem:[%s276 + $0xce] sm:$0x3]
        %v382 = vld [vmem:[%s276 + $0xd0] sm:$0x3]
        %v383 = vld [vmem:[%s276 + $0xd2] sm:$0x3]
        %v384 = vld [vmem:[%s276 + $0xd4] sm:$0x3]
        %v385 = vld [vmem:[%s276 + $0xd6] sm:$0x3]
        %v386 = vld [vmem:[%s276 + $0xd8] sm:$0x3]
        %v387 = vld [vmem:[%s276 + $0xda] sm:$0x3]
        %v388 = vld [vmem:[%s276 + $0xdc] sm:$0x3]
        %v389 = vld [vmem:[%s276 + $0xde] sm:$0x3]
        %v390 = vld [vmem:[%s276 + $0xe0] sm:$0x3]
        %v391 = vld [vmem:[%s276 + $0xe2] sm:$0x3]
        %v392 = vld [vmem:[%s276 + $0xe4] sm:$0x3]
        %v393 = vld [vmem:[%s276 + $0xe6] sm:$0x3]
        %v394 = vld [vmem:[%s276 + $0xe8] sm:$0x3]
        %v395 = vld [vmem:[%s276 + $0xea] sm:$0x3]
        %v396 = vld [vmem:[%s276 + $0xec] sm:$0x3]
        %v397 = vld [vmem:[%s276 + $0xee] sm:$0x3]
        %v398 = vld [vmem:[%s276 + $0xf0] sm:$0x3]
        %v399 = vld [vmem:[%s276 + $0xf2] sm:$0x3]
        %v400 = vld [vmem:[%s276 + $0xf4] sm:$0x3]
        %v401 = vld [vmem:[%s276 + $0xf6] sm:$0x3]
        %v402 = vld [vmem:[%s276 + $0xf8] sm:$0x3]
        %v403 = vld [vmem:[%s276 + $0xfa] sm:$0x3]
        %v404 = vld [vmem:[%s276 + $0xfc] sm:$0x3]
        %v405 = vld [vmem:[%s276 + $0xfe] sm:$0x3]
        %v470 = vrot.slane %v278, 1
        %v471 = vrot.slane %v279, 1
        %v472 = vrot.slane %v280, 1
        %v473 = vrot.slane %v281, 1
        %v474 = vrot.slane %v282, 1
        %v475 = vrot.slane %v283, 1
        %v476 = vrot.slane %v284, 1
        %v477 = vrot.slane %v285, 1
        %v478 = vrot.slane %v294, 1
        %v479 = vrot.slane %v295, 1
        %v480 = vrot.slane %v296, 1
        %v481 = vrot.slane %v297, 1
        %v482 = vrot.slane %v298, 1
        %v483 = vrot.slane %v299, 1
        %v484 = vrot.slane %v300, 1
        %v485 = vrot.slane %v301, 1
        %v486 = vrot.slane %v310, 1
        %v487 = vrot.slane %v311, 1
        %v488 = vrot.slane %v312, 1
        %v489 = vrot.slane %v313, 1
        %v490 = vrot.slane %v314, 1
        %v491 = vrot.slane %v315, 1
        %v492 = vrot.slane %v316, 1
        %v493 = vrot.slane %v317, 1
        %v494 = vrot.slane %v326, 1
        %v495 = vrot.slane %v327, 1
        %v496 = vrot.slane %v328, 1
        %v497 = vrot.slane %v329, 1
        %v498 = vrot.slane %v330, 1
        %v499 = vrot.slane %v331, 1
        %v500 = vrot.slane %v332, 1
        %v501 = vrot.slane %v333, 1
        %v502 = vrot.slane %v342, 1
        %v503 = vrot.slane %v343, 1
        %v504 = vrot.slane %v344, 1
        %v505 = vrot.slane %v345, 1
        %v506 = vrot.slane %v346, 1
        %v507 = vrot.slane %v347, 1
        %v508 = vrot.slane %v348, 1
        %v509 = vrot.slane %v349, 1
        %v510 = vrot.slane %v358, 1
        %v511 = vrot.slane %v359, 1
        %v512 = vrot.slane %v360, 1
        %v513 = vrot.slane %v361, 1
        %v514 = vrot.slane %v362, 1
        %v515 = vrot.slane %v363, 1
        %v516 = vrot.slane %v364, 1
        %v517 = vrot.slane %v365, 1
        %v518 = vrot.slane %v374, 1
        %v519 = vrot.slane %v375, 1
        %v520 = vrot.slane %v376, 1
        %v521 = vrot.slane %v377, 1
        %v522 = vrot.slane %v378, 1
        %v523 = vrot.slane %v379, 1
        %v524 = vrot.slane %v380, 1
        %v525 = vrot.slane %v381, 1
        %v526 = vrot.slane %v390, 1
        %v527 = vrot.slane %v391, 1
        %v528 = vrot.slane %v392, 1
        %v529 = vrot.slane %v393, 1
        %v530 = vrot.slane %v394, 1
        %v531 = vrot.slane %v395, 1
        %v532 = vrot.slane %v396, 1
        %v533 = vrot.slane %v397, 1
        %v598 = vmax.f32 %v278, %v470
        %v599 = vmax.f32 %v279, %v471
        %v600 = vmax.f32 %v280, %v472
        %v601 = vmax.f32 %v281, %v473
        %v602 = vmax.f32 %v282, %v474
        %v603 = vmax.f32 %v283, %v475
        %v604 = vmax.f32 %v284, %v476
        %v605 = vmax.f32 %v285, %v477
        %v606 = vmax.f32 %v294, %v478
        %v607 = vmax.f32 %v295, %v479
        %v608 = vmax.f32 %v296, %v480
        %v609 = vmax.f32 %v297, %v481
        %v610 = vmax.f32 %v298, %v482
        %v611 = vmax.f32 %v299, %v483
        %v612 = vmax.f32 %v300, %v484
        %v613 = vmax.f32 %v301, %v485
        %v614 = vmax.f32 %v310, %v486
        %v615 = vmax.f32 %v311, %v487
        %v616 = vmax.f32 %v312, %v488
        %v617 = vmax.f32 %v313, %v489
        %v618 = vmax.f32 %v314, %v490
        %v619 = vmax.f32 %v315, %v491
        %v620 = vmax.f32 %v316, %v492
        %v621 = vmax.f32 %v317, %v493
        %v622 = vmax.f32 %v326, %v494
        %v623 = vmax.f32 %v327, %v495
        %v624 = vmax.f32 %v328, %v496
        %v625 = vmax.f32 %v329, %v497
        %v626 = vmax.f32 %v330, %v498
        %v627 = vmax.f32 %v331, %v499
        %v628 = vmax.f32 %v332, %v500
        %v629 = vmax.f32 %v333, %v501
        %v630 = vmax.f32 %v342, %v502
        %v631 = vmax.f32 %v343, %v503
        %v632 = vmax.f32 %v344, %v504
        %v633 = vmax.f32 %v345, %v505
        %v634 = vmax.f32 %v346, %v506
        %v635 = vmax.f32 %v347, %v507
        %v636 = vmax.f32 %v348, %v508
        %v637 = vmax.f32 %v349, %v509
        %v638 = vmax.f32 %v358, %v510
        %v639 = vmax.f32 %v359, %v511
        %v640 = vmax.f32 %v360, %v512
        %v641 = vmax.f32 %v361, %v513
        %v642 = vmax.f32 %v362, %v514
        %v643 = vmax.f32 %v363, %v515
        %v644 = vmax.f32 %v364, %v516
        %v645 = vmax.f32 %v365, %v517
        %v646 = vmax.f32 %v374, %v518
        %v647 = vmax.f32 %v375, %v519
        %v648 = vmax.f32 %v376, %v520
        %v649 = vmax.f32 %v377, %v521
        %v650 = vmax.f32 %v378, %v522
        %v651 = vmax.f32 %v379, %v523
        %v652 = vmax.f32 %v380, %v524
        %v653 = vmax.f32 %v381, %v525
        %v654 = vmax.f32 %v390, %v526
        %v655 = vmax.f32 %v391, %v527
        %v656 = vmax.f32 %v392, %v528
        %v657 = vmax.f32 %v393, %v529
        %v658 = vmax.f32 %v394, %v530
        %v659 = vmax.f32 %v395, %v531
        %v660 = vmax.f32 %v396, %v532
        %v661 = vmax.f32 %v397, %v533
        %v726 = vrot.slane %v286, 1
        %v727 = vrot.slane %v287, 1
        %v728 = vrot.slane %v288, 1
        %v729 = vrot.slane %v289, 1
        %v730 = vrot.slane %v290, 1
        %v731 = vrot.slane %v291, 1
        %v732 = vrot.slane %v292, 1
        %v733 = vrot.slane %v293, 1
        %v734 = vrot.slane %v302, 1
        %v735 = vrot.slane %v303, 1
        %v736 = vrot.slane %v304, 1
        %v737 = vrot.slane %v305, 1
        %v738 = vrot.slane %v306, 1
        %v739 = vrot.slane %v307, 1
        %v740 = vrot.slane %v308, 1
        %v741 = vrot.slane %v309, 1
        %v742 = vrot.slane %v318, 1
        %v743 = vrot.slane %v319, 1
        %v744 = vrot.slane %v320, 1
        %v745 = vrot.slane %v321, 1
        %v746 = vrot.slane %v322, 1
        %v747 = vrot.slane %v323, 1
        %v748 = vrot.slane %v324, 1
        %v749 = vrot.slane %v325, 1
        %v750 = vrot.slane %v334, 1
        %v751 = vrot.slane %v335, 1
        %v752 = vrot.slane %v336, 1
        %v753 = vrot.slane %v337, 1
        %v754 = vrot.slane %v338, 1
        %v755 = vrot.slane %v339, 1
        %v756 = vrot.slane %v340, 1
        %v757 = vrot.slane %v341, 1
        %v758 = vrot.slane %v350, 1
        %v759 = vrot.slane %v351, 1
        %v760 = vrot.slane %v352, 1
        %v761 = vrot.slane %v353, 1
        %v762 = vrot.slane %v354, 1
        %v763 = vrot.slane %v355, 1
        %v764 = vrot.slane %v356, 1
        %v765 = vrot.slane %v357, 1
        %v766 = vrot.slane %v366, 1
        %v767 = vrot.slane %v367, 1
        %v768 = vrot.slane %v368, 1
        %v769 = vrot.slane %v369, 1
        %v770 = vrot.slane %v370, 1
        %v771 = vrot.slane %v371, 1
        %v772 = vrot.slane %v372, 1
        %v773 = vrot.slane %v373, 1
        %v774 = vrot.slane %v382, 1
        %v775 = vrot.slane %v383, 1
        %v776 = vrot.slane %v384, 1
        %v777 = vrot.slane %v385, 1
        %v778 = vrot.slane %v386, 1
        %v779 = vrot.slane %v387, 1
        %v780 = vrot.slane %v388, 1
        %v781 = vrot.slane %v389, 1
        %v782 = vrot.slane %v398, 1
        %v783 = vrot.slane %v399, 1
        %v784 = vrot.slane %v400, 1
        %v785 = vrot.slane %v401, 1
        %v786 = vrot.slane %v402, 1
        %v787 = vrot.slane %v403, 1
        %v788 = vrot.slane %v404, 1
        %v789 = vrot.slane %v405, 1
        %v854 = vmax.f32 %v286, %v726
        %v855 = vmax.f32 %v287, %v727
        %v856 = vmax.f32 %v288, %v728
        %v857 = vmax.f32 %v289, %v729
        %v858 = vmax.f32 %v290, %v730
        %v859 = vmax.f32 %v291, %v731
        %v860 = vmax.f32 %v292, %v732
        %v861 = vmax.f32 %v293, %v733
        %v862 = vmax.f32 %v302, %v734
        %v863 = vmax.f32 %v303, %v735
        %v864 = vmax.f32 %v304, %v736
        %v865 = vmax.f32 %v305, %v737
        %v866 = vmax.f32 %v306, %v738
        %v867 = vmax.f32 %v307, %v739
        %v868 = vmax.f32 %v308, %v740
        %v869 = vmax.f32 %v309, %v741
        %v870 = vmax.f32 %v318, %v742
        %v871 = vmax.f32 %v319, %v743
        %v872 = vmax.f32 %v320, %v744
        %v873 = vmax.f32 %v321, %v745
        %v874 = vmax.f32 %v322, %v746
        %v875 = vmax.f32 %v323, %v747
        %v876 = vmax.f32 %v324, %v748
        %v877 = vmax.f32 %v325, %v749
        %v878 = vmax.f32 %v334, %v750
        %v879 = vmax.f32 %v335, %v751
        %v880 = vmax.f32 %v336, %v752
        %v881 = vmax.f32 %v337, %v753
        %v882 = vmax.f32 %v338, %v754
        %v883 = vmax.f32 %v339, %v755
        %v884 = vmax.f32 %v340, %v756
        %v885 = vmax.f32 %v341, %v757
        %v886 = vmax.f32 %v350, %v758
        %v887 = vmax.f32 %v351, %v759
        %v888 = vmax.f32 %v352, %v760
        %v889 = vmax.f32 %v353, %v761
        %v890 = vmax.f32 %v354, %v762
        %v891 = vmax.f32 %v355, %v763
        %v892 = vmax.f32 %v356, %v764
        %v893 = vmax.f32 %v357, %v765
        %v894 = vmax.f32 %v366, %v766
        %v895 = vmax.f32 %v367, %v767
        %v896 = vmax.f32 %v368, %v768
        %v897 = vmax.f32 %v369, %v769
        %v898 = vmax.f32 %v370, %v770
        %v899 = vmax.f32 %v371, %v771
        %v900 = vmax.f32 %v372, %v772
        %v901 = vmax.f32 %v373, %v773
        %v902 = vmax.f32 %v382, %v774
        %v903 = vmax.f32 %v383, %v775
        %v904 = vmax.f32 %v384, %v776
        %v905 = vmax.f32 %v385, %v777
        %v906 = vmax.f32 %v386, %v778
        %v907 = vmax.f32 %v387, %v779
        %v908 = vmax.f32 %v388, %v780
        %v909 = vmax.f32 %v389, %v781
        %v910 = vmax.f32 %v398, %v782
        %v911 = vmax.f32 %v399, %v783
        %v912 = vmax.f32 %v400, %v784
        %v913 = vmax.f32 %v401, %v785
        %v914 = vmax.f32 %v402, %v786
        %v915 = vmax.f32 %v403, %v787
        %v916 = vmax.f32 %v404, %v788
        %v917 = vmax.f32 %v405, %v789
        %v918 = vmax.f32 %v598, %v854
        %v919 = vmax.f32 %v599, %v855
        %v920 = vmax.f32 %v600, %v856
        %v921 = vmax.f32 %v601, %v857
        %v922 = vmax.f32 %v602, %v858
        %v923 = vmax.f32 %v603, %v859
        %v924 = vmax.f32 %v604, %v860
        %v925 = vmax.f32 %v605, %v861
        %v926 = vmax.f32 %v606, %v862
        %v927 = vmax.f32 %v607, %v863
        %v928 = vmax.f32 %v608, %v864
        %v929 = vmax.f32 %v609, %v865
        %v930 = vmax.f32 %v610, %v866
        %v931 = vmax.f32 %v611, %v867
        %v932 = vmax.f32 %v612, %v868
        %v933 = vmax.f32 %v613, %v869
        %v934 = vmax.f32 %v614, %v870
        %v935 = vmax.f32 %v615, %v871
        %v936 = vmax.f32 %v616, %v872
        %v937 = vmax.f32 %v617, %v873
        %v938 = vmax.f32 %v618, %v874
        %v939 = vmax.f32 %v619, %v875
        %v940 = vmax.f32 %v620, %v876
        %v941 = vmax.f32 %v621, %v877
        %v942 = vmax.f32 %v622, %v878
        %v943 = vmax.f32 %v623, %v879
        %v944 = vmax.f32 %v624, %v880
        %v945 = vmax.f32 %v625, %v881
        %v946 = vmax.f32 %v626, %v882
        %v947 = vmax.f32 %v627, %v883
        %v948 = vmax.f32 %v628, %v884
        %v949 = vmax.f32 %v629, %v885
        %v950 = vmax.f32 %v630, %v886
        %v951 = vmax.f32 %v631, %v887
        %v952 = vmax.f32 %v632, %v888
        %v953 = vmax.f32 %v633, %v889
        %v954 = vmax.f32 %v634, %v890
        %v955 = vmax.f32 %v635, %v891
        %v956 = vmax.f32 %v636, %v892
        %v957 = vmax.f32 %v637, %v893
        %v958 = vmax.f32 %v638, %v894
        %v959 = vmax.f32 %v639, %v895
        %v960 = vmax.f32 %v640, %v896
        %v961 = vmax.f32 %v641, %v897
        %v962 = vmax.f32 %v642, %v898
        %v963 = vmax.f32 %v643, %v899
        %v964 = vmax.f32 %v644, %v900
        %v965 = vmax.f32 %v645, %v901
        %v966 = vmax.f32 %v646, %v902
        %v967 = vmax.f32 %v647, %v903
        %v968 = vmax.f32 %v648, %v904
        %v969 = vmax.f32 %v649, %v905
        %v970 = vmax.f32 %v650, %v906
        %v971 = vmax.f32 %v651, %v907
        %v972 = vmax.f32 %v652, %v908
        %v973 = vmax.f32 %v653, %v909
        %v974 = vmax.f32 %v654, %v910
        %v975 = vmax.f32 %v655, %v911
        %v976 = vmax.f32 %v656, %v912
        %v977 = vmax.f32 %v657, %v913
        %v978 = vmax.f32 %v658, %v914
        %v979 = vmax.f32 %v659, %v915
        %v980 = vmax.f32 %v660, %v916
        %v981 = vmax.f32 %v661, %v917
        %v1038 = vrot.slane %v919, 7
        %vm1039 = vcmask 1041409
        %v1040 = vsel %vm1039, %v1038, %v918
        %v1041 = vrot.slane %v920, 6
        %vm1042 = vcmask 1042434
        %v1043 = vsel %vm1042, %v1041, %v1040
        %v1044 = vrot.slane %v921, 5
        %vm1045 = vcmask 1043459
        %v1046 = vsel %vm1045, %v1044, %v1043
        %v1047 = vrot.slane %v922, 4
        %vm1048 = vcmask 1044484
        %v1049 = vsel %vm1048, %v1047, %v1046
        %v1050 = vrot.slane %v923, 3
        %vm1051 = vcmask 1045509
        %v1052 = vsel %vm1051, %v1050, %v1049
        %v1053 = vrot.slane %v924, 2
        %vm1054 = vcmask 1046534
        %v1055 = vsel %vm1054, %v1053, %v1052
        %v1056 = vrot.slane %v925, 1
        %vm1057 = vcmask 1047559
        %v1058 = vsel %vm1057, %v1056, %v1055
        %v1059 = vrot.slane %v927, 7
        %v1060 = vsel %vm1039, %v1059, %v926
        %v1061 = vrot.slane %v928, 6
        %v1062 = vsel %vm1042, %v1061, %v1060
        %v1063 = vrot.slane %v929, 5
        %v1064 = vsel %vm1045, %v1063, %v1062
        %v1065 = vrot.slane %v930, 4
        %v1066 = vsel %vm1048, %v1065, %v1064
        %v1067 = vrot.slane %v931, 3
        %v1068 = vsel %vm1051, %v1067, %v1066
        %v1069 = vrot.slane %v932, 2
        %v1070 = vsel %vm1054, %v1069, %v1068
        %v1071 = vrot.slane %v933, 1
        %v1072 = vsel %vm1057, %v1071, %v1070
        %v1073 = vrot.slane %v935, 7
        %v1074 = vsel %vm1039, %v1073, %v934
        %v1075 = vrot.slane %v936, 6
        %v1076 = vsel %vm1042, %v1075, %v1074
        %v1077 = vrot.slane %v937, 5
        %v1078 = vsel %vm1045, %v1077, %v1076
        %v1079 = vrot.slane %v938, 4
        %v1080 = vsel %vm1048, %v1079, %v1078
        %v1081 = vrot.slane %v939, 3
        %v1082 = vsel %vm1051, %v1081, %v1080
        %v1083 = vrot.slane %v940, 2
        %v1084 = vsel %vm1054, %v1083, %v1082
        %v1085 = vrot.slane %v941, 1
        %v1086 = vsel %vm1057, %v1085, %v1084
        %v1087 = vrot.slane %v943, 7
        %v1088 = vsel %vm1039, %v1087, %v942
        %v1089 = vrot.slane %v944, 6
        %v1090 = vsel %vm1042, %v1089, %v1088
        %v1091 = vrot.slane %v945, 5
        %v1092 = vsel %vm1045, %v1091, %v1090
        %v1093 = vrot.slane %v946, 4
        %v1094 = vsel %vm1048, %v1093, %v1092
        %v1095 = vrot.slane %v947, 3
        %v1096 = vsel %vm1051, %v1095, %v1094
        %v1097 = vrot.slane %v948, 2
        %v1098 = vsel %vm1054, %v1097, %v1096
        %v1099 = vrot.slane %v949, 1
        %v1100 = vsel %vm1057, %v1099, %v1098
        %v1101 = vrot.slane %v951, 7
        %v1102 = vsel %vm1039, %v1101, %v950
        %v1103 = vrot.slane %v952, 6
        %v1104 = vsel %vm1042, %v1103, %v1102
        %v1105 = vrot.slane %v953, 5
        %v1106 = vsel %vm1045, %v1105, %v1104
        %v1107 = vrot.slane %v954, 4
        %v1108 = vsel %vm1048, %v1107, %v1106
        %v1109 = vrot.slane %v955, 3
        %v1110 = vsel %vm1051, %v1109, %v1108
        %v1111 = vrot.slane %v956, 2
        %v1112 = vsel %vm1054, %v1111, %v1110
        %v1113 = vrot.slane %v957, 1
        %v1114 = vsel %vm1057, %v1113, %v1112
        %v1115 = vrot.slane %v959, 7
        %v1116 = vsel %vm1039, %v1115, %v958
        %v1117 = vrot.slane %v960, 6
        %v1118 = vsel %vm1042, %v1117, %v1116
        %v1119 = vrot.slane %v961, 5
        %v1120 = vsel %vm1045, %v1119, %v1118
        %v1121 = vrot.slane %v962, 4
        %v1122 = vsel %vm1048, %v1121, %v1120
        %v1123 = vrot.slane %v963, 3
        %v1124 = vsel %vm1051, %v1123, %v1122
        %v1125 = vrot.slane %v964, 2
        %v1126 = vsel %vm1054, %v1125, %v1124
        %v1127 = vrot.slane %v965, 1
        %v1128 = vsel %vm1057, %v1127, %v1126
        %v1129 = vrot.slane %v967, 7
        %v1130 = vsel %vm1039, %v1129, %v966
        %v1131 = vrot.slane %v968, 6
        %v1132 = vsel %vm1042, %v1131, %v1130
        %v1133 = vrot.slane %v969, 5
        %v1134 = vsel %vm1045, %v1133, %v1132
        %v1135 = vrot.slane %v970, 4
        %v1136 = vsel %vm1048, %v1135, %v1134
        %v1137 = vrot.slane %v971, 3
        %v1138 = vsel %vm1051, %v1137, %v1136
        %v1139 = vrot.slane %v972, 2
        %v1140 = vsel %vm1054, %v1139, %v1138
        %v1141 = vrot.slane %v973, 1
        %v1142 = vsel %vm1057, %v1141, %v1140
        %v1144 = vrot.slane 0.0, 7
        %v1145 = vrot.slane %v1058, 7
        %v1146 = vrot.slane %v1072, 7
        %v1147 = vrot.slane %v1086, 7
        %v1148 = vrot.slane %v1100, 7
        %v1149 = vrot.slane %v1114, 7
        %v1150 = vrot.slane %v1128, 7
        %v1151 = vrot.slane %v1142, 7
        %vm1160 = vcmask 1040384
        %v1161 = vsel %vm1160, 0.0, %v1144
        %v1162 = vsel %vm1160, 0.0, %v1145
        %v1163 = vsel %vm1160, 0.0, %v1146
        %v1164 = vsel %vm1160, 0.0, %v1147
        %v1165 = vsel %vm1160, 0.0, %v1148
        %v1166 = vsel %vm1160, 0.0, %v1149
        %v1167 = vsel %vm1160, 0.0, %v1150
        %v1168 = vsel %vm1160, 0.0, %v1151
        %v1169 = vld [vmem:[%s1] sm:$0xf]
        %s1170 = scalar_lea.vmem %s1, 4
        %v1171 = vld [vmem:[%s1170] sm:$0xf]
        %vm1172 = vcmask 31744
        %v1173 = vsel %vm1172, 0.0, 0
        %v1175 = vsel %vm1172, %v1058, 0
        %v1177 = vsel %vm1172, %v1072, 0
        %v1179 = vsel %vm1172, %v1086, 0
        %v1181 = vsel %vm1172, %v1100, 0
        %v1183 = vsel %vm1172, %v1114, 0
        %v1185 = vsel %vm1172, %v1128, 0
        %v1187 = vsel %vm1172, %v1142, 0
        %vm1189 = vcmask 1043456
        %v1191 = vsel %vm1189, %v1171, 0
        %1193 = vmatprep.subr.mxu0 0.0
        %1194 = vmatpush1.msra.mxu0 0.0
        %1195 = vmatprep.subr.mxu0 0.0
        %1196 = vmatpush1.msra.mxu0 0.0
        %1197 = vmatprep.subr.mxu0 0.0
        %1198 = vmatpush1.msra.mxu0 0.0
        %1199 = vmatprep.subr.mxu0 0.0
        %1200 = vmatpush1.msra.mxu0 0.0
        %1201 = vmatprep.subr.mxu0 0.0
        %1202 = vmatpush1.msra.mxu0 0.0
        %1203 = vmatprep.subr.mxu0 0.0
        %1204 = vmatpush1.msra.mxu0 0.0
        %1205 = vmatprep.subr.mxu0 0.0
        %1206 = vmatpush1.msra.mxu0 0.0
        %1207 = vmatprep.subr.mxu0 0.0
        %1208 = vmatpush1.msra.mxu0 0.0
        %1209 = vmatprep.subr.mxu0 0.0
        %1210 = vmatpush1.msra.mxu0 0.0
        %1211 = vmatprep.subr.mxu0 0.0
        %1212 = vmatpush1.msra.mxu0 0.0
        %1213 = vmatprep.subr.mxu0 0.0
        %1214 = vmatpush1.msra.mxu0 0.0
        %1215 = vmatprep.subr.mxu0 0.0
        %1216 = vmatpush1.msra.mxu0 0.0
        %1217 = vmatprep.subr.mxu0 0.0
        %1218 = vmatpush1.msra.mxu0 0.0
        %1219 = vmatprep.subr.mxu0 0.0
        %1220 = vmatpush1.msra.mxu0 0.0
        %1221 = vmatprep.subr.mxu0 0.0
        %1222 = vmatpush1.msra.mxu0 0.0
        %1223 = vmatprep.subr.mxu0 0.0
        %1224 = vmatpush1.msra.mxu0 %v1191
        %1225 = vmatprep.subr.mxu0 0.0
        %1226 = vmatpush2.msra.mxu0 0.0
        %1227 = vmatprep.subr.mxu0 0.0
        %1228 = vmatpush2.msra.mxu0 0.0
        %1229 = vmatprep.subr.mxu0 0.0
        %1230 = vmatpush2.msra.mxu0 0.0
        %1231 = vmatprep.subr.mxu0 0.0
        %1232 = vmatpush2.msra.mxu0 0.0
        %1233 = vmatprep.subr.mxu0 0.0
        %1234 = vmatpush2.msra.mxu0 0.0
        %1235 = vmatprep.subr.mxu0 0.0
        %1236 = vmatpush2.msra.mxu0 0.0
        %1237 = vmatprep.subr.mxu0 0.0
        %1238 = vmatpush2.msra.mxu0 0.0
        %1239 = vmatprep.subr.mxu0 0.0
        %1240 = vmatpush2.msra.mxu0 0.0
        %1241 = vmatprep.subr.mxu0 0.0
        %1242 = vmatpush2.msra.mxu0 0.0
        %1243 = vmatprep.subr.mxu0 0.0
        %1244 = vmatpush2.msra.mxu0 0.0
        %1245 = vmatprep.subr.mxu0 0.0
        %1246 = vmatpush2.msra.mxu0 0.0
        %1247 = vmatprep.subr.mxu0 0.0
        %1248 = vmatpush2.msra.mxu0 0.0
        %1249 = vmatprep.subr.mxu0 0.0
        %1250 = vmatpush2.msra.mxu0 0.0
        %1251 = vmatprep.subr.mxu0 0.0
        %1252 = vmatpush2.msra.mxu0 0.0
        %1253 = vmatprep.subr.mxu0 0.0
        %1254 = vmatpush2.msra.mxu0 0.0
        %1255 = vmatprep.subr.mxu0 0.0
        %1256 = vmatpush2.msra.mxu0 0.0
        %1257 = vmatprep.mubr.f32.mxu0 0.0
        %1258 = vmatmul.mubr.f32.gmra.mxu0 %v1173
        %v1259 = vpop.f32.mrf.mxu0
        %v1260 = vadd.f32 0.0, %v1259
        %v1261 = vpop.f32.mrf.mxu0
        %1262 = vmatprep.mubr.f32.mxu0 0.0
        %1263 = vmatmul.mubr.f32.gmra.mxu0 %v1175
        %v1264 = vpop.f32.mrf.mxu0
        %v1265 = vadd.f32 0.0, %v1264
        %v1266 = vpop.f32.mrf.mxu0
        %1267 = vmatprep.mubr.f32.mxu0 0.0
        %1268 = vmatmul.mubr.f32.gmra.mxu0 %v1177
        %v1269 = vpop.f32.mrf.mxu0
        %v1270 = vadd.f32 0.0, %v1269
        %v1271 = vpop.f32.mrf.mxu0
        %1272 = vmatprep.mubr.f32.mxu0 0.0
        %1273 = vmatmul.mubr.f32.gmra.mxu0 %v1179
        %v1274 = vpop.f32.mrf.mxu0
        %v1275 = vadd.f32 0.0, %v1274
        %v1276 = vpop.f32.mrf.mxu0
        %1277 = vmatprep.mubr.f32.mxu0 0.0
        %1278 = vmatmul.mubr.f32.gmra.mxu0 %v1181
        %v1279 = vpop.f32.mrf.mxu0
        %v1280 = vadd.f32 0.0, %v1279
        %v1281 = vpop.f32.mrf.mxu0
        %1282 = vmatprep.mubr.f32.mxu0 0.0
        %1283 = vmatmul.mubr.f32.gmra.mxu0 %v1183
        %v1284 = vpop.f32.mrf.mxu0
        %v1285 = vadd.f32 0.0, %v1284
        %v1286 = vpop.f32.mrf.mxu0
        %1287 = vmatprep.mubr.f32.mxu0 0.0
        %1288 = vmatmul.mubr.f32.gmra.mxu0 %v1185
        %v1289 = vpop.f32.mrf.mxu0
        %v1290 = vadd.f32 0.0, %v1289
        %v1291 = vpop.f32.mrf.mxu0
        %1292 = vmatprep.mubr.f32.mxu0 0.0
        %1293 = vmatmul.mubr.f32.gmra.mxu0 %v1187
        %v1294 = vpop.f32.mrf.mxu0
        %v1295 = vadd.f32 0.0, %v1294
        %v1296 = vpop.f32.mrf.mxu0
        %1297 = vdwg.mxu0
        %v1299 = vsel %vm1172, %v1161, 0
        %v1302 = vsel %vm1172, %v1162, 0
        %v1305 = vsel %vm1172, %v1163, 0
        %v1308 = vsel %vm1172, %v1164, 0
        %v1311 = vsel %vm1172, %v1165, 0
        %v1314 = vsel %vm1172, %v1166, 0
        %v1317 = vsel %vm1172, %v1167, 0
        %v1320 = vsel %vm1172, %v1168, 0
        %v1323 = vsel %vm1189, %v1169, 0
        %1325 = vmatprep.subr.mxu0 0.0
        %1326 = vmatpush1.msra.mxu0 0.0
        %1327 = vmatprep.subr.mxu0 0.0
        %1328 = vmatpush1.msra.mxu0 0.0
        %1329 = vmatprep.subr.mxu0 0.0
        %1330 = vmatpush1.msra.mxu0 0.0
        %1331 = vmatprep.subr.mxu0 0.0
        %1332 = vmatpush1.msra.mxu0 0.0
        %1333 = vmatprep.subr.mxu0 0.0
        %1334 = vmatpush1.msra.mxu0 0.0
        %1335 = vmatprep.subr.mxu0 0.0
        %1336 = vmatpush1.msra.mxu0 0.0
        %1337 = vmatprep.subr.mxu0 0.0
        %1338 = vmatpush1.msra.mxu0 0.0
        %1339 = vmatprep.subr.mxu0 0.0
        %1340 = vmatpush1.msra.mxu0 0.0
        %1341 = vmatprep.subr.mxu0 0.0
        %1342 = vmatpush1.msra.mxu0 0.0
        %1343 = vmatprep.subr.mxu0 0.0
        %1344 = vmatpush1.msra.mxu0 0.0
        %1345 = vmatprep.subr.mxu0 0.0
        %1346 = vmatpush1.msra.mxu0 0.0
        %1347 = vmatprep.subr.mxu0 0.0
        %1348 = vmatpush1.msra.mxu0 0.0
        %1349 = vmatprep.subr.mxu0 0.0
        %1350 = vmatpush1.msra.mxu0 0.0
        %1351 = vmatprep.subr.mxu0 0.0
        %1352 = vmatpush1.msra.mxu0 0.0
        %1353 = vmatprep.subr.mxu0 0.0
        %1354 = vmatpush1.msra.mxu0 0.0
        %1355 = vmatprep.subr.mxu0 0.0
        %1356 = vmatpush1.msra.mxu0 %v1323
        %1357 = vmatprep.subr.mxu0 0.0
        %1358 = vmatpush2.msra.mxu0 0.0
        %1359 = vmatprep.subr.mxu0 0.0
        %1360 = vmatpush2.msra.mxu0 0.0
        %1361 = vmatprep.subr.mxu0 0.0
        %1362 = vmatpush2.msra.mxu0 0.0
        %1363 = vmatprep.subr.mxu0 0.0
        %1364 = vmatpush2.msra.mxu0 0.0
        %1365 = vmatprep.subr.mxu0 0.0
        %1366 = vmatpush2.msra.mxu0 0.0
        %1367 = vmatprep.subr.mxu0 0.0
        %1368 = vmatpush2.msra.mxu0 0.0
        %1369 = vmatprep.subr.mxu0 0.0
        %1370 = vmatpush2.msra.mxu0 0.0
        %1371 = vmatprep.subr.mxu0 0.0
        %1372 = vmatpush2.msra.mxu0 0.0
        %1373 = vmatprep.subr.mxu0 0.0
        %1374 = vmatpush2.msra.mxu0 0.0
        %1375 = vmatprep.subr.mxu0 0.0
        %1376 = vmatpush2.msra.mxu0 0.0
        %1377 = vmatprep.subr.mxu0 0.0
        %1378 = vmatpush2.msra.mxu0 0.0
        %1379 = vmatprep.subr.mxu0 0.0
        %1380 = vmatpush2.msra.mxu0 0.0
        %1381 = vmatprep.subr.mxu0 0.0
        %1382 = vmatpush2.msra.mxu0 0.0
        %1383 = vmatprep.subr.mxu0 0.0
        %1384 = vmatpush2.msra.mxu0 0.0
        %1385 = vmatprep.subr.mxu0 0.0
        %1386 = vmatpush2.msra.mxu0 0.0
        %1387 = vmatprep.subr.mxu0 0.0
        %1388 = vmatpush2.msra.mxu0 0.0
        %1389 = vmatprep.mubr.f32.mxu0 0.0
        %1390 = vmatmul.mubr.f32.gmra.mxu0 %v1299
        %v1391 = vpop.f32.mrf.mxu0
        %v1392 = vadd.f32 %v1260, %v1391
        %v1393 = vpop.f32.mrf.mxu0
        %1394 = vmatprep.mubr.f32.mxu0 0.0
        %1395 = vmatmul.mubr.f32.gmra.mxu0 %v1302
        %v1396 = vpop.f32.mrf.mxu0
        %v1397 = vadd.f32 %v1265, %v1396
        %v1398 = vpop.f32.mrf.mxu0
        %1399 = vmatprep.mubr.f32.mxu0 0.0
        %1400 = vmatmul.mubr.f32.gmra.mxu0 %v1305
        %v1401 = vpop.f32.mrf.mxu0
        %v1402 = vadd.f32 %v1270, %v1401
        %v1403 = vpop.f32.mrf.mxu0
        %1404 = vmatprep.mubr.f32.mxu0 0.0
        %1405 = vmatmul.mubr.f32.gmra.mxu0 %v1308
        %v1406 = vpop.f32.mrf.mxu0
        %v1407 = vadd.f32 %v1275, %v1406
        %v1408 = vpop.f32.mrf.mxu0
        %1409 = vmatprep.mubr.f32.mxu0 0.0
        %1410 = vmatmul.mubr.f32.gmra.mxu0 %v1311
        %v1411 = vpop.f32.mrf.mxu0
        %v1412 = vadd.f32 %v1280, %v1411
        %v1413 = vpop.f32.mrf.mxu0
        %1414 = vmatprep.mubr.f32.mxu0 0.0
        %1415 = vmatmul.mubr.f32.gmra.mxu0 %v1314
        %v1416 = vpop.f32.mrf.mxu0
        %v1417 = vadd.f32 %v1285, %v1416
        %v1418 = vpop.f32.mrf.mxu0
        %1419 = vmatprep.mubr.f32.mxu0 0.0
        %1420 = vmatmul.mubr.f32.gmra.mxu0 %v1317
        %v1421 = vpop.f32.mrf.mxu0
        %v1422 = vadd.f32 %v1290, %v1421
        %v1423 = vpop.f32.mrf.mxu0
        %1424 = vmatprep.mubr.f32.mxu0 0.0
        %1425 = vmatmul.mubr.f32.gmra.mxu0 %v1320
        %v1426 = vpop.f32.mrf.mxu0
        %v1427 = vadd.f32 %v1295, %v1426
        %v1428 = vpop.f32.mrf.mxu0
        %1429 = vdwg.mxu0
        %v1430 = vrot.slane 0.0, 1
        %v1431 = vrot.slane %v1058, 1
        %v1432 = vrot.slane %v1072, 1
        %v1433 = vrot.slane %v1086, 1
        %v1434 = vrot.slane %v1100, 1
        %v1435 = vrot.slane %v1114, 1
        %v1436 = vrot.slane %v1128, 1
        %v1437 = vrot.slane %v1142, 1
        %vm1446 = vcmask 1046528
        %v1447 = vsel %vm1446, %v1430, 0.0
        %v1448 = vsel %vm1446, %v1431, 0.0
        %v1449 = vsel %vm1446, %v1432, 0.0
        %v1450 = vsel %vm1446, %v1433, 0.0
        %v1451 = vsel %vm1446, %v1434, 0.0
        %v1452 = vsel %vm1446, %v1435, 0.0
        %v1453 = vsel %vm1446, %v1436, 0.0
        %v1454 = vsel %vm1446, %v1437, 0.0
        %s1455 = scalar_lea.vmem %s1, 8
        %v1456 = vld [vmem:[%s1455] sm:$0xf]
        %v1458 = vsel %vm1172, %v1447, 0
        %v1461 = vsel %vm1172, %v1448, 0
        %v1464 = vsel %vm1172, %v1449, 0
        %v1467 = vsel %vm1172, %v1450, 0
        %v1470 = vsel %vm1172, %v1451, 0
        %v1473 = vsel %vm1172, %v1452, 0
        %v1476 = vsel %vm1172, %v1453, 0
        %v1479 = vsel %vm1172, %v1454, 0
        %v1482 = vsel %vm1189, %v1456, 0
        %1484 = vmatprep.subr.mxu0 0.0
        %1485 = vmatpush1.msra.mxu0 0.0
        %1486 = vmatprep.subr.mxu0 0.0
        %1487 = vmatpush1.msra.mxu0 0.0
        %1488 = vmatprep.subr.mxu0 0.0
        %1489 = vmatpush1.msra.mxu0 0.0
        %1490 = vmatprep.subr.mxu0 0.0
        %1491 = vmatpush1.msra.mxu0 0.0
        %1492 = vmatprep.subr.mxu0 0.0
        %1493 = vmatpush1.msra.mxu0 0.0
        %1494 = vmatprep.subr.mxu0 0.0
        %1495 = vmatpush1.msra.mxu0 0.0
        %1496 = vmatprep.subr.mxu0 0.0
        %1497 = vmatpush1.msra.mxu0 0.0
        %1498 = vmatprep.subr.mxu0 0.0
        %1499 = vmatpush1.msra.mxu0 0.0
        %1500 = vmatprep.subr.mxu0 0.0
        %1501 = vmatpush1.msra.mxu0 0.0
        %1502 = vmatprep.subr.mxu0 0.0
        %1503 = vmatpush1.msra.mxu0 0.0
        %1504 = vmatprep.subr.mxu0 0.0
        %1505 = vmatpush1.msra.mxu0 0.0
        %1506 = vmatprep.subr.mxu0 0.0
        %1507 = vmatpush1.msra.mxu0 0.0
        %1508 = vmatprep.subr.mxu0 0.0
        %1509 = vmatpush1.msra.mxu0 0.0
        %1510 = vmatprep.subr.mxu0 0.0
        %1511 = vmatpush1.msra.mxu0 0.0
        %1512 = vmatprep.subr.mxu0 0.0
        %1513 = vmatpush1.msra.mxu0 0.0
        %1514 = vmatprep.subr.mxu0 0.0
        %1515 = vmatpush1.msra.mxu0 %v1482
        %1516 = vmatprep.subr.mxu0 0.0
        %1517 = vmatpush2.msra.mxu0 0.0
        %1518 = vmatprep.subr.mxu0 0.0
        %1519 = vmatpush2.msra.mxu0 0.0
        %1520 = vmatprep.subr.mxu0 0.0
        %1521 = vmatpush2.msra.mxu0 0.0
        %1522 = vmatprep.subr.mxu0 0.0
        %1523 = vmatpush2.msra.mxu0 0.0
        %1524 = vmatprep.subr.mxu0 0.0
        %1525 = vmatpush2.msra.mxu0 0.0
        %1526 = vmatprep.subr.mxu0 0.0
        %1527 = vmatpush2.msra.mxu0 0.0
        %1528 = vmatprep.subr.mxu0 0.0
        %1529 = vmatpush2.msra.mxu0 0.0
        %1530 = vmatprep.subr.mxu0 0.0
        %1531 = vmatpush2.msra.mxu0 0.0
        %1532 = vmatprep.subr.mxu0 0.0
        %1533 = vmatpush2.msra.mxu0 0.0
        %1534 = vmatprep.subr.mxu0 0.0
        %1535 = vmatpush2.msra.mxu0 0.0
        %1536 = vmatprep.subr.mxu0 0.0
        %1537 = vmatpush2.msra.mxu0 0.0
        %1538 = vmatprep.subr.mxu0 0.0
        %1539 = vmatpush2.msra.mxu0 0.0
        %1540 = vmatprep.subr.mxu0 0.0
        %1541 = vmatpush2.msra.mxu0 0.0
        %1542 = vmatprep.subr.mxu0 0.0
        %1543 = vmatpush2.msra.mxu0 0.0
        %1544 = vmatprep.subr.mxu0 0.0
        %1545 = vmatpush2.msra.mxu0 0.0
        %1546 = vmatprep.subr.mxu0 0.0
        %1547 = vmatpush2.msra.mxu0 0.0
        %1548 = vmatprep.mubr.f32.mxu0 0.0
        %1549 = vmatmul.mubr.f32.gmra.mxu0 %v1458
        %v1550 = vpop.f32.mrf.mxu0
        %v1551 = vadd.f32 0.0, %v1550
        %v1552 = vpop.f32.mrf.mxu0
        %1553 = vmatprep.mubr.f32.mxu0 0.0
        %1554 = vmatmul.mubr.f32.gmra.mxu0 %v1461
        %v1555 = vpop.f32.mrf.mxu0
        %v1556 = vadd.f32 0.0, %v1555
        %v1557 = vpop.f32.mrf.mxu0
        %1558 = vmatprep.mubr.f32.mxu0 0.0
        %1559 = vmatmul.mubr.f32.gmra.mxu0 %v1464
        %v1560 = vpop.f32.mrf.mxu0
        %v1561 = vadd.f32 0.0, %v1560
        %v1562 = vpop.f32.mrf.mxu0
        %1563 = vmatprep.mubr.f32.mxu0 0.0
        %1564 = vmatmul.mubr.f32.gmra.mxu0 %v1467
        %v1565 = vpop.f32.mrf.mxu0
        %v1566 = vadd.f32 0.0, %v1565
        %v1567 = vpop.f32.mrf.mxu0
        %1568 = vmatprep.mubr.f32.mxu0 0.0
        %1569 = vmatmul.mubr.f32.gmra.mxu0 %v1470
        %v1570 = vpop.f32.mrf.mxu0
        %v1571 = vadd.f32 0.0, %v1570
        %v1572 = vpop.f32.mrf.mxu0
        %1573 = vmatprep.mubr.f32.mxu0 0.0
        %1574 = vmatmul.mubr.f32.gmra.mxu0 %v1473
        %v1575 = vpop.f32.mrf.mxu0
        %v1576 = vadd.f32 0.0, %v1575
        %v1577 = vpop.f32.mrf.mxu0
        %1578 = vmatprep.mubr.f32.mxu0 0.0
        %1579 = vmatmul.mubr.f32.gmra.mxu0 %v1476
        %v1580 = vpop.f32.mrf.mxu0
        %v1581 = vadd.f32 0.0, %v1580
        %v1582 = vpop.f32.mrf.mxu0
        %1583 = vmatprep.mubr.f32.mxu0 0.0
        %1584 = vmatmul.mubr.f32.gmra.mxu0 %v1479
        %v1585 = vpop.f32.mrf.mxu0
        %v1586 = vadd.f32 0.0, %v1585
        %v1587 = vpop.f32.mrf.mxu0
        %1588 = vdwg.mxu0
        %v1589 = vadd.f32 %v1392, %v1551
        %v1590 = vadd.f32 %v1397, %v1556
        %v1591 = vadd.f32 %v1402, %v1561
        %v1592 = vadd.f32 %v1407, %v1566
        %v1593 = vadd.f32 %v1412, %v1571
        %v1594 = vadd.f32 %v1417, %v1576
        %v1595 = vadd.f32 %v1422, %v1581
        %v1596 = vadd.f32 %v1427, %v1586
        %v1604 = vrot.slane %v918, 7
        %v1605 = vrot.slane %v919, 6
        %v1606 = vsel %vm1042, %v1605, %v1604
        %v1607 = vrot.slane %v920, 5
        %v1608 = vsel %vm1045, %v1607, %v1606
        %v1609 = vrot.slane %v921, 4
        %v1610 = vsel %vm1048, %v1609, %v1608
        %v1611 = vrot.slane %v922, 3
        %v1612 = vsel %vm1051, %v1611, %v1610
        %v1613 = vrot.slane %v923, 2
        %v1614 = vsel %vm1054, %v1613, %v1612
        %v1615 = vrot.slane %v924, 1
        %v1616 = vsel %vm1057, %v1615, %v1614
        %v1617 = vrot.slane %v926, 7
        %v1618 = vrot.slane %v927, 6
        %v1619 = vsel %vm1042, %v1618, %v1617
        %v1620 = vrot.slane %v928, 5
        %v1621 = vsel %vm1045, %v1620, %v1619
        %v1622 = vrot.slane %v929, 4
        %v1623 = vsel %vm1048, %v1622, %v1621
        %v1624 = vrot.slane %v930, 3
        %v1625 = vsel %vm1051, %v1624, %v1623
        %v1626 = vrot.slane %v931, 2
        %v1627 = vsel %vm1054, %v1626, %v1625
        %v1628 = vrot.slane %v932, 1
        %v1629 = vsel %vm1057, %v1628, %v1627
        %v1630 = vrot.slane %v934, 7
        %v1631 = vrot.slane %v935, 6
        %v1632 = vsel %vm1042, %v1631, %v1630
        %v1633 = vrot.slane %v936, 5
        %v1634 = vsel %vm1045, %v1633, %v1632
        %v1635 = vrot.slane %v937, 4
        %v1636 = vsel %vm1048, %v1635, %v1634
        %v1637 = vrot.slane %v938, 3
        %v1638 = vsel %vm1051, %v1637, %v1636
        %v1639 = vrot.slane %v939, 2
        %v1640 = vsel %vm1054, %v1639, %v1638
        %v1641 = vrot.slane %v940, 1
        %v1642 = vsel %vm1057, %v1641, %v1640
        %v1643 = vrot.slane %v942, 7
        %v1644 = vrot.slane %v943, 6
        %v1645 = vsel %vm1042, %v1644, %v1643
        %v1646 = vrot.slane %v944, 5
        %v1647 = vsel %vm1045, %v1646, %v1645
        %v1648 = vrot.slane %v945, 4
        %v1649 = vsel %vm1048, %v1648, %v1647
        %v1650 = vrot.slane %v946, 3
        %v1651 = vsel %vm1051, %v1650, %v1649
        %v1652 = vrot.slane %v947, 2
        %v1653 = vsel %vm1054, %v1652, %v1651
        %v1654 = vrot.slane %v948, 1
        %v1655 = vsel %vm1057, %v1654, %v1653
        %v1656 = vrot.slane %v950, 7
        %v1657 = vrot.slane %v951, 6
        %v1658 = vsel %vm1042, %v1657, %v1656
        %v1659 = vrot.slane %v952, 5
        %v1660 = vsel %vm1045, %v1659, %v1658
        %v1661 = vrot.slane %v953, 4
        %v1662 = vsel %vm1048, %v1661, %v1660
        %v1663 = vrot.slane %v954, 3
        %v1664 = vsel %vm1051, %v1663, %v1662
        %v1665 = vrot.slane %v955, 2
        %v1666 = vsel %vm1054, %v1665, %v1664
        %v1667 = vrot.slane %v956, 1
        %v1668 = vsel %vm1057, %v1667, %v1666
        %v1669 = vrot.slane %v958, 7
        %v1670 = vrot.slane %v959, 6
        %v1671 = vsel %vm1042, %v1670, %v1669
        %v1672 = vrot.slane %v960, 5
        %v1673 = vsel %vm1045, %v1672, %v1671
        %v1674 = vrot.slane %v961, 4
        %v1675 = vsel %vm1048, %v1674, %v1673
        %v1676 = vrot.slane %v962, 3
        %v1677 = vsel %vm1051, %v1676, %v1675
        %v1678 = vrot.slane %v963, 2
        %v1679 = vsel %vm1054, %v1678, %v1677
        %v1680 = vrot.slane %v964, 1
        %v1681 = vsel %vm1057, %v1680, %v1679
        %v1682 = vrot.slane %v966, 7
        %v1683 = vrot.slane %v967, 6
        %v1684 = vsel %vm1042, %v1683, %v1682
        %v1685 = vrot.slane %v968, 5
        %v1686 = vsel %vm1045, %v1685, %v1684
        %v1687 = vrot.slane %v969, 4
        %v1688 = vsel %vm1048, %v1687, %v1686
        %v1689 = vrot.slane %v970, 3
        %v1690 = vsel %vm1051, %v1689, %v1688
        %v1691 = vrot.slane %v971, 2
        %v1692 = vsel %vm1054, %v1691, %v1690
        %v1693 = vrot.slane %v972, 1
        %v1694 = vsel %vm1057, %v1693, %v1692
        %v1695 = vrot.slane %v974, 7
        %v1696 = vrot.slane %v975, 6
        %v1697 = vsel %vm1042, %v1696, %v1695
        %v1698 = vrot.slane %v976, 5
        %v1699 = vsel %vm1045, %v1698, %v1697
        %v1700 = vrot.slane %v977, 4
        %v1701 = vsel %vm1048, %v1700, %v1699
        %v1702 = vrot.slane %v978, 3
        %v1703 = vsel %vm1051, %v1702, %v1701
        %v1704 = vrot.slane %v979, 2
        %v1705 = vsel %vm1054, %v1704, %v1703
        %v1706 = vrot.slane %v980, 1
        %v1707 = vsel %vm1057, %v1706, %v1705
        %v1716 = vsel %vm1160, 0.0, %v1616
        %v1717 = vsel %vm1160, 0.0, %v1629
        %v1718 = vsel %vm1160, 0.0, %v1642
        %v1719 = vsel %vm1160, 0.0, %v1655
        %v1720 = vsel %vm1160, 0.0, %v1668
        %v1721 = vsel %vm1160, 0.0, %v1681
        %v1722 = vsel %vm1160, 0.0, %v1694
        %v1723 = vsel %vm1160, 0.0, %v1707
        %s1724 = scalar_lea.vmem %s1, 12
        %v1725 = vld [vmem:[%s1724] sm:$0xf]
        %v1727 = vsel %vm1172, %v1716, 0
        %v1730 = vsel %vm1172, %v1717, 0
        %v1733 = vsel %vm1172, %v1718, 0
        %v1736 = vsel %vm1172, %v1719, 0
        %v1739 = vsel %vm1172, %v1720, 0
        %v1742 = vsel %vm1172, %v1721, 0
        %v1745 = vsel %vm1172, %v1722, 0
        %v1748 = vsel %vm1172, %v1723, 0
        %v1751 = vsel %vm1189, %v1725, 0
        %1753 = vmatprep.subr.mxu0 0.0
        %1754 = vmatpush1.msra.mxu0 0.0
        %1755 = vmatprep.subr.mxu0 0.0
        %1756 = vmatpush1.msra.mxu0 0.0
        %1757 = vmatprep.subr.mxu0 0.0
        %1758 = vmatpush1.msra.mxu0 0.0
        %1759 = vmatprep.subr.mxu0 0.0
        %1760 = vmatpush1.msra.mxu0 0.0
        %1761 = vmatprep.subr.mxu0 0.0
        %1762 = vmatpush1.msra.mxu0 0.0
        %1763 = vmatprep.subr.mxu0 0.0
        %1764 = vmatpush1.msra.mxu0 0.0
        %1765 = vmatprep.subr.mxu0 0.0
        %1766 = vmatpush1.msra.mxu0 0.0
        %1767 = vmatprep.subr.mxu0 0.0
        %1768 = vmatpush1.msra.mxu0 0.0
        %1769 = vmatprep.subr.mxu0 0.0
        %1770 = vmatpush1.msra.mxu0 0.0
        %1771 = vmatprep.subr.mxu0 0.0
        %1772 = vmatpush1.msra.mxu0 0.0
        %1773 = vmatprep.subr.mxu0 0.0
        %1774 = vmatpush1.msra.mxu0 0.0
        %1775 = vmatprep.subr.mxu0 0.0
        %1776 = vmatpush1.msra.mxu0 0.0
        %1777 = vmatprep.subr.mxu0 0.0
        %1778 = vmatpush1.msra.mxu0 0.0
        %1779 = vmatprep.subr.mxu0 0.0
        %1780 = vmatpush1.msra.mxu0 0.0
        %1781 = vmatprep.subr.mxu0 0.0
        %1782 = vmatpush1.msra.mxu0 0.0
        %1783 = vmatprep.subr.mxu0 0.0
        %1784 = vmatpush1.msra.mxu0 %v1751
        %1785 = vmatprep.subr.mxu0 0.0
        %1786 = vmatpush2.msra.mxu0 0.0
        %1787 = vmatprep.subr.mxu0 0.0
        %1788 = vmatpush2.msra.mxu0 0.0
        %1789 = vmatprep.subr.mxu0 0.0
        %1790 = vmatpush2.msra.mxu0 0.0
        %1791 = vmatprep.subr.mxu0 0.0
        %1792 = vmatpush2.msra.mxu0 0.0
        %1793 = vmatprep.subr.mxu0 0.0
        %1794 = vmatpush2.msra.mxu0 0.0
        %1795 = vmatprep.subr.mxu0 0.0
        %1796 = vmatpush2.msra.mxu0 0.0
        %1797 = vmatprep.subr.mxu0 0.0
        %1798 = vmatpush2.msra.mxu0 0.0
        %1799 = vmatprep.subr.mxu0 0.0
        %1800 = vmatpush2.msra.mxu0 0.0
        %1801 = vmatprep.subr.mxu0 0.0
        %1802 = vmatpush2.msra.mxu0 0.0
        %1803 = vmatprep.subr.mxu0 0.0
        %1804 = vmatpush2.msra.mxu0 0.0
        %1805 = vmatprep.subr.mxu0 0.0
        %1806 = vmatpush2.msra.mxu0 0.0
        %1807 = vmatprep.subr.mxu0 0.0
        %1808 = vmatpush2.msra.mxu0 0.0
        %1809 = vmatprep.subr.mxu0 0.0
        %1810 = vmatpush2.msra.mxu0 0.0
        %1811 = vmatprep.subr.mxu0 0.0
        %1812 = vmatpush2.msra.mxu0 0.0
        %1813 = vmatprep.subr.mxu0 0.0
        %1814 = vmatpush2.msra.mxu0 0.0
        %1815 = vmatprep.subr.mxu0 0.0
        %1816 = vmatpush2.msra.mxu0 0.0
        %1817 = vmatprep.mubr.f32.mxu0 0.0
        %1818 = vmatmul.mubr.f32.gmra.mxu0 %v1727
        %v1819 = vpop.f32.mrf.mxu0
        %v1820 = vadd.f32 0.0, %v1819
        %v1821 = vpop.f32.mrf.mxu0
        %1822 = vmatprep.mubr.f32.mxu0 0.0
        %1823 = vmatmul.mubr.f32.gmra.mxu0 %v1730
        %v1824 = vpop.f32.mrf.mxu0
        %v1825 = vadd.f32 0.0, %v1824
        %v1826 = vpop.f32.mrf.mxu0
        %1827 = vmatprep.mubr.f32.mxu0 0.0
        %1828 = vmatmul.mubr.f32.gmra.mxu0 %v1733
        %v1829 = vpop.f32.mrf.mxu0
        %v1830 = vadd.f32 0.0, %v1829
        %v1831 = vpop.f32.mrf.mxu0
        %1832 = vmatprep.mubr.f32.mxu0 0.0
        %1833 = vmatmul.mubr.f32.gmra.mxu0 %v1736
        %v1834 = vpop.f32.mrf.mxu0
        %v1835 = vadd.f32 0.0, %v1834
        %v1836 = vpop.f32.mrf.mxu0
        %1837 = vmatprep.mubr.f32.mxu0 0.0
        %1838 = vmatmul.mubr.f32.gmra.mxu0 %v1739
        %v1839 = vpop.f32.mrf.mxu0
        %v1840 = vadd.f32 0.0, %v1839
        %v1841 = vpop.f32.mrf.mxu0
        %1842 = vmatprep.mubr.f32.mxu0 0.0
        %1843 = vmatmul.mubr.f32.gmra.mxu0 %v1742
        %v1844 = vpop.f32.mrf.mxu0
        %v1845 = vadd.f32 0.0, %v1844
        %v1846 = vpop.f32.mrf.mxu0
        %1847 = vmatprep.mubr.f32.mxu0 0.0
        %1848 = vmatmul.mubr.f32.gmra.mxu0 %v1745
        %v1849 = vpop.f32.mrf.mxu0
        %v1850 = vadd.f32 0.0, %v1849
        %v1851 = vpop.f32.mrf.mxu0
        %1852 = vmatprep.mubr.f32.mxu0 0.0
        %1853 = vmatmul.mubr.f32.gmra.mxu0 %v1748
        %v1854 = vpop.f32.mrf.mxu0
        %v1855 = vadd.f32 0.0, %v1854
        %v1856 = vpop.f32.mrf.mxu0
        %1857 = vdwg.mxu0
        %v1858 = vadd.f32 %v1589, %v1820
        %v1859 = vadd.f32 %v1590, %v1825
        %v1860 = vadd.f32 %v1591, %v1830
        %v1861 = vadd.f32 %v1592, %v1835
        %v1862 = vadd.f32 %v1593, %v1840
        %v1863 = vadd.f32 %v1594, %v1845
        %v1864 = vadd.f32 %v1595, %v1850
        %v1865 = vadd.f32 %v1596, %v1855
        %s1866 = scalar_lea.vmem %s1, 16
        %v1867 = vld [vmem:[%s1866] sm:$0xf]
        %v1869 = vrot.slane %v975, 7
        %v1870 = vsel %vm1039, %v1869, %v974
        %v1871 = vrot.slane %v976, 6
        %v1872 = vsel %vm1042, %v1871, %v1870
        %v1873 = vrot.slane %v977, 5
        %v1874 = vsel %vm1045, %v1873, %v1872
        %v1875 = vrot.slane %v978, 4
        %v1876 = vsel %vm1048, %v1875, %v1874
        %v1877 = vrot.slane %v979, 3
        %v1878 = vsel %vm1051, %v1877, %v1876
        %v1879 = vrot.slane %v980, 2
        %v1880 = vsel %vm1054, %v1879, %v1878
        %v1881 = vrot.slane %v981, 1
        %v1882 = vsel %vm1057, %v1881, %v1880
        %v1883 = vsel %vm1172, %v1882, 0
        %v1886 = vsel %vm1189, %v1867, 0
        %1888 = vmatprep.subr.mxu0 0.0
        %1889 = vmatpush1.msra.mxu0 0.0
        %1890 = vmatprep.subr.mxu0 0.0
        %1891 = vmatpush1.msra.mxu0 0.0
        %1892 = vmatprep.subr.mxu0 0.0
        %1893 = vmatpush1.msra.mxu0 0.0
        %1894 = vmatprep.subr.mxu0 0.0
        %1895 = vmatpush1.msra.mxu0 0.0
        %1896 = vmatprep.subr.mxu0 0.0
        %1897 = vmatpush1.msra.mxu0 0.0
        %1898 = vmatprep.subr.mxu0 0.0
        %1899 = vmatpush1.msra.mxu0 0.0
        %1900 = vmatprep.subr.mxu0 0.0
        %1901 = vmatpush1.msra.mxu0 0.0
        %1902 = vmatprep.subr.mxu0 0.0
        %1903 = vmatpush1.msra.mxu0 0.0
        %1904 = vmatprep.subr.mxu0 0.0
        %1905 = vmatpush1.msra.mxu0 0.0
        %1906 = vmatprep.subr.mxu0 0.0
        %1907 = vmatpush1.msra.mxu0 0.0
        %1908 = vmatprep.subr.mxu0 0.0
        %1909 = vmatpush1.msra.mxu0 0.0
        %1910 = vmatprep.subr.mxu0 0.0
        %1911 = vmatpush1.msra.mxu0 0.0
        %1912 = vmatprep.subr.mxu0 0.0
        %1913 = vmatpush1.msra.mxu0 0.0
        %1914 = vmatprep.subr.mxu0 0.0
        %1915 = vmatpush1.msra.mxu0 0.0
        %1916 = vmatprep.subr.mxu0 0.0
        %1917 = vmatpush1.msra.mxu0 0.0
        %1918 = vmatprep.subr.mxu0 0.0
        %1919 = vmatpush1.msra.mxu0 %v1886
        %1920 = vmatprep.subr.mxu0 0.0
        %1921 = vmatpush2.msra.mxu0 0.0
        %1922 = vmatprep.subr.mxu0 0.0
        %1923 = vmatpush2.msra.mxu0 0.0
        %1924 = vmatprep.subr.mxu0 0.0
        %1925 = vmatpush2.msra.mxu0 0.0
        %1926 = vmatprep.subr.mxu0 0.0
        %1927 = vmatpush2.msra.mxu0 0.0
        %1928 = vmatprep.subr.mxu0 0.0
        %1929 = vmatpush2.msra.mxu0 0.0
        %1930 = vmatprep.subr.mxu0 0.0
        %1931 = vmatpush2.msra.mxu0 0.0
        %1932 = vmatprep.subr.mxu0 0.0
        %1933 = vmatpush2.msra.mxu0 0.0
        %1934 = vmatprep.subr.mxu0 0.0
        %1935 = vmatpush2.msra.mxu0 0.0
        %1936 = vmatprep.subr.mxu0 0.0
        %1937 = vmatpush2.msra.mxu0 0.0
        %1938 = vmatprep.subr.mxu0 0.0
        %1939 = vmatpush2.msra.mxu0 0.0
        %1940 = vmatprep.subr.mxu0 0.0
        %1941 = vmatpush2.msra.mxu0 0.0
        %1942 = vmatprep.subr.mxu0 0.0
        %1943 = vmatpush2.msra.mxu0 0.0
        %1944 = vmatprep.subr.mxu0 0.0
        %1945 = vmatpush2.msra.mxu0 0.0
        %1946 = vmatprep.subr.mxu0 0.0
        %1947 = vmatpush2.msra.mxu0 0.0
        %1948 = vmatprep.subr.mxu0 0.0
        %1949 = vmatpush2.msra.mxu0 0.0
        %1950 = vmatprep.subr.mxu0 0.0
        %1951 = vmatpush2.msra.mxu0 0.0
        %1952 = vmatprep.mubr.f32.mxu0 0.0
        %1953 = vmatmul.mubr.f32.gmra.mxu0 %v1175
        %v1954 = vpop.f32.mrf.mxu0
        %v1955 = vadd.f32 0.0, %v1954
        %v1956 = vpop.f32.mrf.mxu0
        %1957 = vmatprep.mubr.f32.mxu0 0.0
        %1958 = vmatmul.mubr.f32.gmra.mxu0 %v1177
        %v1959 = vpop.f32.mrf.mxu0
        %v1960 = vadd.f32 0.0, %v1959
        %v1961 = vpop.f32.mrf.mxu0
        %1962 = vmatprep.mubr.f32.mxu0 0.0
        %1963 = vmatmul.mubr.f32.gmra.mxu0 %v1179
        %v1964 = vpop.f32.mrf.mxu0
        %v1965 = vadd.f32 0.0, %v1964
        %v1966 = vpop.f32.mrf.mxu0
        %1967 = vmatprep.mubr.f32.mxu0 0.0
        %1968 = vmatmul.mubr.f32.gmra.mxu0 %v1181
        %v1969 = vpop.f32.mrf.mxu0
        %v1970 = vadd.f32 0.0, %v1969
        %v1971 = vpop.f32.mrf.mxu0
        %1972 = vmatprep.mubr.f32.mxu0 0.0
        %1973 = vmatmul.mubr.f32.gmra.mxu0 %v1183
        %v1974 = vpop.f32.mrf.mxu0
        %v1975 = vadd.f32 0.0, %v1974
        %v1976 = vpop.f32.mrf.mxu0
        %1977 = vmatprep.mubr.f32.mxu0 0.0
        %1978 = vmatmul.mubr.f32.gmra.mxu0 %v1185
        %v1979 = vpop.f32.mrf.mxu0
        %v1980 = vadd.f32 0.0, %v1979
        %v1981 = vpop.f32.mrf.mxu0
        %1982 = vmatprep.mubr.f32.mxu0 0.0
        %1983 = vmatmul.mubr.f32.gmra.mxu0 %v1187
        %v1984 = vpop.f32.mrf.mxu0
        %v1985 = vadd.f32 0.0, %v1984
        %v1986 = vpop.f32.mrf.mxu0
        %1987 = vmatprep.mubr.f32.mxu0 0.0
        %1988 = vmatmul.mubr.f32.gmra.mxu0 %v1883
        %v1989 = vpop.f32.mrf.mxu0
        %v1990 = vadd.f32 0.0, %v1989
        %v1991 = vpop.f32.mrf.mxu0
        %1992 = vdwg.mxu0
        %v1993 = vadd.f32 %v1858, %v1955
        %v1994 = vadd.f32 %v1859, %v1960
        %v1995 = vadd.f32 %v1860, %v1965
        %v1996 = vadd.f32 %v1861, %v1970
        %v1997 = vadd.f32 %v1862, %v1975
        %v1998 = vadd.f32 %v1863, %v1980
        %v1999 = vadd.f32 %v1864, %v1985
        %v2000 = vadd.f32 %v1865, %v1990
        %v2001 = vrot.slane %v920, 7
        %v2002 = vsel %vm1039, %v2001, %v919
        %v2003 = vrot.slane %v921, 6
        %v2004 = vsel %vm1042, %v2003, %v2002
        %v2005 = vrot.slane %v922, 5
        %v2006 = vsel %vm1045, %v2005, %v2004
        %v2007 = vrot.slane %v923, 4
        %v2008 = vsel %vm1048, %v2007, %v2006
        %v2009 = vrot.slane %v924, 3
        %v2010 = vsel %vm1051, %v2009, %v2008
        %v2011 = vrot.slane %v925, 2
        %v2012 = vsel %vm1054, %v2011, %v2010
        %v2013 = vrot.slane %v928, 7
        %v2014 = vsel %vm1039, %v2013, %v927
        %v2015 = vrot.slane %v929, 6
        %v2016 = vsel %vm1042, %v2015, %v2014
        %v2017 = vrot.slane %v930, 5
        %v2018 = vsel %vm1045, %v2017, %v2016
        %v2019 = vrot.slane %v931, 4
        %v2020 = vsel %vm1048, %v2019, %v2018
        %v2021 = vrot.slane %v932, 3
        %v2022 = vsel %vm1051, %v2021, %v2020
        %v2023 = vrot.slane %v933, 2
        %v2024 = vsel %vm1054, %v2023, %v2022
        %v2025 = vrot.slane %v936, 7
        %v2026 = vsel %vm1039, %v2025, %v935
        %v2027 = vrot.slane %v937, 6
        %v2028 = vsel %vm1042, %v2027, %v2026
        %v2029 = vrot.slane %v938, 5
        %v2030 = vsel %vm1045, %v2029, %v2028
        %v2031 = vrot.slane %v939, 4
        %v2032 = vsel %vm1048, %v2031, %v2030
        %v2033 = vrot.slane %v940, 3
        %v2034 = vsel %vm1051, %v2033, %v2032
        %v2035 = vrot.slane %v941, 2
        %v2036 = vsel %vm1054, %v2035, %v2034
        %v2037 = vrot.slane %v944, 7
        %v2038 = vsel %vm1039, %v2037, %v943
        %v2039 = vrot.slane %v945, 6
        %v2040 = vsel %vm1042, %v2039, %v2038
        %v2041 = vrot.slane %v946, 5
        %v2042 = vsel %vm1045, %v2041, %v2040
        %v2043 = vrot.slane %v947, 4
        %v2044 = vsel %vm1048, %v2043, %v2042
        %v2045 = vrot.slane %v948, 3
        %v2046 = vsel %vm1051, %v2045, %v2044
        %v2047 = vrot.slane %v949, 2
        %v2048 = vsel %vm1054, %v2047, %v2046
        %v2049 = vrot.slane %v952, 7
        %v2050 = vsel %vm1039, %v2049, %v951
        %v2051 = vrot.slane %v953, 6
        %v2052 = vsel %vm1042, %v2051, %v2050
        %v2053 = vrot.slane %v954, 5
        %v2054 = vsel %vm1045, %v2053, %v2052
        %v2055 = vrot.slane %v955, 4
        %v2056 = vsel %vm1048, %v2055, %v2054
        %v2057 = vrot.slane %v956, 3
        %v2058 = vsel %vm1051, %v2057, %v2056
        %v2059 = vrot.slane %v957, 2
        %v2060 = vsel %vm1054, %v2059, %v2058
        %v2061 = vrot.slane %v960, 7
        %v2062 = vsel %vm1039, %v2061, %v959
        %v2063 = vrot.slane %v961, 6
        %v2064 = vsel %vm1042, %v2063, %v2062
        %v2065 = vrot.slane %v962, 5
        %v2066 = vsel %vm1045, %v2065, %v2064
        %v2067 = vrot.slane %v963, 4
        %v2068 = vsel %vm1048, %v2067, %v2066
        %v2069 = vrot.slane %v964, 3
        %v2070 = vsel %vm1051, %v2069, %v2068
        %v2071 = vrot.slane %v965, 2
        %v2072 = vsel %vm1054, %v2071, %v2070
        %v2073 = vrot.slane %v968, 7
        %v2074 = vsel %vm1039, %v2073, %v967
        %v2075 = vrot.slane %v969, 6
        %v2076 = vsel %vm1042, %v2075, %v2074
        %v2077 = vrot.slane %v970, 5
        %v2078 = vsel %vm1045, %v2077, %v2076
        %v2079 = vrot.slane %v971, 4
        %v2080 = vsel %vm1048, %v2079, %v2078
        %v2081 = vrot.slane %v972, 3
        %v2082 = vsel %vm1051, %v2081, %v2080
        %v2083 = vrot.slane %v973, 2
        %v2084 = vsel %vm1054, %v2083, %v2082
        %v2085 = vrot.slane %v976, 7
        %v2086 = vsel %vm1039, %v2085, %v975
        %v2087 = vrot.slane %v977, 6
        %v2088 = vsel %vm1042, %v2087, %v2086
        %v2089 = vrot.slane %v978, 5
        %v2090 = vsel %vm1045, %v2089, %v2088
        %v2091 = vrot.slane %v979, 4
        %v2092 = vsel %vm1048, %v2091, %v2090
        %v2093 = vrot.slane %v980, 3
        %v2094 = vsel %vm1051, %v2093, %v2092
        %v2095 = vrot.slane %v981, 2
        %v2096 = vsel %vm1054, %v2095, %v2094
        %v2105 = vsel %vm1446, %v2012, 0.0
        %v2106 = vsel %vm1446, %v2024, 0.0
        %v2107 = vsel %vm1446, %v2036, 0.0
        %v2108 = vsel %vm1446, %v2048, 0.0
        %v2109 = vsel %vm1446, %v2060, 0.0
        %v2110 = vsel %vm1446, %v2072, 0.0
        %v2111 = vsel %vm1446, %v2084, 0.0
        %v2112 = vsel %vm1446, %v2096, 0.0
        %s2113 = scalar_lea.vmem %s1, 20
        %v2114 = vld [vmem:[%s2113] sm:$0xf]
        %v2116 = vsel %vm1172, %v2105, 0
        %v2119 = vsel %vm1172, %v2106, 0
        %v2122 = vsel %vm1172, %v2107, 0
        %v2125 = vsel %vm1172, %v2108, 0
        %v2128 = vsel %vm1172, %v2109, 0
        %v2131 = vsel %vm1172, %v2110, 0
        %v2134 = vsel %vm1172, %v2111, 0
        %v2137 = vsel %vm1172, %v2112, 0
        %v2140 = vsel %vm1189, %v2114, 0
        %2142 = vmatprep.subr.mxu0 0.0
        %2143 = vmatpush1.msra.mxu0 0.0
        %2144 = vmatprep.subr.mxu0 0.0
        %2145 = vmatpush1.msra.mxu0 0.0
        %2146 = vmatprep.subr.mxu0 0.0
        %2147 = vmatpush1.msra.mxu0 0.0
        %2148 = vmatprep.subr.mxu0 0.0
        %2149 = vmatpush1.msra.mxu0 0.0
        %2150 = vmatprep.subr.mxu0 0.0
        %2151 = vmatpush1.msra.mxu0 0.0
        %2152 = vmatprep.subr.mxu0 0.0
        %2153 = vmatpush1.msra.mxu0 0.0
        %2154 = vmatprep.subr.mxu0 0.0
        %2155 = vmatpush1.msra.mxu0 0.0
        %2156 = vmatprep.subr.mxu0 0.0
        %2157 = vmatpush1.msra.mxu0 0.0
        %2158 = vmatprep.subr.mxu0 0.0
        %2159 = vmatpush1.msra.mxu0 0.0
        %2160 = vmatprep.subr.mxu0 0.0
        %2161 = vmatpush1.msra.mxu0 0.0
        %2162 = vmatprep.subr.mxu0 0.0
        %2163 = vmatpush1.msra.mxu0 0.0
        %2164 = vmatprep.subr.mxu0 0.0
        %2165 = vmatpush1.msra.mxu0 0.0
        %2166 = vmatprep.subr.mxu0 0.0
        %2167 = vmatpush1.msra.mxu0 0.0
        %2168 = vmatprep.subr.mxu0 0.0
        %2169 = vmatpush1.msra.mxu0 0.0
        %2170 = vmatprep.subr.mxu0 0.0
        %2171 = vmatpush1.msra.mxu0 0.0
        %2172 = vmatprep.subr.mxu0 0.0
        %2173 = vmatpush1.msra.mxu0 %v2140
        %2174 = vmatprep.subr.mxu0 0.0
        %2175 = vmatpush2.msra.mxu0 0.0
        %2176 = vmatprep.subr.mxu0 0.0
        %2177 = vmatpush2.msra.mxu0 0.0
        %2178 = vmatprep.subr.mxu0 0.0
        %2179 = vmatpush2.msra.mxu0 0.0
        %2180 = vmatprep.subr.mxu0 0.0
        %2181 = vmatpush2.msra.mxu0 0.0
        %2182 = vmatprep.subr.mxu0 0.0
        %2183 = vmatpush2.msra.mxu0 0.0
        %2184 = vmatprep.subr.mxu0 0.0
        %2185 = vmatpush2.msra.mxu0 0.0
        %2186 = vmatprep.subr.mxu0 0.0
        %2187 = vmatpush2.msra.mxu0 0.0
        %2188 = vmatprep.subr.mxu0 0.0
        %2189 = vmatpush2.msra.mxu0 0.0
        %2190 = vmatprep.subr.mxu0 0.0
        %2191 = vmatpush2.msra.mxu0 0.0
        %2192 = vmatprep.subr.mxu0 0.0
        %2193 = vmatpush2.msra.mxu0 0.0
        %2194 = vmatprep.subr.mxu0 0.0
        %2195 = vmatpush2.msra.mxu0 0.0
        %2196 = vmatprep.subr.mxu0 0.0
        %2197 = vmatpush2.msra.mxu0 0.0
        %2198 = vmatprep.subr.mxu0 0.0
        %2199 = vmatpush2.msra.mxu0 0.0
        %2200 = vmatprep.subr.mxu0 0.0
        %2201 = vmatpush2.msra.mxu0 0.0
        %2202 = vmatprep.subr.mxu0 0.0
        %2203 = vmatpush2.msra.mxu0 0.0
        %2204 = vmatprep.subr.mxu0 0.0
        %2205 = vmatpush2.msra.mxu0 0.0
        %2206 = vmatprep.mubr.f32.mxu0 0.0
        %2207 = vmatmul.mubr.f32.gmra.mxu0 %v2116
        %v2208 = vpop.f32.mrf.mxu0
        %v2209 = vadd.f32 0.0, %v2208
        %v2210 = vpop.f32.mrf.mxu0
        %2211 = vmatprep.mubr.f32.mxu0 0.0
        %2212 = vmatmul.mubr.f32.gmra.mxu0 %v2119
        %v2213 = vpop.f32.mrf.mxu0
        %v2214 = vadd.f32 0.0, %v2213
        %v2215 = vpop.f32.mrf.mxu0
        %2216 = vmatprep.mubr.f32.mxu0 0.0
        %2217 = vmatmul.mubr.f32.gmra.mxu0 %v2122
        %v2218 = vpop.f32.mrf.mxu0
        %v2219 = vadd.f32 0.0, %v2218
        %v2220 = vpop.f32.mrf.mxu0
        %2221 = vmatprep.mubr.f32.mxu0 0.0
        %2222 = vmatmul.mubr.f32.gmra.mxu0 %v2125
        %v2223 = vpop.f32.mrf.mxu0
        %v2224 = vadd.f32 0.0, %v2223
        %v2225 = vpop.f32.mrf.mxu0
        %2226 = vmatprep.mubr.f32.mxu0 0.0
        %2227 = vmatmul.mubr.f32.gmra.mxu0 %v2128
        %v2228 = vpop.f32.mrf.mxu0
        %v2229 = vadd.f32 0.0, %v2228
        %v2230 = vpop.f32.mrf.mxu0
        %2231 = vmatprep.mubr.f32.mxu0 0.0
        %2232 = vmatmul.mubr.f32.gmra.mxu0 %v2131
        %v2233 = vpop.f32.mrf.mxu0
        %v2234 = vadd.f32 0.0, %v2233
        %v2235 = vpop.f32.mrf.mxu0
        %2236 = vmatprep.mubr.f32.mxu0 0.0
        %2237 = vmatmul.mubr.f32.gmra.mxu0 %v2134
        %v2238 = vpop.f32.mrf.mxu0
        %v2239 = vadd.f32 0.0, %v2238
        %v2240 = vpop.f32.mrf.mxu0
        %2241 = vmatprep.mubr.f32.mxu0 0.0
        %2242 = vmatmul.mubr.f32.gmra.mxu0 %v2137
        %v2243 = vpop.f32.mrf.mxu0
        %v2244 = vadd.f32 0.0, %v2243
        %v2245 = vpop.f32.mrf.mxu0
        %2246 = vdwg.mxu0
        %v2247 = vadd.f32 %v1993, %v2209
        %v2248 = vadd.f32 %v1994, %v2214
        %v2249 = vadd.f32 %v1995, %v2219
        %v2250 = vadd.f32 %v1996, %v2224
        %v2251 = vadd.f32 %v1997, %v2229
        %v2252 = vadd.f32 %v1998, %v2234
        %v2253 = vadd.f32 %v1999, %v2239
        %v2254 = vadd.f32 %v2000, %v2244
        %v2255 = vrot.slane 0.0, 6
        %v2256 = vsel %vm1042, %v2255, %v1144
        %v2257 = vrot.slane 0.0, 5
        %v2258 = vsel %vm1045, %v2257, %v2256
        %v2259 = vrot.slane 0.0, 4
        %v2260 = vsel %vm1048, %v2259, %v2258
        %v2261 = vrot.slane 0.0, 3
        %v2262 = vsel %vm1051, %v2261, %v2260
        %v2263 = vrot.slane 0.0, 2
        %v2264 = vsel %vm1054, %v2263, %v2262
        %v2265 = vsel %vm1057, %v1430, %v2264
        %v2267 = vsel %vm1160, 0.0, %v2265
        %s2268 = scalar_lea.vmem %s1, 24
        %v2269 = vld [vmem:[%s2268] sm:$0xf]
        %v2271 = vsel %vm1172, %v2267, 0
        %v2274 = vsel %vm1189, %v2269, 0
        %2276 = vmatprep.subr.mxu0 0.0
        %2277 = vmatpush1.msra.mxu0 0.0
        %2278 = vmatprep.subr.mxu0 0.0
        %2279 = vmatpush1.msra.mxu0 0.0
        %2280 = vmatprep.subr.mxu0 0.0
        %2281 = vmatpush1.msra.mxu0 0.0
        %2282 = vmatprep.subr.mxu0 0.0
        %2283 = vmatpush1.msra.mxu0 0.0
        %2284 = vmatprep.subr.mxu0 0.0
        %2285 = vmatpush1.msra.mxu0 0.0
        %2286 = vmatprep.subr.mxu0 0.0
        %2287 = vmatpush1.msra.mxu0 0.0
        %2288 = vmatprep.subr.mxu0 0.0
        %2289 = vmatpush1.msra.mxu0 0.0
        %2290 = vmatprep.subr.mxu0 0.0
        %2291 = vmatpush1.msra.mxu0 0.0
        %2292 = vmatprep.subr.mxu0 0.0
        %2293 = vmatpush1.msra.mxu0 0.0
        %2294 = vmatprep.subr.mxu0 0.0
        %2295 = vmatpush1.msra.mxu0 0.0
        %2296 = vmatprep.subr.mxu0 0.0
        %2297 = vmatpush1.msra.mxu0 0.0
        %2298 = vmatprep.subr.mxu0 0.0
        %2299 = vmatpush1.msra.mxu0 0.0
        %2300 = vmatprep.subr.mxu0 0.0
        %2301 = vmatpush1.msra.mxu0 0.0
        %2302 = vmatprep.subr.mxu0 0.0
        %2303 = vmatpush1.msra.mxu0 0.0
        %2304 = vmatprep.subr.mxu0 0.0
        %2305 = vmatpush1.msra.mxu0 0.0
        %2306 = vmatprep.subr.mxu0 0.0
        %2307 = vmatpush1.msra.mxu0 %v2274
        %2308 = vmatprep.subr.mxu0 0.0
        %2309 = vmatpush2.msra.mxu0 0.0
        %2310 = vmatprep.subr.mxu0 0.0
        %2311 = vmatpush2.msra.mxu0 0.0
        %2312 = vmatprep.subr.mxu0 0.0
        %2313 = vmatpush2.msra.mxu0 0.0
        %2314 = vmatprep.subr.mxu0 0.0
        %2315 = vmatpush2.msra.mxu0 0.0
        %2316 = vmatprep.subr.mxu0 0.0
        %2317 = vmatpush2.msra.mxu0 0.0
        %2318 = vmatprep.subr.mxu0 0.0
        %2319 = vmatpush2.msra.mxu0 0.0
        %2320 = vmatprep.subr.mxu0 0.0
        %2321 = vmatpush2.msra.mxu0 0.0
        %2322 = vmatprep.subr.mxu0 0.0
        %2323 = vmatpush2.msra.mxu0 0.0
        %2324 = vmatprep.subr.mxu0 0.0
        %2325 = vmatpush2.msra.mxu0 0.0
        %2326 = vmatprep.subr.mxu0 0.0
        %2327 = vmatpush2.msra.mxu0 0.0
        %2328 = vmatprep.subr.mxu0 0.0
        %2329 = vmatpush2.msra.mxu0 0.0
        %2330 = vmatprep.subr.mxu0 0.0
        %2331 = vmatpush2.msra.mxu0 0.0
        %2332 = vmatprep.subr.mxu0 0.0
        %2333 = vmatpush2.msra.mxu0 0.0
        %2334 = vmatprep.subr.mxu0 0.0
        %2335 = vmatpush2.msra.mxu0 0.0
        %2336 = vmatprep.subr.mxu0 0.0
        %2337 = vmatpush2.msra.mxu0 0.0
        %2338 = vmatprep.subr.mxu0 0.0
        %2339 = vmatpush2.msra.mxu0 0.0
        %2340 = vmatprep.mubr.f32.mxu0 0.0
        %2341 = vmatmul.mubr.f32.gmra.mxu0 %v1730
        %v2342 = vpop.f32.mrf.mxu0
        %v2343 = vadd.f32 0.0, %v2342
        %v2344 = vpop.f32.mrf.mxu0
        %2345 = vmatprep.mubr.f32.mxu0 0.0
        %2346 = vmatmul.mubr.f32.gmra.mxu0 %v1733
        %v2347 = vpop.f32.mrf.mxu0
        %v2348 = vadd.f32 0.0, %v2347
        %v2349 = vpop.f32.mrf.mxu0
        %2350 = vmatprep.mubr.f32.mxu0 0.0
        %2351 = vmatmul.mubr.f32.gmra.mxu0 %v1736
        %v2352 = vpop.f32.mrf.mxu0
        %v2353 = vadd.f32 0.0, %v2352
        %v2354 = vpop.f32.mrf.mxu0
        %2355 = vmatprep.mubr.f32.mxu0 0.0
        %2356 = vmatmul.mubr.f32.gmra.mxu0 %v1739
        %v2357 = vpop.f32.mrf.mxu0
        %v2358 = vadd.f32 0.0, %v2357
        %v2359 = vpop.f32.mrf.mxu0
        %2360 = vmatprep.mubr.f32.mxu0 0.0
        %2361 = vmatmul.mubr.f32.gmra.mxu0 %v1742
        %v2362 = vpop.f32.mrf.mxu0
        %v2363 = vadd.f32 0.0, %v2362
        %v2364 = vpop.f32.mrf.mxu0
        %2365 = vmatprep.mubr.f32.mxu0 0.0
        %2366 = vmatmul.mubr.f32.gmra.mxu0 %v1745
        %v2367 = vpop.f32.mrf.mxu0
        %v2368 = vadd.f32 0.0, %v2367
        %v2369 = vpop.f32.mrf.mxu0
        %2370 = vmatprep.mubr.f32.mxu0 0.0
        %2371 = vmatmul.mubr.f32.gmra.mxu0 %v1748
        %v2372 = vpop.f32.mrf.mxu0
        %v2373 = vadd.f32 0.0, %v2372
        %v2374 = vpop.f32.mrf.mxu0
        %2375 = vmatprep.mubr.f32.mxu0 0.0
        %2376 = vmatmul.mubr.f32.gmra.mxu0 %v2271
        %v2377 = vpop.f32.mrf.mxu0
        %v2378 = vadd.f32 0.0, %v2377
        %v2379 = vpop.f32.mrf.mxu0
        %2380 = vdwg.mxu0
        %v2381 = vadd.f32 %v2247, %v2343
        %v2382 = vadd.f32 %v2248, %v2348
        %v2383 = vadd.f32 %v2249, %v2353
        %v2384 = vadd.f32 %v2250, %v2358
        %v2385 = vadd.f32 %v2251, %v2363
        %v2386 = vadd.f32 %v2252, %v2368
        %v2387 = vadd.f32 %v2253, %v2373
        %v2388 = vadd.f32 %v2254, %v2378
        %s2389 = scalar_lea.vmem %s1, 28
        %v2390 = vld [vmem:[%s2389] sm:$0xf]
        %v2391 = vsel %vm1039, %v1144, 0.0
        %v2392 = vsel %vm1042, %v2255, %v2391
        %v2393 = vsel %vm1045, %v2257, %v2392
        %v2394 = vsel %vm1048, %v2259, %v2393
        %v2395 = vsel %vm1051, %v2261, %v2394
        %v2396 = vsel %vm1054, %v2263, %v2395
        %v2397 = vsel %vm1057, %v1430, %v2396
        %v2398 = vsel %vm1172, %v2397, 0
        %v2401 = vsel %vm1189, %v2390, 0
        %2403 = vmatprep.subr.mxu0 0.0
        %2404 = vmatpush1.msra.mxu0 0.0
        %2405 = vmatprep.subr.mxu0 0.0
        %2406 = vmatpush1.msra.mxu0 0.0
        %2407 = vmatprep.subr.mxu0 0.0
        %2408 = vmatpush1.msra.mxu0 0.0
        %2409 = vmatprep.subr.mxu0 0.0
        %2410 = vmatpush1.msra.mxu0 0.0
        %2411 = vmatprep.subr.mxu0 0.0
        %2412 = vmatpush1.msra.mxu0 0.0
        %2413 = vmatprep.subr.mxu0 0.0
        %2414 = vmatpush1.msra.mxu0 0.0
        %2415 = vmatprep.subr.mxu0 0.0
        %2416 = vmatpush1.msra.mxu0 0.0
        %2417 = vmatprep.subr.mxu0 0.0
        %2418 = vmatpush1.msra.mxu0 0.0
        %2419 = vmatprep.subr.mxu0 0.0
        %2420 = vmatpush1.msra.mxu0 0.0
        %2421 = vmatprep.subr.mxu0 0.0
        %2422 = vmatpush1.msra.mxu0 0.0
        %2423 = vmatprep.subr.mxu0 0.0
        %2424 = vmatpush1.msra.mxu0 0.0
        %2425 = vmatprep.subr.mxu0 0.0
        %2426 = vmatpush1.msra.mxu0 0.0
        %2427 = vmatprep.subr.mxu0 0.0
        %2428 = vmatpush1.msra.mxu0 0.0
        %2429 = vmatprep.subr.mxu0 0.0
        %2430 = vmatpush1.msra.mxu0 0.0
        %2431 = vmatprep.subr.mxu0 0.0
        %2432 = vmatpush1.msra.mxu0 0.0
        %2433 = vmatprep.subr.mxu0 0.0
        %2434 = vmatpush1.msra.mxu0 %v2401
        %2435 = vmatprep.subr.mxu0 0.0
        %2436 = vmatpush2.msra.mxu0 0.0
        %2437 = vmatprep.subr.mxu0 0.0
        %2438 = vmatpush2.msra.mxu0 0.0
        %2439 = vmatprep.subr.mxu0 0.0
        %2440 = vmatpush2.msra.mxu0 0.0
        %2441 = vmatprep.subr.mxu0 0.0
        %2442 = vmatpush2.msra.mxu0 0.0
        %2443 = vmatprep.subr.mxu0 0.0
        %2444 = vmatpush2.msra.mxu0 0.0
        %2445 = vmatprep.subr.mxu0 0.0
        %2446 = vmatpush2.msra.mxu0 0.0
        %2447 = vmatprep.subr.mxu0 0.0
        %2448 = vmatpush2.msra.mxu0 0.0
        %2449 = vmatprep.subr.mxu0 0.0
        %2450 = vmatpush2.msra.mxu0 0.0
        %2451 = vmatprep.subr.mxu0 0.0
        %2452 = vmatpush2.msra.mxu0 0.0
        %2453 = vmatprep.subr.mxu0 0.0
        %2454 = vmatpush2.msra.mxu0 0.0
        %2455 = vmatprep.subr.mxu0 0.0
        %2456 = vmatpush2.msra.mxu0 0.0
        %2457 = vmatprep.subr.mxu0 0.0
        %2458 = vmatpush2.msra.mxu0 0.0
        %2459 = vmatprep.subr.mxu0 0.0
        %2460 = vmatpush2.msra.mxu0 0.0
        %2461 = vmatprep.subr.mxu0 0.0
        %2462 = vmatpush2.msra.mxu0 0.0
        %2463 = vmatprep.subr.mxu0 0.0
        %2464 = vmatpush2.msra.mxu0 0.0
        %2465 = vmatprep.subr.mxu0 0.0
        %2466 = vmatpush2.msra.mxu0 0.0
        %2467 = vmatprep.mubr.f32.mxu0 0.0
        %2468 = vmatmul.mubr.f32.gmra.mxu0 %v1177
        %v2469 = vpop.f32.mrf.mxu0
        %v2470 = vadd.f32 0.0, %v2469
        %v2471 = vpop.f32.mrf.mxu0
        %2472 = vmatprep.mubr.f32.mxu0 0.0
        %2473 = vmatmul.mubr.f32.gmra.mxu0 %v1179
        %v2474 = vpop.f32.mrf.mxu0
        %v2475 = vadd.f32 0.0, %v2474
        %v2476 = vpop.f32.mrf.mxu0
        %2477 = vmatprep.mubr.f32.mxu0 0.0
        %2478 = vmatmul.mubr.f32.gmra.mxu0 %v1181
        %v2479 = vpop.f32.mrf.mxu0
        %v2480 = vadd.f32 0.0, %v2479
        %v2481 = vpop.f32.mrf.mxu0
        %2482 = vmatprep.mubr.f32.mxu0 0.0
        %2483 = vmatmul.mubr.f32.gmra.mxu0 %v1183
        %v2484 = vpop.f32.mrf.mxu0
        %v2485 = vadd.f32 0.0, %v2484
        %v2486 = vpop.f32.mrf.mxu0
        %2487 = vmatprep.mubr.f32.mxu0 0.0
        %2488 = vmatmul.mubr.f32.gmra.mxu0 %v1185
        %v2489 = vpop.f32.mrf.mxu0
        %v2490 = vadd.f32 0.0, %v2489
        %v2491 = vpop.f32.mrf.mxu0
        %2492 = vmatprep.mubr.f32.mxu0 0.0
        %2493 = vmatmul.mubr.f32.gmra.mxu0 %v1187
        %v2494 = vpop.f32.mrf.mxu0
        %v2495 = vadd.f32 0.0, %v2494
        %v2496 = vpop.f32.mrf.mxu0
        %2497 = vmatprep.mubr.f32.mxu0 0.0
        %2498 = vmatmul.mubr.f32.gmra.mxu0 %v1883
        %v2499 = vpop.f32.mrf.mxu0
        %v2500 = vadd.f32 0.0, %v2499
        %v2501 = vpop.f32.mrf.mxu0
        %2502 = vmatprep.mubr.f32.mxu0 0.0
        %2503 = vmatmul.mubr.f32.gmra.mxu0 %v2398
        %v2504 = vpop.f32.mrf.mxu0
        %v2505 = vadd.f32 0.0, %v2504
        %v2506 = vpop.f32.mrf.mxu0
        %2507 = vdwg.mxu0
        %v2508 = vadd.f32 %v2381, %v2470
        %v2509 = vadd.f32 %v2382, %v2475
        %v2510 = vadd.f32 %v2383, %v2480
        %v2511 = vadd.f32 %v2384, %v2485
        %v2512 = vadd.f32 %v2385, %v2490
        %v2513 = vadd.f32 %v2386, %v2495
        %v2514 = vadd.f32 %v2387, %v2500
        %v2515 = vadd.f32 %v2388, %v2505
        %v2517 = vsel %vm1446, %v2396, 0.0
        %s2518 = scalar_lea.vmem %s1, 32
        %v2519 = vld [vmem:[%s2518] sm:$0xf]
        %v2521 = vsel %vm1172, %v2517, 0
        %v2524 = vsel %vm1189, %v2519, 0
        %2526 = vmatprep.subr.mxu0 0.0
        %2527 = vmatpush1.msra.mxu0 0.0
        %2528 = vmatprep.subr.mxu0 0.0
        %2529 = vmatpush1.msra.mxu0 0.0
        %2530 = vmatprep.subr.mxu0 0.0
        %2531 = vmatpush1.msra.mxu0 0.0
        %2532 = vmatprep.subr.mxu0 0.0
        %2533 = vmatpush1.msra.mxu0 0.0
        %2534 = vmatprep.subr.mxu0 0.0
        %2535 = vmatpush1.msra.mxu0 0.0
        %2536 = vmatprep.subr.mxu0 0.0
        %2537 = vmatpush1.msra.mxu0 0.0
        %2538 = vmatprep.subr.mxu0 0.0
        %2539 = vmatpush1.msra.mxu0 0.0
        %2540 = vmatprep.subr.mxu0 0.0
        %2541 = vmatpush1.msra.mxu0 0.0
        %2542 = vmatprep.subr.mxu0 0.0
        %2543 = vmatpush1.msra.mxu0 0.0
        %2544 = vmatprep.subr.mxu0 0.0
        %2545 = vmatpush1.msra.mxu0 0.0
        %2546 = vmatprep.subr.mxu0 0.0
        %2547 = vmatpush1.msra.mxu0 0.0
        %2548 = vmatprep.subr.mxu0 0.0
        %2549 = vmatpush1.msra.mxu0 0.0
        %2550 = vmatprep.subr.mxu0 0.0
        %2551 = vmatpush1.msra.mxu0 0.0
        %2552 = vmatprep.subr.mxu0 0.0
        %2553 = vmatpush1.msra.mxu0 0.0
        %2554 = vmatprep.subr.mxu0 0.0
        %2555 = vmatpush1.msra.mxu0 0.0
        %2556 = vmatprep.subr.mxu0 0.0
        %2557 = vmatpush1.msra.mxu0 %v2524
        %2558 = vmatprep.subr.mxu0 0.0
        %2559 = vmatpush2.msra.mxu0 0.0
        %2560 = vmatprep.subr.mxu0 0.0
        %2561 = vmatpush2.msra.mxu0 0.0
        %2562 = vmatprep.subr.mxu0 0.0
        %2563 = vmatpush2.msra.mxu0 0.0
        %2564 = vmatprep.subr.mxu0 0.0
        %2565 = vmatpush2.msra.mxu0 0.0
        %2566 = vmatprep.subr.mxu0 0.0
        %2567 = vmatpush2.msra.mxu0 0.0
        %2568 = vmatprep.subr.mxu0 0.0
        %2569 = vmatpush2.msra.mxu0 0.0
        %2570 = vmatprep.subr.mxu0 0.0
        %2571 = vmatpush2.msra.mxu0 0.0
        %2572 = vmatprep.subr.mxu0 0.0
        %2573 = vmatpush2.msra.mxu0 0.0
        %2574 = vmatprep.subr.mxu0 0.0
        %2575 = vmatpush2.msra.mxu0 0.0
        %2576 = vmatprep.subr.mxu0 0.0
        %2577 = vmatpush2.msra.mxu0 0.0
        %2578 = vmatprep.subr.mxu0 0.0
        %2579 = vmatpush2.msra.mxu0 0.0
        %2580 = vmatprep.subr.mxu0 0.0
        %2581 = vmatpush2.msra.mxu0 0.0
        %2582 = vmatprep.subr.mxu0 0.0
        %2583 = vmatpush2.msra.mxu0 0.0
        %2584 = vmatprep.subr.mxu0 0.0
        %2585 = vmatpush2.msra.mxu0 0.0
        %2586 = vmatprep.subr.mxu0 0.0
        %2587 = vmatpush2.msra.mxu0 0.0
        %2588 = vmatprep.subr.mxu0 0.0
        %2589 = vmatpush2.msra.mxu0 0.0
        %2590 = vmatprep.mubr.f32.mxu0 0.0
        %2591 = vmatmul.mubr.f32.gmra.mxu0 %v2119
        %v2592 = vpop.f32.mrf.mxu0
        %v2593 = vadd.f32 0.0, %v2592
        %v2594 = vpop.f32.mrf.mxu0
        %2595 = vmatprep.mubr.f32.mxu0 0.0
        %2596 = vmatmul.mubr.f32.gmra.mxu0 %v2122
        %v2597 = vpop.f32.mrf.mxu0
        %v2598 = vadd.f32 0.0, %v2597
        %v2599 = vpop.f32.mrf.mxu0
        %2600 = vmatprep.mubr.f32.mxu0 0.0
        %2601 = vmatmul.mubr.f32.gmra.mxu0 %v2125
        %v2602 = vpop.f32.mrf.mxu0
        %v2603 = vadd.f32 0.0, %v2602
        %v2604 = vpop.f32.mrf.mxu0
        %2605 = vmatprep.mubr.f32.mxu0 0.0
        %2606 = vmatmul.mubr.f32.gmra.mxu0 %v2128
        %v2607 = vpop.f32.mrf.mxu0
        %v2608 = vadd.f32 0.0, %v2607
        %v2609 = vpop.f32.mrf.mxu0
        %2610 = vmatprep.mubr.f32.mxu0 0.0
        %2611 = vmatmul.mubr.f32.gmra.mxu0 %v2131
        %v2612 = vpop.f32.mrf.mxu0
        %v2613 = vadd.f32 0.0, %v2612
        %v2614 = vpop.f32.mrf.mxu0
        %2615 = vmatprep.mubr.f32.mxu0 0.0
        %2616 = vmatmul.mubr.f32.gmra.mxu0 %v2134
        %v2617 = vpop.f32.mrf.mxu0
        %v2618 = vadd.f32 0.0, %v2617
        %v2619 = vpop.f32.mrf.mxu0
        %2620 = vmatprep.mubr.f32.mxu0 0.0
        %2621 = vmatmul.mubr.f32.gmra.mxu0 %v2137
        %v2622 = vpop.f32.mrf.mxu0
        %v2623 = vadd.f32 0.0, %v2622
        %v2624 = vpop.f32.mrf.mxu0
        %2625 = vmatprep.mubr.f32.mxu0 0.0
        %2626 = vmatmul.mubr.f32.gmra.mxu0 %v2521
        %v2627 = vpop.f32.mrf.mxu0
        %v2628 = vadd.f32 0.0, %v2627
        %v2629 = vpop.f32.mrf.mxu0
        %2630 = vdwg.mxu0
        %v2631 = vadd.f32 %v2508, %v2593
        %v2632 = vadd.f32 %v2509, %v2598
        %v2633 = vadd.f32 %v2510, %v2603
        %v2634 = vadd.f32 %v2511, %v2608
        %v2635 = vadd.f32 %v2512, %v2613
        %v2636 = vadd.f32 %v2513, %v2618
        %v2637 = vadd.f32 %v2514, %v2623
        %v2638 = vadd.f32 %v2515, %v2628
        %v2639 = vld [vmem:[%s2] sm:$0x1]
        %v2641 = vlaneseq
        %v2642 = vshrl.u32 %v2641, 7
        %v2643 = vsub.s32 0, %v2642
        %v2644 = vrot.slane %v2639, %v2643
        %v2646 = vmul.f32 %v2631, %v2644
        %v2647 = vmul.f32 %v2632, %v2644
        %v2648 = vmul.f32 %v2633, %v2644
        %v2649 = vmul.f32 %v2634, %v2644
        %v2650 = vmul.f32 %v2635, %v2644
        %v2651 = vmul.f32 %v2636, %v2644
        %v2652 = vmul.f32 %v2637, %v2644
        %v2653 = vmul.f32 %v2638, %v2644
        %v2654 = vld [vmem:[%s3] sm:$0x1]
        %v2656 = vlaneseq
        %v2657 = vshrl.u32 %v2656, 7
        %v2658 = vsub.s32 0, %v2657
        %v2659 = vrot.slane %v2654, %v2658
        %v2661 = vadd.f32 %v2646, %v2659
        %v2662 = vadd.f32 %v2647, %v2659
        %v2663 = vadd.f32 %v2648, %v2659
        %v2664 = vadd.f32 %v2649, %v2659
        %v2665 = vadd.f32 %v2650, %v2659
        %v2666 = vadd.f32 %v2651, %v2659
        %v2667 = vadd.f32 %v2652, %v2659
        %v2668 = vadd.f32 %v2653, %v2659
        %v2669 = vmax.f32 %v2661, 0.0
        %v2670 = vmax.f32 %v2662, 0.0
        %v2671 = vmax.f32 %v2663, 0.0
        %v2672 = vmax.f32 %v2664, 0.0
        %v2673 = vmax.f32 %v2665, 0.0
        %v2674 = vmax.f32 %v2666, 0.0
        %v2675 = vmax.f32 %v2667, 0.0
        %v2676 = vmax.f32 %v2668, 0.0
        %v2684 = vrot.slane %v2669, 7
        %v2685 = vrot.slane %v2670, 7
        %v2686 = vrot.slane %v2671, 7
        %v2687 = vrot.slane %v2672, 7
        %v2688 = vrot.slane %v2673, 7
        %v2689 = vrot.slane %v2674, 7
        %v2690 = vrot.slane %v2675, 7
        %v2698 = vsel %vm1160, 0.0, %v2684
        %v2699 = vsel %vm1160, 0.0, %v2685
        %v2700 = vsel %vm1160, 0.0, %v2686
        %v2701 = vsel %vm1160, 0.0, %v2687
        %v2702 = vsel %vm1160, 0.0, %v2688
        %v2703 = vsel %vm1160, 0.0, %v2689
        %v2704 = vsel %vm1160, 0.0, %v2690
        %v2705 = vld [vmem:[%s4] sm:$0xff]
        %s2706 = scalar_lea.vmem %s4, 8
        %v2707 = vld [vmem:[%s2706] sm:$0xff]
        %vm2708 = vcmask 64512
        %v2709 = vsel %vm2708, 0.0, 0
        %v2711 = vsel %vm2708, %v2669, 0
        %v2713 = vsel %vm2708, %v2670, 0
        %v2715 = vsel %vm2708, %v2671, 0
        %v2717 = vsel %vm2708, %v2672, 0
        %v2719 = vsel %vm2708, %v2673, 0
        %v2721 = vsel %vm2708, %v2674, 0
        %v2723 = vsel %vm2708, %v2675, 0
        %2725 = vmatprep.subr.mxu0 0.0
        %2726 = vmatpush1.msra.mxu0 0.0
        %2727 = vmatprep.subr.mxu0 0.0
        %2728 = vmatpush1.msra.mxu0 0.0
        %2729 = vmatprep.subr.mxu0 0.0
        %2730 = vmatpush1.msra.mxu0 0.0
        %2731 = vmatprep.subr.mxu0 0.0
        %2732 = vmatpush1.msra.mxu0 0.0
        %2733 = vmatprep.subr.mxu0 0.0
        %2734 = vmatpush1.msra.mxu0 0.0
        %2735 = vmatprep.subr.mxu0 0.0
        %2736 = vmatpush1.msra.mxu0 0.0
        %2737 = vmatprep.subr.mxu0 0.0
        %2738 = vmatpush1.msra.mxu0 0.0
        %2739 = vmatprep.subr.mxu0 0.0
        %2740 = vmatpush1.msra.mxu0 0.0
        %2741 = vmatprep.subr.mxu0 0.0
        %2742 = vmatpush1.msra.mxu0 0.0
        %2743 = vmatprep.subr.mxu0 0.0
        %2744 = vmatpush1.msra.mxu0 0.0
        %2745 = vmatprep.subr.mxu0 0.0
        %2746 = vmatpush1.msra.mxu0 0.0
        %2747 = vmatprep.subr.mxu0 0.0
        %2748 = vmatpush1.msra.mxu0 0.0
        %2749 = vmatprep.subr.mxu0 0.0
        %2750 = vmatpush1.msra.mxu0 0.0
        %2751 = vmatprep.subr.mxu0 0.0
        %2752 = vmatpush1.msra.mxu0 0.0
        %2753 = vmatprep.subr.mxu0 0.0
        %2754 = vmatpush1.msra.mxu0 0.0
        %2755 = vmatprep.subr.mxu0 0.0
        %2756 = vmatpush1.msra.mxu0 %v2707
        %2757 = vmatprep.subr.mxu0 0.0
        %2758 = vmatpush2.msra.mxu0 0.0
        %2759 = vmatprep.subr.mxu0 0.0
        %2760 = vmatpush2.msra.mxu0 0.0
        %2761 = vmatprep.subr.mxu0 0.0
        %2762 = vmatpush2.msra.mxu0 0.0
        %2763 = vmatprep.subr.mxu0 0.0
        %2764 = vmatpush2.msra.mxu0 0.0
        %2765 = vmatprep.subr.mxu0 0.0
        %2766 = vmatpush2.msra.mxu0 0.0
        %2767 = vmatprep.subr.mxu0 0.0
        %2768 = vmatpush2.msra.mxu0 0.0
        %2769 = vmatprep.subr.mxu0 0.0
        %2770 = vmatpush2.msra.mxu0 0.0
        %2771 = vmatprep.subr.mxu0 0.0
        %2772 = vmatpush2.msra.mxu0 0.0
        %2773 = vmatprep.subr.mxu0 0.0
        %2774 = vmatpush2.msra.mxu0 0.0
        %2775 = vmatprep.subr.mxu0 0.0
        %2776 = vmatpush2.msra.mxu0 0.0
        %2777 = vmatprep.subr.mxu0 0.0
        %2778 = vmatpush2.msra.mxu0 0.0
        %2779 = vmatprep.subr.mxu0 0.0
        %2780 = vmatpush2.msra.mxu0 0.0
        %2781 = vmatprep.subr.mxu0 0.0
        %2782 = vmatpush2.msra.mxu0 0.0
        %2783 = vmatprep.subr.mxu0 0.0
        %2784 = vmatpush2.msra.mxu0 0.0
        %2785 = vmatprep.subr.mxu0 0.0
        %2786 = vmatpush2.msra.mxu0 0.0
        %2787 = vmatprep.subr.mxu0 0.0
        %2788 = vmatpush2.msra.mxu0 0.0
        %2789 = vmatprep.mubr.f32.mxu0 0.0
        %2790 = vmatmul.mubr.f32.gmra.mxu0 %v2709
        %v2791 = vpop.f32.mrf.mxu0
        %v2792 = vadd.f32 0.0, %v2791
        %v2793 = vpop.f32.mrf.mxu0
        %2794 = vmatprep.mubr.f32.mxu0 0.0
        %2795 = vmatmul.mubr.f32.gmra.mxu0 %v2711
        %v2796 = vpop.f32.mrf.mxu0
        %v2797 = vadd.f32 0.0, %v2796
        %v2798 = vpop.f32.mrf.mxu0
        %2799 = vmatprep.mubr.f32.mxu0 0.0
        %2800 = vmatmul.mubr.f32.gmra.mxu0 %v2713
        %v2801 = vpop.f32.mrf.mxu0
        %v2802 = vadd.f32 0.0, %v2801
        %v2803 = vpop.f32.mrf.mxu0
        %2804 = vmatprep.mubr.f32.mxu0 0.0
        %2805 = vmatmul.mubr.f32.gmra.mxu0 %v2715
        %v2806 = vpop.f32.mrf.mxu0
        %v2807 = vadd.f32 0.0, %v2806
        %v2808 = vpop.f32.mrf.mxu0
        %2809 = vmatprep.mubr.f32.mxu0 0.0
        %2810 = vmatmul.mubr.f32.gmra.mxu0 %v2717
        %v2811 = vpop.f32.mrf.mxu0
        %v2812 = vadd.f32 0.0, %v2811
        %v2813 = vpop.f32.mrf.mxu0
        %2814 = vmatprep.mubr.f32.mxu0 0.0
        %2815 = vmatmul.mubr.f32.gmra.mxu0 %v2719
        %v2816 = vpop.f32.mrf.mxu0
        %v2817 = vadd.f32 0.0, %v2816
        %v2818 = vpop.f32.mrf.mxu0
        %2819 = vmatprep.mubr.f32.mxu0 0.0
        %2820 = vmatmul.mubr.f32.gmra.mxu0 %v2721
        %v2821 = vpop.f32.mrf.mxu0
        %v2822 = vadd.f32 0.0, %v2821
        %v2823 = vpop.f32.mrf.mxu0
        %2824 = vmatprep.mubr.f32.mxu0 0.0
        %2825 = vmatmul.mubr.f32.gmra.mxu0 %v2723
        %v2826 = vpop.f32.mrf.mxu0
        %v2827 = vadd.f32 0.0, %v2826
        %v2828 = vpop.f32.mrf.mxu0
        %2829 = vdwg.mxu0
        %v2830 = vsel %vm2708, %v1161, 0
        %v2833 = vsel %vm2708, %v2698, 0
        %v2836 = vsel %vm2708, %v2699, 0
        %v2839 = vsel %vm2708, %v2700, 0
        %v2842 = vsel %vm2708, %v2701, 0
        %v2845 = vsel %vm2708, %v2702, 0
        %v2848 = vsel %vm2708, %v2703, 0
        %v2851 = vsel %vm2708, %v2704, 0
        %2853 = vmatprep.subr.mxu0 0.0
        %2854 = vmatpush1.msra.mxu0 0.0
        %2855 = vmatprep.subr.mxu0 0.0
        %2856 = vmatpush1.msra.mxu0 0.0
        %2857 = vmatprep.subr.mxu0 0.0
        %2858 = vmatpush1.msra.mxu0 0.0
        %2859 = vmatprep.subr.mxu0 0.0
        %2860 = vmatpush1.msra.mxu0 0.0
        %2861 = vmatprep.subr.mxu0 0.0
        %2862 = vmatpush1.msra.mxu0 0.0
        %2863 = vmatprep.subr.mxu0 0.0
        %2864 = vmatpush1.msra.mxu0 0.0
        %2865 = vmatprep.subr.mxu0 0.0
        %2866 = vmatpush1.msra.mxu0 0.0
        %2867 = vmatprep.subr.mxu0 0.0
        %2868 = vmatpush1.msra.mxu0 0.0
        %2869 = vmatprep.subr.mxu0 0.0
        %2870 = vmatpush1.msra.mxu0 0.0
        %2871 = vmatprep.subr.mxu0 0.0
        %2872 = vmatpush1.msra.mxu0 0.0
        %2873 = vmatprep.subr.mxu0 0.0
        %2874 = vmatpush1.msra.mxu0 0.0
        %2875 = vmatprep.subr.mxu0 0.0
        %2876 = vmatpush1.msra.mxu0 0.0
        %2877 = vmatprep.subr.mxu0 0.0
        %2878 = vmatpush1.msra.mxu0 0.0
        %2879 = vmatprep.subr.mxu0 0.0
        %2880 = vmatpush1.msra.mxu0 0.0
        %2881 = vmatprep.subr.mxu0 0.0
        %2882 = vmatpush1.msra.mxu0 0.0
        %2883 = vmatprep.subr.mxu0 0.0
        %2884 = vmatpush1.msra.mxu0 %v2705
        %2885 = vmatprep.subr.mxu0 0.0
        %2886 = vmatpush2.msra.mxu0 0.0
        %2887 = vmatprep.subr.mxu0 0.0
        %2888 = vmatpush2.msra.mxu0 0.0
        %2889 = vmatprep.subr.mxu0 0.0
        %2890 = vmatpush2.msra.mxu0 0.0
        %2891 = vmatprep.subr.mxu0 0.0
        %2892 = vmatpush2.msra.mxu0 0.0
        %2893 = vmatprep.subr.mxu0 0.0
        %2894 = vmatpush2.msra.mxu0 0.0
        %2895 = vmatprep.subr.mxu0 0.0
        %2896 = vmatpush2.msra.mxu0 0.0
        %2897 = vmatprep.subr.mxu0 0.0
        %2898 = vmatpush2.msra.mxu0 0.0
        %2899 = vmatprep.subr.mxu0 0.0
        %2900 = vmatpush2.msra.mxu0 0.0
        %2901 = vmatprep.subr.mxu0 0.0
        %2902 = vmatpush2.msra.mxu0 0.0
        %2903 = vmatprep.subr.mxu0 0.0
        %2904 = vmatpush2.msra.mxu0 0.0
        %2905 = vmatprep.subr.mxu0 0.0
        %2906 = vmatpush2.msra.mxu0 0.0
        %2907 = vmatprep.subr.mxu0 0.0
        %2908 = vmatpush2.msra.mxu0 0.0
        %2909 = vmatprep.subr.mxu0 0.0
        %2910 = vmatpush2.msra.mxu0 0.0
        %2911 = vmatprep.subr.mxu0 0.0
        %2912 = vmatpush2.msra.mxu0 0.0
        %2913 = vmatprep.subr.mxu0 0.0
        %2914 = vmatpush2.msra.mxu0 0.0
        %2915 = vmatprep.subr.mxu0 0.0
        %2916 = vmatpush2.msra.mxu0 0.0
        %2917 = vmatprep.mubr.f32.mxu0 0.0
        %2918 = vmatmul.mubr.f32.gmra.mxu0 %v2830
        %v2919 = vpop.f32.mrf.mxu0
        %v2920 = vadd.f32 %v2792, %v2919
        %v2921 = vpop.f32.mrf.mxu0
        %2922 = vmatprep.mubr.f32.mxu0 0.0
        %2923 = vmatmul.mubr.f32.gmra.mxu0 %v2833
        %v2924 = vpop.f32.mrf.mxu0
        %v2925 = vadd.f32 %v2797, %v2924
        %v2926 = vpop.f32.mrf.mxu0
        %2927 = vmatprep.mubr.f32.mxu0 0.0
        %2928 = vmatmul.mubr.f32.gmra.mxu0 %v2836
        %v2929 = vpop.f32.mrf.mxu0
        %v2930 = vadd.f32 %v2802, %v2929
        %v2931 = vpop.f32.mrf.mxu0
        %2932 = vmatprep.mubr.f32.mxu0 0.0
        %2933 = vmatmul.mubr.f32.gmra.mxu0 %v2839
        %v2934 = vpop.f32.mrf.mxu0
        %v2935 = vadd.f32 %v2807, %v2934
        %v2936 = vpop.f32.mrf.mxu0
        %2937 = vmatprep.mubr.f32.mxu0 0.0
        %2938 = vmatmul.mubr.f32.gmra.mxu0 %v2842
        %v2939 = vpop.f32.mrf.mxu0
        %v2940 = vadd.f32 %v2812, %v2939
        %v2941 = vpop.f32.mrf.mxu0
        %2942 = vmatprep.mubr.f32.mxu0 0.0
        %2943 = vmatmul.mubr.f32.gmra.mxu0 %v2845
        %v2944 = vpop.f32.mrf.mxu0
        %v2945 = vadd.f32 %v2817, %v2944
        %v2946 = vpop.f32.mrf.mxu0
        %2947 = vmatprep.mubr.f32.mxu0 0.0
        %2948 = vmatmul.mubr.f32.gmra.mxu0 %v2848
        %v2949 = vpop.f32.mrf.mxu0
        %v2950 = vadd.f32 %v2822, %v2949
        %v2951 = vpop.f32.mrf.mxu0
        %2952 = vmatprep.mubr.f32.mxu0 0.0
        %2953 = vmatmul.mubr.f32.gmra.mxu0 %v2851
        %v2954 = vpop.f32.mrf.mxu0
        %v2955 = vadd.f32 %v2827, %v2954
        %v2956 = vpop.f32.mrf.mxu0
        %2957 = vdwg.mxu0
        %v2958 = vrot.slane %v2669, 1
        %v2959 = vrot.slane %v2670, 1
        %v2960 = vrot.slane %v2671, 1
        %v2961 = vrot.slane %v2672, 1
        %v2962 = vrot.slane %v2673, 1
        %v2963 = vrot.slane %v2674, 1
        %v2964 = vrot.slane %v2675, 1
        %v2972 = vsel %vm1446, %v2958, 0.0
        %v2973 = vsel %vm1446, %v2959, 0.0
        %v2974 = vsel %vm1446, %v2960, 0.0
        %v2975 = vsel %vm1446, %v2961, 0.0
        %v2976 = vsel %vm1446, %v2962, 0.0
        %v2977 = vsel %vm1446, %v2963, 0.0
        %v2978 = vsel %vm1446, %v2964, 0.0
        %s2979 = scalar_lea.vmem %s4, 16
        %v2980 = vld [vmem:[%s2979] sm:$0xff]
        %v2981 = vsel %vm2708, %v1447, 0
        %v2984 = vsel %vm2708, %v2972, 0
        %v2987 = vsel %vm2708, %v2973, 0
        %v2990 = vsel %vm2708, %v2974, 0
        %v2993 = vsel %vm2708, %v2975, 0
        %v2996 = vsel %vm2708, %v2976, 0
        %v2999 = vsel %vm2708, %v2977, 0
        %v3002 = vsel %vm2708, %v2978, 0
        %3004 = vmatprep.subr.mxu0 0.0
        %3005 = vmatpush1.msra.mxu0 0.0
        %3006 = vmatprep.subr.mxu0 0.0
        %3007 = vmatpush1.msra.mxu0 0.0
        %3008 = vmatprep.subr.mxu0 0.0
        %3009 = vmatpush1.msra.mxu0 0.0
        %3010 = vmatprep.subr.mxu0 0.0
        %3011 = vmatpush1.msra.mxu0 0.0
        %3012 = vmatprep.subr.mxu0 0.0
        %3013 = vmatpush1.msra.mxu0 0.0
        %3014 = vmatprep.subr.mxu0 0.0
        %3015 = vmatpush1.msra.mxu0 0.0
        %3016 = vmatprep.subr.mxu0 0.0
        %3017 = vmatpush1.msra.mxu0 0.0
        %3018 = vmatprep.subr.mxu0 0.0
        %3019 = vmatpush1.msra.mxu0 0.0
        %3020 = vmatprep.subr.mxu0 0.0
        %3021 = vmatpush1.msra.mxu0 0.0
        %3022 = vmatprep.subr.mxu0 0.0
        %3023 = vmatpush1.msra.mxu0 0.0
        %3024 = vmatprep.subr.mxu0 0.0
        %3025 = vmatpush1.msra.mxu0 0.0
        %3026 = vmatprep.subr.mxu0 0.0
        %3027 = vmatpush1.msra.mxu0 0.0
        %3028 = vmatprep.subr.mxu0 0.0
        %3029 = vmatpush1.msra.mxu0 0.0
        %3030 = vmatprep.subr.mxu0 0.0
        %3031 = vmatpush1.msra.mxu0 0.0
        %3032 = vmatprep.subr.mxu0 0.0
        %3033 = vmatpush1.msra.mxu0 0.0
        %3034 = vmatprep.subr.mxu0 0.0
        %3035 = vmatpush1.msra.mxu0 %v2980
        %3036 = vmatprep.subr.mxu0 0.0
        %3037 = vmatpush2.msra.mxu0 0.0
        %3038 = vmatprep.subr.mxu0 0.0
        %3039 = vmatpush2.msra.mxu0 0.0
        %3040 = vmatprep.subr.mxu0 0.0
        %3041 = vmatpush2.msra.mxu0 0.0
        %3042 = vmatprep.subr.mxu0 0.0
        %3043 = vmatpush2.msra.mxu0 0.0
        %3044 = vmatprep.subr.mxu0 0.0
        %3045 = vmatpush2.msra.mxu0 0.0
        %3046 = vmatprep.subr.mxu0 0.0
        %3047 = vmatpush2.msra.mxu0 0.0
        %3048 = vmatprep.subr.mxu0 0.0
        %3049 = vmatpush2.msra.mxu0 0.0
        %3050 = vmatprep.subr.mxu0 0.0
        %3051 = vmatpush2.msra.mxu0 0.0
        %3052 = vmatprep.subr.mxu0 0.0
        %3053 = vmatpush2.msra.mxu0 0.0
        %3054 = vmatprep.subr.mxu0 0.0
        %3055 = vmatpush2.msra.mxu0 0.0
        %3056 = vmatprep.subr.mxu0 0.0
        %3057 = vmatpush2.msra.mxu0 0.0
        %3058 = vmatprep.subr.mxu0 0.0
        %3059 = vmatpush2.msra.mxu0 0.0
        %3060 = vmatprep.subr.mxu0 0.0
        %3061 = vmatpush2.msra.mxu0 0.0
        %3062 = vmatprep.subr.mxu0 0.0
        %3063 = vmatpush2.msra.mxu0 0.0
        %3064 = vmatprep.subr.mxu0 0.0
        %3065 = vmatpush2.msra.mxu0 0.0
        %3066 = vmatprep.subr.mxu0 0.0
        %3067 = vmatpush2.msra.mxu0 0.0
        %3068 = vmatprep.mubr.f32.mxu0 0.0
        %3069 = vmatmul.mubr.f32.gmra.mxu0 %v2981
        %v3070 = vpop.f32.mrf.mxu0
        %v3071 = vadd.f32 0.0, %v3070
        %v3072 = vpop.f32.mrf.mxu0
        %3073 = vmatprep.mubr.f32.mxu0 0.0
        %3074 = vmatmul.mubr.f32.gmra.mxu0 %v2984
        %v3075 = vpop.f32.mrf.mxu0
        %v3076 = vadd.f32 0.0, %v3075
        %v3077 = vpop.f32.mrf.mxu0
        %3078 = vmatprep.mubr.f32.mxu0 0.0
        %3079 = vmatmul.mubr.f32.gmra.mxu0 %v2987
        %v3080 = vpop.f32.mrf.mxu0
        %v3081 = vadd.f32 0.0, %v3080
        %v3082 = vpop.f32.mrf.mxu0
        %3083 = vmatprep.mubr.f32.mxu0 0.0
        %3084 = vmatmul.mubr.f32.gmra.mxu0 %v2990
        %v3085 = vpop.f32.mrf.mxu0
        %v3086 = vadd.f32 0.0, %v3085
        %v3087 = vpop.f32.mrf.mxu0
        %3088 = vmatprep.mubr.f32.mxu0 0.0
        %3089 = vmatmul.mubr.f32.gmra.mxu0 %v2993
        %v3090 = vpop.f32.mrf.mxu0
        %v3091 = vadd.f32 0.0, %v3090
        %v3092 = vpop.f32.mrf.mxu0
        %3093 = vmatprep.mubr.f32.mxu0 0.0
        %3094 = vmatmul.mubr.f32.gmra.mxu0 %v2996
        %v3095 = vpop.f32.mrf.mxu0
        %v3096 = vadd.f32 0.0, %v3095
        %v3097 = vpop.f32.mrf.mxu0
        %3098 = vmatprep.mubr.f32.mxu0 0.0
        %3099 = vmatmul.mubr.f32.gmra.mxu0 %v2999
        %v3100 = vpop.f32.mrf.mxu0
        %v3101 = vadd.f32 0.0, %v3100
        %v3102 = vpop.f32.mrf.mxu0
        %3103 = vmatprep.mubr.f32.mxu0 0.0
        %3104 = vmatmul.mubr.f32.gmra.mxu0 %v3002
        %v3105 = vpop.f32.mrf.mxu0
        %v3106 = vadd.f32 0.0, %v3105
        %v3107 = vpop.f32.mrf.mxu0
        %3108 = vdwg.mxu0
        %v3109 = vadd.f32 %v2920, %v3071
        %v3110 = vadd.f32 %v2925, %v3076
        %v3111 = vadd.f32 %v2930, %v3081
        %v3112 = vadd.f32 %v2935, %v3086
        %v3113 = vadd.f32 %v2940, %v3091
        %v3114 = vadd.f32 %v2945, %v3096
        %v3115 = vadd.f32 %v2950, %v3101
        %v3116 = vadd.f32 %v2955, %v3106
        %v3118 = vrot.slane %v2676, 7
        %v3120 = vsel %vm1160, 0.0, %v3118
        %s3121 = scalar_lea.vmem %s4, 24
        %v3122 = vld [vmem:[%s3121] sm:$0xff]
        %v3124 = vsel %vm2708, %v3120, 0
        %3126 = vmatprep.subr.mxu0 0.0
        %3127 = vmatpush1.msra.mxu0 0.0
        %3128 = vmatprep.subr.mxu0 0.0
        %3129 = vmatpush1.msra.mxu0 0.0
        %3130 = vmatprep.subr.mxu0 0.0
        %3131 = vmatpush1.msra.mxu0 0.0
        %3132 = vmatprep.subr.mxu0 0.0
        %3133 = vmatpush1.msra.mxu0 0.0
        %3134 = vmatprep.subr.mxu0 0.0
        %3135 = vmatpush1.msra.mxu0 0.0
        %3136 = vmatprep.subr.mxu0 0.0
        %3137 = vmatpush1.msra.mxu0 0.0
        %3138 = vmatprep.subr.mxu0 0.0
        %3139 = vmatpush1.msra.mxu0 0.0
        %3140 = vmatprep.subr.mxu0 0.0
        %3141 = vmatpush1.msra.mxu0 0.0
        %3142 = vmatprep.subr.mxu0 0.0
        %3143 = vmatpush1.msra.mxu0 0.0
        %3144 = vmatprep.subr.mxu0 0.0
        %3145 = vmatpush1.msra.mxu0 0.0
        %3146 = vmatprep.subr.mxu0 0.0
        %3147 = vmatpush1.msra.mxu0 0.0
        %3148 = vmatprep.subr.mxu0 0.0
        %3149 = vmatpush1.msra.mxu0 0.0
        %3150 = vmatprep.subr.mxu0 0.0
        %3151 = vmatpush1.msra.mxu0 0.0
        %3152 = vmatprep.subr.mxu0 0.0
        %3153 = vmatpush1.msra.mxu0 0.0
        %3154 = vmatprep.subr.mxu0 0.0
        %3155 = vmatpush1.msra.mxu0 0.0
        %3156 = vmatprep.subr.mxu0 0.0
        %3157 = vmatpush1.msra.mxu0 %v3122
        %3158 = vmatprep.subr.mxu0 0.0
        %3159 = vmatpush2.msra.mxu0 0.0
        %3160 = vmatprep.subr.mxu0 0.0
        %3161 = vmatpush2.msra.mxu0 0.0
        %3162 = vmatprep.subr.mxu0 0.0
        %3163 = vmatpush2.msra.mxu0 0.0
        %3164 = vmatprep.subr.mxu0 0.0
        %3165 = vmatpush2.msra.mxu0 0.0
        %3166 = vmatprep.subr.mxu0 0.0
        %3167 = vmatpush2.msra.mxu0 0.0
        %3168 = vmatprep.subr.mxu0 0.0
        %3169 = vmatpush2.msra.mxu0 0.0
        %3170 = vmatprep.subr.mxu0 0.0
        %3171 = vmatpush2.msra.mxu0 0.0
        %3172 = vmatprep.subr.mxu0 0.0
        %3173 = vmatpush2.msra.mxu0 0.0
        %3174 = vmatprep.subr.mxu0 0.0
        %3175 = vmatpush2.msra.mxu0 0.0
        %3176 = vmatprep.subr.mxu0 0.0
        %3177 = vmatpush2.msra.mxu0 0.0
        %3178 = vmatprep.subr.mxu0 0.0
        %3179 = vmatpush2.msra.mxu0 0.0
        %3180 = vmatprep.subr.mxu0 0.0
        %3181 = vmatpush2.msra.mxu0 0.0
        %3182 = vmatprep.subr.mxu0 0.0
        %3183 = vmatpush2.msra.mxu0 0.0
        %3184 = vmatprep.subr.mxu0 0.0
        %3185 = vmatpush2.msra.mxu0 0.0
        %3186 = vmatprep.subr.mxu0 0.0
        %3187 = vmatpush2.msra.mxu0 0.0
        %3188 = vmatprep.subr.mxu0 0.0
        %3189 = vmatpush2.msra.mxu0 0.0
        %3190 = vmatprep.mubr.f32.mxu0 0.0
        %3191 = vmatmul.mubr.f32.gmra.mxu0 %v2833
        %v3192 = vpop.f32.mrf.mxu0
        %v3193 = vadd.f32 0.0, %v3192
        %v3194 = vpop.f32.mrf.mxu0
        %3195 = vmatprep.mubr.f32.mxu0 0.0
        %3196 = vmatmul.mubr.f32.gmra.mxu0 %v2836
        %v3197 = vpop.f32.mrf.mxu0
        %v3198 = vadd.f32 0.0, %v3197
        %v3199 = vpop.f32.mrf.mxu0
        %3200 = vmatprep.mubr.f32.mxu0 0.0
        %3201 = vmatmul.mubr.f32.gmra.mxu0 %v2839
        %v3202 = vpop.f32.mrf.mxu0
        %v3203 = vadd.f32 0.0, %v3202
        %v3204 = vpop.f32.mrf.mxu0
        %3205 = vmatprep.mubr.f32.mxu0 0.0
        %3206 = vmatmul.mubr.f32.gmra.mxu0 %v2842
        %v3207 = vpop.f32.mrf.mxu0
        %v3208 = vadd.f32 0.0, %v3207
        %v3209 = vpop.f32.mrf.mxu0
        %3210 = vmatprep.mubr.f32.mxu0 0.0
        %3211 = vmatmul.mubr.f32.gmra.mxu0 %v2845
        %v3212 = vpop.f32.mrf.mxu0
        %v3213 = vadd.f32 0.0, %v3212
        %v3214 = vpop.f32.mrf.mxu0
        %3215 = vmatprep.mubr.f32.mxu0 0.0
        %3216 = vmatmul.mubr.f32.gmra.mxu0 %v2848
        %v3217 = vpop.f32.mrf.mxu0
        %v3218 = vadd.f32 0.0, %v3217
        %v3219 = vpop.f32.mrf.mxu0
        %3220 = vmatprep.mubr.f32.mxu0 0.0
        %3221 = vmatmul.mubr.f32.gmra.mxu0 %v2851
        %v3222 = vpop.f32.mrf.mxu0
        %v3223 = vadd.f32 0.0, %v3222
        %v3224 = vpop.f32.mrf.mxu0
        %3225 = vmatprep.mubr.f32.mxu0 0.0
        %3226 = vmatmul.mubr.f32.gmra.mxu0 %v3124
        %v3227 = vpop.f32.mrf.mxu0
        %v3228 = vadd.f32 0.0, %v3227
        %v3229 = vpop.f32.mrf.mxu0
        %3230 = vdwg.mxu0
        %v3231 = vadd.f32 %v3109, %v3193
        %v3232 = vadd.f32 %v3110, %v3198
        %v3233 = vadd.f32 %v3111, %v3203
        %v3234 = vadd.f32 %v3112, %v3208
        %v3235 = vadd.f32 %v3113, %v3213
        %v3236 = vadd.f32 %v3114, %v3218
        %v3237 = vadd.f32 %v3115, %v3223
        %v3238 = vadd.f32 %v3116, %v3228
        %s3239 = scalar_lea.vmem %s4, 32
        %v3240 = vld [vmem:[%s3239] sm:$0xff]
        %v3241 = vsel %vm2708, %v2676, 0
        %3243 = vmatprep.subr.mxu0 0.0
        %3244 = vmatpush1.msra.mxu0 0.0
        %3245 = vmatprep.subr.mxu0 0.0
        %3246 = vmatpush1.msra.mxu0 0.0
        %3247 = vmatprep.subr.mxu0 0.0
        %3248 = vmatpush1.msra.mxu0 0.0
        %3249 = vmatprep.subr.mxu0 0.0
        %3250 = vmatpush1.msra.mxu0 0.0
        %3251 = vmatprep.subr.mxu0 0.0
        %3252 = vmatpush1.msra.mxu0 0.0
        %3253 = vmatprep.subr.mxu0 0.0
        %3254 = vmatpush1.msra.mxu0 0.0
        %3255 = vmatprep.subr.mxu0 0.0
        %3256 = vmatpush1.msra.mxu0 0.0
        %3257 = vmatprep.subr.mxu0 0.0
        %3258 = vmatpush1.msra.mxu0 0.0
        %3259 = vmatprep.subr.mxu0 0.0
        %3260 = vmatpush1.msra.mxu0 0.0
        %3261 = vmatprep.subr.mxu0 0.0
        %3262 = vmatpush1.msra.mxu0 0.0
        %3263 = vmatprep.subr.mxu0 0.0
        %3264 = vmatpush1.msra.mxu0 0.0
        %3265 = vmatprep.subr.mxu0 0.0
        %3266 = vmatpush1.msra.mxu0 0.0
        %3267 = vmatprep.subr.mxu0 0.0
        %3268 = vmatpush1.msra.mxu0 0.0
        %3269 = vmatprep.subr.mxu0 0.0
        %3270 = vmatpush1.msra.mxu0 0.0
        %3271 = vmatprep.subr.mxu0 0.0
        %3272 = vmatpush1.msra.mxu0 0.0
        %3273 = vmatprep.subr.mxu0 0.0
        %3274 = vmatpush1.msra.mxu0 %v3240
        %3275 = vmatprep.subr.mxu0 0.0
        %3276 = vmatpush2.msra.mxu0 0.0
        %3277 = vmatprep.subr.mxu0 0.0
        %3278 = vmatpush2.msra.mxu0 0.0
        %3279 = vmatprep.subr.mxu0 0.0
        %3280 = vmatpush2.msra.mxu0 0.0
        %3281 = vmatprep.subr.mxu0 0.0
        %3282 = vmatpush2.msra.mxu0 0.0
        %3283 = vmatprep.subr.mxu0 0.0
        %3284 = vmatpush2.msra.mxu0 0.0
        %3285 = vmatprep.subr.mxu0 0.0
        %3286 = vmatpush2.msra.mxu0 0.0
        %3287 = vmatprep.subr.mxu0 0.0
        %3288 = vmatpush2.msra.mxu0 0.0
        %3289 = vmatprep.subr.mxu0 0.0
        %3290 = vmatpush2.msra.mxu0 0.0
        %3291 = vmatprep.subr.mxu0 0.0
        %3292 = vmatpush2.msra.mxu0 0.0
        %3293 = vmatprep.subr.mxu0 0.0
        %3294 = vmatpush2.msra.mxu0 0.0
        %3295 = vmatprep.subr.mxu0 0.0
        %3296 = vmatpush2.msra.mxu0 0.0
        %3297 = vmatprep.subr.mxu0 0.0
        %3298 = vmatpush2.msra.mxu0 0.0
        %3299 = vmatprep.subr.mxu0 0.0
        %3300 = vmatpush2.msra.mxu0 0.0
        %3301 = vmatprep.subr.mxu0 0.0
        %3302 = vmatpush2.msra.mxu0 0.0
        %3303 = vmatprep.subr.mxu0 0.0
        %3304 = vmatpush2.msra.mxu0 0.0
        %3305 = vmatprep.subr.mxu0 0.0
        %3306 = vmatpush2.msra.mxu0 0.0
        %3307 = vmatprep.mubr.f32.mxu0 0.0
        %3308 = vmatmul.mubr.f32.gmra.mxu0 %v2711
        %v3309 = vpop.f32.mrf.mxu0
        %v3310 = vadd.f32 0.0, %v3309
        %v3311 = vpop.f32.mrf.mxu0
        %3312 = vmatprep.mubr.f32.mxu0 0.0
        %3313 = vmatmul.mubr.f32.gmra.mxu0 %v2713
        %v3314 = vpop.f32.mrf.mxu0
        %v3315 = vadd.f32 0.0, %v3314
        %v3316 = vpop.f32.mrf.mxu0
        %3317 = vmatprep.mubr.f32.mxu0 0.0
        %3318 = vmatmul.mubr.f32.gmra.mxu0 %v2715
        %v3319 = vpop.f32.mrf.mxu0
        %v3320 = vadd.f32 0.0, %v3319
        %v3321 = vpop.f32.mrf.mxu0
        %3322 = vmatprep.mubr.f32.mxu0 0.0
        %3323 = vmatmul.mubr.f32.gmra.mxu0 %v2717
        %v3324 = vpop.f32.mrf.mxu0
        %v3325 = vadd.f32 0.0, %v3324
        %v3326 = vpop.f32.mrf.mxu0
        %3327 = vmatprep.mubr.f32.mxu0 0.0
        %3328 = vmatmul.mubr.f32.gmra.mxu0 %v2719
        %v3329 = vpop.f32.mrf.mxu0
        %v3330 = vadd.f32 0.0, %v3329
        %v3331 = vpop.f32.mrf.mxu0
        %3332 = vmatprep.mubr.f32.mxu0 0.0
        %3333 = vmatmul.mubr.f32.gmra.mxu0 %v2721
        %v3334 = vpop.f32.mrf.mxu0
        %v3335 = vadd.f32 0.0, %v3334
        %v3336 = vpop.f32.mrf.mxu0
        %3337 = vmatprep.mubr.f32.mxu0 0.0
        %3338 = vmatmul.mubr.f32.gmra.mxu0 %v2723
        %v3339 = vpop.f32.mrf.mxu0
        %v3340 = vadd.f32 0.0, %v3339
        %v3341 = vpop.f32.mrf.mxu0
        %3342 = vmatprep.mubr.f32.mxu0 0.0
        %3343 = vmatmul.mubr.f32.gmra.mxu0 %v3241
        %v3344 = vpop.f32.mrf.mxu0
        %v3345 = vadd.f32 0.0, %v3344
        %v3346 = vpop.f32.mrf.mxu0
        %3347 = vdwg.mxu0
        %v3348 = vadd.f32 %v3231, %v3310
        %v3349 = vadd.f32 %v3232, %v3315
        %v3350 = vadd.f32 %v3233, %v3320
        %v3351 = vadd.f32 %v3234, %v3325
        %v3352 = vadd.f32 %v3235, %v3330
        %v3353 = vadd.f32 %v3236, %v3335
        %v3354 = vadd.f32 %v3237, %v3340
        %v3355 = vadd.f32 %v3238, %v3345
        %v3356 = vrot.slane %v2676, 1
        %v3358 = vsel %vm1446, %v3356, 0.0
        %s3359 = scalar_lea.vmem %s4, 40
        %v3360 = vld [vmem:[%s3359] sm:$0xff]
        %v3362 = vsel %vm2708, %v3358, 0
        %3364 = vmatprep.subr.mxu0 0.0
        %3365 = vmatpush1.msra.mxu0 0.0
        %3366 = vmatprep.subr.mxu0 0.0
        %3367 = vmatpush1.msra.mxu0 0.0
        %3368 = vmatprep.subr.mxu0 0.0
        %3369 = vmatpush1.msra.mxu0 0.0
        %3370 = vmatprep.subr.mxu0 0.0
        %3371 = vmatpush1.msra.mxu0 0.0
        %3372 = vmatprep.subr.mxu0 0.0
        %3373 = vmatpush1.msra.mxu0 0.0
        %3374 = vmatprep.subr.mxu0 0.0
        %3375 = vmatpush1.msra.mxu0 0.0
        %3376 = vmatprep.subr.mxu0 0.0
        %3377 = vmatpush1.msra.mxu0 0.0
        %3378 = vmatprep.subr.mxu0 0.0
        %3379 = vmatpush1.msra.mxu0 0.0
        %3380 = vmatprep.subr.mxu0 0.0
        %3381 = vmatpush1.msra.mxu0 0.0
        %3382 = vmatprep.subr.mxu0 0.0
        %3383 = vmatpush1.msra.mxu0 0.0
        %3384 = vmatprep.subr.mxu0 0.0
        %3385 = vmatpush1.msra.mxu0 0.0
        %3386 = vmatprep.subr.mxu0 0.0
        %3387 = vmatpush1.msra.mxu0 0.0
        %3388 = vmatprep.subr.mxu0 0.0
        %3389 = vmatpush1.msra.mxu0 0.0
        %3390 = vmatprep.subr.mxu0 0.0
        %3391 = vmatpush1.msra.mxu0 0.0
        %3392 = vmatprep.subr.mxu0 0.0
        %3393 = vmatpush1.msra.mxu0 0.0
        %3394 = vmatprep.subr.mxu0 0.0
        %3395 = vmatpush1.msra.mxu0 %v3360
        %3396 = vmatprep.subr.mxu0 0.0
        %3397 = vmatpush2.msra.mxu0 0.0
        %3398 = vmatprep.subr.mxu0 0.0
        %3399 = vmatpush2.msra.mxu0 0.0
        %3400 = vmatprep.subr.mxu0 0.0
        %3401 = vmatpush2.msra.mxu0 0.0
        %3402 = vmatprep.subr.mxu0 0.0
        %3403 = vmatpush2.msra.mxu0 0.0
        %3404 = vmatprep.subr.mxu0 0.0
        %3405 = vmatpush2.msra.mxu0 0.0
        %3406 = vmatprep.subr.mxu0 0.0
        %3407 = vmatpush2.msra.mxu0 0.0
        %3408 = vmatprep.subr.mxu0 0.0
        %3409 = vmatpush2.msra.mxu0 0.0
        %3410 = vmatprep.subr.mxu0 0.0
        %3411 = vmatpush2.msra.mxu0 0.0
        %3412 = vmatprep.subr.mxu0 0.0
        %3413 = vmatpush2.msra.mxu0 0.0
        %3414 = vmatprep.subr.mxu0 0.0
        %3415 = vmatpush2.msra.mxu0 0.0
        %3416 = vmatprep.subr.mxu0 0.0
        %3417 = vmatpush2.msra.mxu0 0.0
        %3418 = vmatprep.subr.mxu0 0.0
        %3419 = vmatpush2.msra.mxu0 0.0
        %3420 = vmatprep.subr.mxu0 0.0
        %3421 = vmatpush2.msra.mxu0 0.0
        %3422 = vmatprep.subr.mxu0 0.0
        %3423 = vmatpush2.msra.mxu0 0.0
        %3424 = vmatprep.subr.mxu0 0.0
        %3425 = vmatpush2.msra.mxu0 0.0
        %3426 = vmatprep.subr.mxu0 0.0
        %3427 = vmatpush2.msra.mxu0 0.0
        %3428 = vmatprep.mubr.f32.mxu0 0.0
        %3429 = vmatmul.mubr.f32.gmra.mxu0 %v2984
        %v3430 = vpop.f32.mrf.mxu0
        %v3431 = vadd.f32 0.0, %v3430
        %v3432 = vpop.f32.mrf.mxu0
        %3433 = vmatprep.mubr.f32.mxu0 0.0
        %3434 = vmatmul.mubr.f32.gmra.mxu0 %v2987
        %v3435 = vpop.f32.mrf.mxu0
        %v3436 = vadd.f32 0.0, %v3435
        %v3437 = vpop.f32.mrf.mxu0
        %3438 = vmatprep.mubr.f32.mxu0 0.0
        %3439 = vmatmul.mubr.f32.gmra.mxu0 %v2990
        %v3440 = vpop.f32.mrf.mxu0
        %v3441 = vadd.f32 0.0, %v3440
        %v3442 = vpop.f32.mrf.mxu0
        %3443 = vmatprep.mubr.f32.mxu0 0.0
        %3444 = vmatmul.mubr.f32.gmra.mxu0 %v2993
        %v3445 = vpop.f32.mrf.mxu0
        %v3446 = vadd.f32 0.0, %v3445
        %v3447 = vpop.f32.mrf.mxu0
        %3448 = vmatprep.mubr.f32.mxu0 0.0
        %3449 = vmatmul.mubr.f32.gmra.mxu0 %v2996
        %v3450 = vpop.f32.mrf.mxu0
        %v3451 = vadd.f32 0.0, %v3450
        %v3452 = vpop.f32.mrf.mxu0
        %3453 = vmatprep.mubr.f32.mxu0 0.0
        %3454 = vmatmul.mubr.f32.gmra.mxu0 %v2999
        %v3455 = vpop.f32.mrf.mxu0
        %v3456 = vadd.f32 0.0, %v3455
        %v3457 = vpop.f32.mrf.mxu0
        %3458 = vmatprep.mubr.f32.mxu0 0.0
        %3459 = vmatmul.mubr.f32.gmra.mxu0 %v3002
        %v3460 = vpop.f32.mrf.mxu0
        %v3461 = vadd.f32 0.0, %v3460
        %v3462 = vpop.f32.mrf.mxu0
        %3463 = vmatprep.mubr.f32.mxu0 0.0
        %3464 = vmatmul.mubr.f32.gmra.mxu0 %v3362
        %v3465 = vpop.f32.mrf.mxu0
        %v3466 = vadd.f32 0.0, %v3465
        %v3467 = vpop.f32.mrf.mxu0
        %3468 = vdwg.mxu0
        %v3469 = vadd.f32 %v3348, %v3431
        %v3470 = vadd.f32 %v3349, %v3436
        %v3471 = vadd.f32 %v3350, %v3441
        %v3472 = vadd.f32 %v3351, %v3446
        %v3473 = vadd.f32 %v3352, %v3451
        %v3474 = vadd.f32 %v3353, %v3456
        %v3475 = vadd.f32 %v3354, %v3461
        %v3476 = vadd.f32 %v3355, %v3466
        %s3477 = scalar_lea.vmem %s4, 48
        %v3478 = vld [vmem:[%s3477] sm:$0xff]
        %3479 = vmatprep.subr.mxu0 0.0
        %3480 = vmatpush1.msra.mxu0 0.0
        %3481 = vmatprep.subr.mxu0 0.0
        %3482 = vmatpush1.msra.mxu0 0.0
        %3483 = vmatprep.subr.mxu0 0.0
        %3484 = vmatpush1.msra.mxu0 0.0
        %3485 = vmatprep.subr.mxu0 0.0
        %3486 = vmatpush1.msra.mxu0 0.0
        %3487 = vmatprep.subr.mxu0 0.0
        %3488 = vmatpush1.msra.mxu0 0.0
        %3489 = vmatprep.subr.mxu0 0.0
        %3490 = vmatpush1.msra.mxu0 0.0
        %3491 = vmatprep.subr.mxu0 0.0
        %3492 = vmatpush1.msra.mxu0 0.0
        %3493 = vmatprep.subr.mxu0 0.0
        %3494 = vmatpush1.msra.mxu0 0.0
        %3495 = vmatprep.subr.mxu0 0.0
        %3496 = vmatpush1.msra.mxu0 0.0
        %3497 = vmatprep.subr.mxu0 0.0
        %3498 = vmatpush1.msra.mxu0 0.0
        %3499 = vmatprep.subr.mxu0 0.0
        %3500 = vmatpush1.msra.mxu0 0.0
        %3501 = vmatprep.subr.mxu0 0.0
        %3502 = vmatpush1.msra.mxu0 0.0
        %3503 = vmatprep.subr.mxu0 0.0
        %3504 = vmatpush1.msra.mxu0 0.0
        %3505 = vmatprep.subr.mxu0 0.0
        %3506 = vmatpush1.msra.mxu0 0.0
        %3507 = vmatprep.subr.mxu0 0.0
        %3508 = vmatpush1.msra.mxu0 0.0
        %3509 = vmatprep.subr.mxu0 0.0
        %3510 = vmatpush1.msra.mxu0 %v3478
        %3511 = vmatprep.subr.mxu0 0.0
        %3512 = vmatpush2.msra.mxu0 0.0
        %3513 = vmatprep.subr.mxu0 0.0
        %3514 = vmatpush2.msra.mxu0 0.0
        %3515 = vmatprep.subr.mxu0 0.0
        %3516 = vmatpush2.msra.mxu0 0.0
        %3517 = vmatprep.subr.mxu0 0.0
        %3518 = vmatpush2.msra.mxu0 0.0
        %3519 = vmatprep.subr.mxu0 0.0
        %3520 = vmatpush2.msra.mxu0 0.0
        %3521 = vmatprep.subr.mxu0 0.0
        %3522 = vmatpush2.msra.mxu0 0.0
        %3523 = vmatprep.subr.mxu0 0.0
        %3524 = vmatpush2.msra.mxu0 0.0
        %3525 = vmatprep.subr.mxu0 0.0
        %3526 = vmatpush2.msra.mxu0 0.0
        %3527 = vmatprep.subr.mxu0 0.0
        %3528 = vmatpush2.msra.mxu0 0.0
        %3529 = vmatprep.subr.mxu0 0.0
        %3530 = vmatpush2.msra.mxu0 0.0
        %3531 = vmatprep.subr.mxu0 0.0
        %3532 = vmatpush2.msra.mxu0 0.0
        %3533 = vmatprep.subr.mxu0 0.0
        %3534 = vmatpush2.msra.mxu0 0.0
        %3535 = vmatprep.subr.mxu0 0.0
        %3536 = vmatpush2.msra.mxu0 0.0
        %3537 = vmatprep.subr.mxu0 0.0
        %3538 = vmatpush2.msra.mxu0 0.0
        %3539 = vmatprep.subr.mxu0 0.0
        %3540 = vmatpush2.msra.mxu0 0.0
        %3541 = vmatprep.subr.mxu0 0.0
        %3542 = vmatpush2.msra.mxu0 0.0
        %3543 = vmatprep.mubr.f32.mxu0 0.0
        %3544 = vmatmul.mubr.f32.gmra.mxu0 %v2836
        %v3545 = vpop.f32.mrf.mxu0
        %v3546 = vadd.f32 0.0, %v3545
        %v3547 = vpop.f32.mrf.mxu0
        %3548 = vmatprep.mubr.f32.mxu0 0.0
        %3549 = vmatmul.mubr.f32.gmra.mxu0 %v2839
        %v3550 = vpop.f32.mrf.mxu0
        %v3551 = vadd.f32 0.0, %v3550
        %v3552 = vpop.f32.mrf.mxu0
        %3553 = vmatprep.mubr.f32.mxu0 0.0
        %3554 = vmatmul.mubr.f32.gmra.mxu0 %v2842
        %v3555 = vpop.f32.mrf.mxu0
        %v3556 = vadd.f32 0.0, %v3555
        %v3557 = vpop.f32.mrf.mxu0
        %3558 = vmatprep.mubr.f32.mxu0 0.0
        %3559 = vmatmul.mubr.f32.gmra.mxu0 %v2845
        %v3560 = vpop.f32.mrf.mxu0
        %v3561 = vadd.f32 0.0, %v3560
        %v3562 = vpop.f32.mrf.mxu0
        %3563 = vmatprep.mubr.f32.mxu0 0.0
        %3564 = vmatmul.mubr.f32.gmra.mxu0 %v2848
        %v3565 = vpop.f32.mrf.mxu0
        %v3566 = vadd.f32 0.0, %v3565
        %v3567 = vpop.f32.mrf.mxu0
        %3568 = vmatprep.mubr.f32.mxu0 0.0
        %3569 = vmatmul.mubr.f32.gmra.mxu0 %v2851
        %v3570 = vpop.f32.mrf.mxu0
        %v3571 = vadd.f32 0.0, %v3570
        %v3572 = vpop.f32.mrf.mxu0
        %3573 = vmatprep.mubr.f32.mxu0 0.0
        %3574 = vmatmul.mubr.f32.gmra.mxu0 %v3124
        %v3575 = vpop.f32.mrf.mxu0
        %v3576 = vadd.f32 0.0, %v3575
        %v3577 = vpop.f32.mrf.mxu0
        %3578 = vmatprep.mubr.f32.mxu0 0.0
        %3579 = vmatmul.mubr.f32.gmra.mxu0 %v2830
        %v3580 = vpop.f32.mrf.mxu0
        %v3581 = vadd.f32 0.0, %v3580
        %v3582 = vpop.f32.mrf.mxu0
        %3583 = vdwg.mxu0
        %v3584 = vadd.f32 %v3469, %v3546
        %v3585 = vadd.f32 %v3470, %v3551
        %v3586 = vadd.f32 %v3471, %v3556
        %v3587 = vadd.f32 %v3472, %v3561
        %v3588 = vadd.f32 %v3473, %v3566
        %v3589 = vadd.f32 %v3474, %v3571
        %v3590 = vadd.f32 %v3475, %v3576
        %v3591 = vadd.f32 %v3476, %v3581
        %s3592 = scalar_lea.vmem %s4, 56
        %v3593 = vld [vmem:[%s3592] sm:$0xff]
        %3594 = vmatprep.subr.mxu0 0.0
        %3595 = vmatpush1.msra.mxu0 0.0
        %3596 = vmatprep.subr.mxu0 0.0
        %3597 = vmatpush1.msra.mxu0 0.0
        %3598 = vmatprep.subr.mxu0 0.0
        %3599 = vmatpush1.msra.mxu0 0.0
        %3600 = vmatprep.subr.mxu0 0.0
        %3601 = vmatpush1.msra.mxu0 0.0
        %3602 = vmatprep.subr.mxu0 0.0
        %3603 = vmatpush1.msra.mxu0 0.0
        %3604 = vmatprep.subr.mxu0 0.0
        %3605 = vmatpush1.msra.mxu0 0.0
        %3606 = vmatprep.subr.mxu0 0.0
        %3607 = vmatpush1.msra.mxu0 0.0
        %3608 = vmatprep.subr.mxu0 0.0
        %3609 = vmatpush1.msra.mxu0 0.0
        %3610 = vmatprep.subr.mxu0 0.0
        %3611 = vmatpush1.msra.mxu0 0.0
        %3612 = vmatprep.subr.mxu0 0.0
        %3613 = vmatpush1.msra.mxu0 0.0
        %3614 = vmatprep.subr.mxu0 0.0
        %3615 = vmatpush1.msra.mxu0 0.0
        %3616 = vmatprep.subr.mxu0 0.0
        %3617 = vmatpush1.msra.mxu0 0.0
        %3618 = vmatprep.subr.mxu0 0.0
        %3619 = vmatpush1.msra.mxu0 0.0
        %3620 = vmatprep.subr.mxu0 0.0
        %3621 = vmatpush1.msra.mxu0 0.0
        %3622 = vmatprep.subr.mxu0 0.0
        %3623 = vmatpush1.msra.mxu0 0.0
        %3624 = vmatprep.subr.mxu0 0.0
        %3625 = vmatpush1.msra.mxu0 %v3593
        %3626 = vmatprep.subr.mxu0 0.0
        %3627 = vmatpush2.msra.mxu0 0.0
        %3628 = vmatprep.subr.mxu0 0.0
        %3629 = vmatpush2.msra.mxu0 0.0
        %3630 = vmatprep.subr.mxu0 0.0
        %3631 = vmatpush2.msra.mxu0 0.0
        %3632 = vmatprep.subr.mxu0 0.0
        %3633 = vmatpush2.msra.mxu0 0.0
        %3634 = vmatprep.subr.mxu0 0.0
        %3635 = vmatpush2.msra.mxu0 0.0
        %3636 = vmatprep.subr.mxu0 0.0
        %3637 = vmatpush2.msra.mxu0 0.0
        %3638 = vmatprep.subr.mxu0 0.0
        %3639 = vmatpush2.msra.mxu0 0.0
        %3640 = vmatprep.subr.mxu0 0.0
        %3641 = vmatpush2.msra.mxu0 0.0
        %3642 = vmatprep.subr.mxu0 0.0
        %3643 = vmatpush2.msra.mxu0 0.0
        %3644 = vmatprep.subr.mxu0 0.0
        %3645 = vmatpush2.msra.mxu0 0.0
        %3646 = vmatprep.subr.mxu0 0.0
        %3647 = vmatpush2.msra.mxu0 0.0
        %3648 = vmatprep.subr.mxu0 0.0
        %3649 = vmatpush2.msra.mxu0 0.0
        %3650 = vmatprep.subr.mxu0 0.0
        %3651 = vmatpush2.msra.mxu0 0.0
        %3652 = vmatprep.subr.mxu0 0.0
        %3653 = vmatpush2.msra.mxu0 0.0
        %3654 = vmatprep.subr.mxu0 0.0
        %3655 = vmatpush2.msra.mxu0 0.0
        %3656 = vmatprep.subr.mxu0 0.0
        %3657 = vmatpush2.msra.mxu0 0.0
        %3658 = vmatprep.mubr.f32.mxu0 0.0
        %3659 = vmatmul.mubr.f32.gmra.mxu0 %v2713
        %v3660 = vpop.f32.mrf.mxu0
        %v3661 = vadd.f32 0.0, %v3660
        %v3662 = vpop.f32.mrf.mxu0
        %3663 = vmatprep.mubr.f32.mxu0 0.0
        %3664 = vmatmul.mubr.f32.gmra.mxu0 %v2715
        %v3665 = vpop.f32.mrf.mxu0
        %v3666 = vadd.f32 0.0, %v3665
        %v3667 = vpop.f32.mrf.mxu0
        %3668 = vmatprep.mubr.f32.mxu0 0.0
        %3669 = vmatmul.mubr.f32.gmra.mxu0 %v2717
        %v3670 = vpop.f32.mrf.mxu0
        %v3671 = vadd.f32 0.0, %v3670
        %v3672 = vpop.f32.mrf.mxu0
        %3673 = vmatprep.mubr.f32.mxu0 0.0
        %3674 = vmatmul.mubr.f32.gmra.mxu0 %v2719
        %v3675 = vpop.f32.mrf.mxu0
        %v3676 = vadd.f32 0.0, %v3675
        %v3677 = vpop.f32.mrf.mxu0
        %3678 = vmatprep.mubr.f32.mxu0 0.0
        %3679 = vmatmul.mubr.f32.gmra.mxu0 %v2721
        %v3680 = vpop.f32.mrf.mxu0
        %v3681 = vadd.f32 0.0, %v3680
        %v3682 = vpop.f32.mrf.mxu0
        %3683 = vmatprep.mubr.f32.mxu0 0.0
        %3684 = vmatmul.mubr.f32.gmra.mxu0 %v2723
        %v3685 = vpop.f32.mrf.mxu0
        %v3686 = vadd.f32 0.0, %v3685
        %v3687 = vpop.f32.mrf.mxu0
        %3688 = vmatprep.mubr.f32.mxu0 0.0
        %3689 = vmatmul.mubr.f32.gmra.mxu0 %v3241
        %v3690 = vpop.f32.mrf.mxu0
        %v3691 = vadd.f32 0.0, %v3690
        %v3692 = vpop.f32.mrf.mxu0
        %3693 = vmatprep.mubr.f32.mxu0 0.0
        %3694 = vmatmul.mubr.f32.gmra.mxu0 %v2709
        %v3695 = vpop.f32.mrf.mxu0
        %v3696 = vadd.f32 0.0, %v3695
        %v3697 = vpop.f32.mrf.mxu0
        %3698 = vdwg.mxu0
        %v3699 = vadd.f32 %v3584, %v3661
        %v3700 = vadd.f32 %v3585, %v3666
        %v3701 = vadd.f32 %v3586, %v3671
        %v3702 = vadd.f32 %v3587, %v3676
        %v3703 = vadd.f32 %v3588, %v3681
        %v3704 = vadd.f32 %v3589, %v3686
        %v3705 = vadd.f32 %v3590, %v3691
        %v3706 = vadd.f32 %v3591, %v3696
        %s3707 = scalar_lea.vmem %s4, 64
        %v3708 = vld [vmem:[%s3707] sm:$0xff]
        %3709 = vmatprep.subr.mxu0 0.0
        %3710 = vmatpush1.msra.mxu0 0.0
        %3711 = vmatprep.subr.mxu0 0.0
        %3712 = vmatpush1.msra.mxu0 0.0
        %3713 = vmatprep.subr.mxu0 0.0
        %3714 = vmatpush1.msra.mxu0 0.0
        %3715 = vmatprep.subr.mxu0 0.0
        %3716 = vmatpush1.msra.mxu0 0.0
        %3717 = vmatprep.subr.mxu0 0.0
        %3718 = vmatpush1.msra.mxu0 0.0
        %3719 = vmatprep.subr.mxu0 0.0
        %3720 = vmatpush1.msra.mxu0 0.0
        %3721 = vmatprep.subr.mxu0 0.0
        %3722 = vmatpush1.msra.mxu0 0.0
        %3723 = vmatprep.subr.mxu0 0.0
        %3724 = vmatpush1.msra.mxu0 0.0
        %3725 = vmatprep.subr.mxu0 0.0
        %3726 = vmatpush1.msra.mxu0 0.0
        %3727 = vmatprep.subr.mxu0 0.0
        %3728 = vmatpush1.msra.mxu0 0.0
        %3729 = vmatprep.subr.mxu0 0.0
        %3730 = vmatpush1.msra.mxu0 0.0
        %3731 = vmatprep.subr.mxu0 0.0
        %3732 = vmatpush1.msra.mxu0 0.0
        %3733 = vmatprep.subr.mxu0 0.0
        %3734 = vmatpush1.msra.mxu0 0.0
        %3735 = vmatprep.subr.mxu0 0.0
        %3736 = vmatpush1.msra.mxu0 0.0
        %3737 = vmatprep.subr.mxu0 0.0
        %3738 = vmatpush1.msra.mxu0 0.0
        %3739 = vmatprep.subr.mxu0 0.0
        %3740 = vmatpush1.msra.mxu0 %v3708
        %3741 = vmatprep.subr.mxu0 0.0
        %3742 = vmatpush2.msra.mxu0 0.0
        %3743 = vmatprep.subr.mxu0 0.0
        %3744 = vmatpush2.msra.mxu0 0.0
        %3745 = vmatprep.subr.mxu0 0.0
        %3746 = vmatpush2.msra.mxu0 0.0
        %3747 = vmatprep.subr.mxu0 0.0
        %3748 = vmatpush2.msra.mxu0 0.0
        %3749 = vmatprep.subr.mxu0 0.0
        %3750 = vmatpush2.msra.mxu0 0.0
        %3751 = vmatprep.subr.mxu0 0.0
        %3752 = vmatpush2.msra.mxu0 0.0
        %3753 = vmatprep.subr.mxu0 0.0
        %3754 = vmatpush2.msra.mxu0 0.0
        %3755 = vmatprep.subr.mxu0 0.0
        %3756 = vmatpush2.msra.mxu0 0.0
        %3757 = vmatprep.subr.mxu0 0.0
        %3758 = vmatpush2.msra.mxu0 0.0
        %3759 = vmatprep.subr.mxu0 0.0
        %3760 = vmatpush2.msra.mxu0 0.0
        %3761 = vmatprep.subr.mxu0 0.0
        %3762 = vmatpush2.msra.mxu0 0.0
        %3763 = vmatprep.subr.mxu0 0.0
        %3764 = vmatpush2.msra.mxu0 0.0
        %3765 = vmatprep.subr.mxu0 0.0
        %3766 = vmatpush2.msra.mxu0 0.0
        %3767 = vmatprep.subr.mxu0 0.0
        %3768 = vmatpush2.msra.mxu0 0.0
        %3769 = vmatprep.subr.mxu0 0.0
        %3770 = vmatpush2.msra.mxu0 0.0
        %3771 = vmatprep.subr.mxu0 0.0
        %3772 = vmatpush2.msra.mxu0 0.0
        %3773 = vmatprep.mubr.f32.mxu0 0.0
        %3774 = vmatmul.mubr.f32.gmra.mxu0 %v2987
        %v3775 = vpop.f32.mrf.mxu0
        %v3776 = vadd.f32 0.0, %v3775
        %v3777 = vpop.f32.mrf.mxu0
        %3778 = vmatprep.mubr.f32.mxu0 0.0
        %3779 = vmatmul.mubr.f32.gmra.mxu0 %v2990
        %v3780 = vpop.f32.mrf.mxu0
        %v3781 = vadd.f32 0.0, %v3780
        %v3782 = vpop.f32.mrf.mxu0
        %3783 = vmatprep.mubr.f32.mxu0 0.0
        %3784 = vmatmul.mubr.f32.gmra.mxu0 %v2993
        %v3785 = vpop.f32.mrf.mxu0
        %v3786 = vadd.f32 0.0, %v3785
        %v3787 = vpop.f32.mrf.mxu0
        %3788 = vmatprep.mubr.f32.mxu0 0.0
        %3789 = vmatmul.mubr.f32.gmra.mxu0 %v2996
        %v3790 = vpop.f32.mrf.mxu0
        %v3791 = vadd.f32 0.0, %v3790
        %v3792 = vpop.f32.mrf.mxu0
        %3793 = vmatprep.mubr.f32.mxu0 0.0
        %3794 = vmatmul.mubr.f32.gmra.mxu0 %v2999
        %v3795 = vpop.f32.mrf.mxu0
        %v3796 = vadd.f32 0.0, %v3795
        %v3797 = vpop.f32.mrf.mxu0
        %3798 = vmatprep.mubr.f32.mxu0 0.0
        %3799 = vmatmul.mubr.f32.gmra.mxu0 %v3002
        %v3800 = vpop.f32.mrf.mxu0
        %v3801 = vadd.f32 0.0, %v3800
        %v3802 = vpop.f32.mrf.mxu0
        %3803 = vmatprep.mubr.f32.mxu0 0.0
        %3804 = vmatmul.mubr.f32.gmra.mxu0 %v3362
        %v3805 = vpop.f32.mrf.mxu0
        %v3806 = vadd.f32 0.0, %v3805
        %v3807 = vpop.f32.mrf.mxu0
        %3808 = vmatprep.mubr.f32.mxu0 0.0
        %3809 = vmatmul.mubr.f32.gmra.mxu0 %v2981
        %v3810 = vpop.f32.mrf.mxu0
        %v3811 = vadd.f32 0.0, %v3810
        %v3812 = vpop.f32.mrf.mxu0
        %3813 = vdwg.mxu0
        %v3814 = vadd.f32 %v3699, %v3776
        %v3815 = vadd.f32 %v3700, %v3781
        %v3816 = vadd.f32 %v3701, %v3786
        %v3817 = vadd.f32 %v3702, %v3791
        %v3818 = vadd.f32 %v3703, %v3796
        %v3819 = vadd.f32 %v3704, %v3801
        %v3820 = vadd.f32 %v3705, %v3806
        %v3821 = vadd.f32 %v3706, %v3811
        %v3822 = vld [vmem:[%s5] sm:$0x1]
        %v3824 = vlaneseq
        %v3825 = vshrl.u32 %v3824, 7
        %v3826 = vsub.s32 0, %v3825
        %v3827 = vrot.slane %v3822, %v3826
        %v3829 = vmul.f32 %v3814, %v3827
        %v3830 = vmul.f32 %v3815, %v3827
        %v3831 = vmul.f32 %v3816, %v3827
        %v3832 = vmul.f32 %v3817, %v3827
        %v3833 = vmul.f32 %v3818, %v3827
        %v3834 = vmul.f32 %v3819, %v3827
        %v3835 = vmul.f32 %v3820, %v3827
        %v3836 = vmul.f32 %v3821, %v3827
        %v3837 = vld [vmem:[%s6] sm:$0x1]
        %v3839 = vlaneseq
        %v3840 = vshrl.u32 %v3839, 7
        %v3841 = vsub.s32 0, %v3840
        %v3842 = vrot.slane %v3837, %v3841
        %v3844 = vadd.f32 %v3829, %v3842
        %v3845 = vadd.f32 %v3830, %v3842
        %v3846 = vadd.f32 %v3831, %v3842
        %v3847 = vadd.f32 %v3832, %v3842
        %v3848 = vadd.f32 %v3833, %v3842
        %v3849 = vadd.f32 %v3834, %v3842
        %v3850 = vadd.f32 %v3835, %v3842
        %v3851 = vadd.f32 %v3836, %v3842
        %v3852 = vmax.f32 %v3844, 0.0
        %v3853 = vmax.f32 %v3845, 0.0
        %v3854 = vmax.f32 %v3846, 0.0
        %v3855 = vmax.f32 %v3847, 0.0
        %v3856 = vmax.f32 %v3848, 0.0
        %v3857 = vmax.f32 %v3849, 0.0
        %v3858 = vmax.f32 %v3850, 0.0
        %v3859 = vmax.f32 %v3851, 0.0
        %3860 = vst [vmem:[%s271] sm:$0xff] %v3852
        %3861 = vst [vmem:[%s271 + $0x8] sm:$0xff] %v3853
        %3862 = vst [vmem:[%s271 + $0x10] sm:$0xff] %v3854
        %3863 = vst [vmem:[%s271 + $0x18] sm:$0xff] %v3855
        %3864 = vst [vmem:[%s271 + $0x20] sm:$0xff] %v3856
        %3865 = vst [vmem:[%s271 + $0x28] sm:$0xff] %v3857
        %3866 = vst [vmem:[%s271 + $0x30] sm:$0xff] %v3858
        %3867 = vst [vmem:[%s271 + $0x38] sm:$0xff] %v3859
        %s3868 = sand.u32 %s181, 1
        %s3869 = scalar_lea.sflag [#allocation3], %s3868
        %s3870 = sand.u32 %s181, 1
        %s3871 = smul.addr %s3870, 64
        %s3872 = scalar_lea.vmem [#allocation2], %s3871
        // Predicated region
        $region49: #{tpu_custom_call.1} parent=47 // pred_check
          %p3873 = pneg %p191
        $region50: #{tpu_custom_call.1} parent=47 // pred_check_branch
          %3875 = sbr.rel (%p3873) target = $region52
        $region51: #{tpu_custom_call.1} parent=47 // pred_region
          %s3876 = smul.u32 8, %s21
          %s3878 = ssub.s32 1024, 1024
          %3879 = vsyncadd %s3869, %s3878
          %s3880 = smul.addr %s3876, 128
          %s3881 = scalar_lea.hbm %s7, %s3880
          %s3882 = sshll.u32 %s3872, 4
          %s3883 = int_to_ptr.vmem [resolvable:$true] %s3882
          %3888 = dma.vmem_to_hbm [thread:$0]  %s3883, 1024, %s3881, %s3869, 128, 128, 8
        $region52: #{tpu_custom_call.1} parent=47 // pred_fallthru
          _
      $region48: #{tpu_custom_call.1} parent=5 // pred_fallthru
        _
      %p3889 = scmp.le.s32.totalorder 2, %s16
      // Predicated region
      $region53: #{tpu_custom_call.1} parent=5 // pred_check
        %p3890 = pneg %p3889
      $region54: #{tpu_custom_call.1} parent=5 // pred_check_branch
        %3892 = sbr.rel (%p3890) target = $region56
      $region55: #{tpu_custom_call.1} parent=5 // pred_region
        %s3893 = ssub.s32 %s16, 2
        // Predicated region
        $region57: #{tpu_custom_call.1} parent=55 // pred_check
          %p3894 = pneg %p197
        $region58: #{tpu_custom_call.1} parent=55 // pred_check_branch
          %3896 = sbr.rel (%p3894) target = $region60
        $region59: #{tpu_custom_call.1} parent=55 // pred_region
          %s3897 = sand.u32 %s182, 1
          %s3898 = scalar_lea.sflag [#allocation3], %s3897
          %s3899 = sand.u32 %s182, 1
          %s3900 = smul.addr %s3899, 64
          %s3901 = scalar_lea.vmem [#allocation2], %s3900
          %3902 = dma.done %s3898, 1024
        $region60: #{tpu_custom_call.1} parent=55 // pred_fallthru
          _
      $region56: #{tpu_custom_call.1} parent=5 // pred_fallthru
        _
    $region6: #{tpu_custom_call.1} parent=1 // loop_footer
      %s20 = sadd.s32 1, %s16
    $region7: #{tpu_custom_call.1} parent=1 // loop_footer_branch
      %15 = sbr.rel target = $region3
    $region8: #{tpu_custom_call.1} parent=1 // loop_exit
      _
    %3903 = vsyncpa [#allocation3], 1
    %s3904 = scalar_lea.sflag [#allocation3], 1
    %3905 = vsyncpa %s3904, 1

</llo_original>
